<compile_context>
chip_gen: v6e
topology: v6e:2x2x1
jax: 0.10.0
libtpu: 0.0.40
codegen_flags: <defaults>
</compile_context>

<pallas_src>
import functools
import math

import jax
import jax.numpy as jnp
from jax.experimental import pallas as pl
from jax.experimental.pallas import tpu as pltpu


def _round_up(v, m):
    return -(-v // m) * m


def _nbytes(a):
    return a.size * jnp.dtype(a.dtype).itemsize


# ----------------------- generic hierarchical-LSTM kernel -------------------
def _lstm_level_kernel(*refs, hidden, steps, interleave, fuse_input):
    # fuse_input=True  (low / character LSTM):
    #   x_ref   (bn, T*Din) bf16  per-step raw inputs (embedded characters)
    #   win_ref (Din, 4H)   bf16  input-projection weights (pre-transposed)
    #   whh_ref (H, 4H)     bf16  recurrent weights (pre-transposed)
    #   b_ref   (1, 4H)     f32   b_ih + b_hh
    # fuse_input=False (high / word LSTM):
    #   x_ref   (bn, T*4H)  f32   precomputed gate pre-activations
    #   whh_ref (H, 4H)     bf16
    # shared folded epilogue:
    #   pw_ref  (T*H, P)    bf16  projection of [h_0 | ... | h_{T-1}]
    #   pb_ref  (1, P)      f32
    #   out_ref (bn, P)     f32
    if fuse_input:
        x_ref, win_ref, whh_ref, b_ref, pw_ref, pb_ref, out_ref = refs
    else:
        x_ref, whh_ref, pw_ref, pb_ref, out_ref = refs

    H = hidden
    G = 4 * H
    T = steps
    n = x_ref.shape[0]
    P = out_ref.shape[1]
    din = x_ref.shape[1] // T
    mm_dtype = whh_ref.dtype

    # Loop-invariant reads hoisted out of the unrolled hot loop.
    whh = whh_ref[...]
    if fuse_input:
        win = win_ref[...]
        b_in = b_ref[...]

    il = interleave
    rows = n // il

    # Lane mask selecting the cell-candidate ("g") gate columns, built once.
    # Activations: two full-slab EUP passes + one lane select instead of four
    # quarter-filled per-gate activations.
    col = jax.lax.broadcasted_iota(jnp.int32, (rows, G), 1)
    is_g = (col >= 2 * H) & (col < 3 * H)

    # `il` independent row chains: their per-step work is interleaved in the
    # same basic block, so one chain's MXU-pop/EUP latency hides behind the
    # other's compute (the recurrence is latency-bound at small H).
    hs = [jnp.zeros((rows, H), jnp.float32) for _ in range(il)]
    cs = [jnp.zeros((rows, H), jnp.float32) for _ in range(il)]
    accs = [jnp.zeros((rows, P), jnp.float32) for _ in range(il)]

    # Fully unrolled static time loop (T is small: max_word/sen_length).
    for t in range(T):
        pw_t = pw_ref[t * H:(t + 1) * H, :]          # (H, P), static offset
        for g in range(il):
            r0 = g * rows
            rec = jnp.dot(hs[g].astype(mm_dtype), whh,
                          preferred_element_type=jnp.float32)
            if fuse_input:
                x_t = x_ref[r0:r0 + rows, t * din:(t + 1) * din].astype(mm_dtype)
                gates = b_in + rec + jnp.dot(
                    x_t, win, preferred_element_type=jnp.float32)
            else:
                gates = x_ref[r0:r0 + rows, t * G:(t + 1) * G] + rec

            sig = jax.nn.sigmoid(gates)              # full-slab EUP pass
            th = jnp.tanh(gates)                     # full-slab EUP pass
            act = jnp.where(is_g, th, sig)
            i_g = act[:, 0 * H:1 * H]
            f_g = act[:, 1 * H:2 * H]
            g_g = act[:, 2 * H:3 * H]
            o_g = act[:, 3 * H:4 * H]
            cs[g] = f_g * cs[g] + i_g * g_g
            hs[g] = o_g * jnp.tanh(cs[g])

            # Epilogue folded into the loop: independent of the next step's
            # recurrence -> MXU filler; no concat-hidden scratch needed.
            accs[g] = accs[g] + jnp.dot(hs[g].astype(mm_dtype), pw_t,
                                        preferred_element_type=jnp.float32)

    pb = pb_ref[...]
    for g in range(il):
        out_ref[g * rows:(g + 1) * rows, :] = accs[g] + pb


# ------------------------------ wrapper --------------------------------------
def _single_buffer_spec(shape):
    """Grid-invariant operand: resident, single VMEM buffer (no double-buffer)."""
    nd = len(shape)
    index_map = lambda *_: (0,) * nd
    try:
        return pl.BlockSpec(shape, index_map, pipeline_mode=pl.Buffered(1))
    except Exception:  # pipeline_mode unavailable -> fall back to defaults
        return pl.BlockSpec(shape, index_map)


def _vmem_budget_bytes():
    """~85% of this generation's physical VMEM (64 MiB v7x, 128 MiB v5e/v6e)."""
    try:
        cap = int(pltpu.get_tpu_info().vmem_capacity_bytes)
    except Exception:
        cap = 128 << 20
    return int(cap * 0.85)


def lstm_scan_project(x, w_hh_t, proj_w, proj_b, *, w_in=None, b_in=None,
                      row_block=2048):
    """LSTM over T steps with the projection of concat(h_t) fused in.

    x:       (N, T*Din) bf16 raw per-step inputs (if w_in given), or
             (N, T*4H)  f32  precomputed gate pre-activations.
    w_hh_t:  (H, 4H)   bf16  recurrent weights, pre-transposed.
    proj_w:  (T*H, P)  bf16  projection weights, pre-transposed.
    proj_b:  (1, P)    f32
    w_in:    (Din, 4H) bf16  optional input projection (fused per step).
    b_in:    (1, 4H)   f32   b_ih + b_hh (required iff w_in is given).
    returns: (N, P)    f32   == concat(h_0..h_{T-1}) @ proj_w + proj_b
    """
    N = x.shape[0]
    H, G = w_hh_t.shape
    assert G == 4 * H
    fuse_input = w_in is not None
    if fuse_input:
        din = w_in.shape[0]
        assert w_in.shape == (din, G) and b_in is not None
    else:
        din = G
    assert x.shape[1] % din == 0
    T = x.shape[1] // din
    K, P = proj_w.shape
    assert K == T * H and proj_b.shape == (1, P)

    # ---- generation-aware VMEM / grid policy --------------------------------
    budget = _vmem_budget_bytes()
    inv_bytes = _nbytes(w_hh_t) + _nbytes(proj_w) + _nbytes(proj_b)
    if fuse_input:
        inv_bytes += _nbytes(w_in) + _nbytes(b_in)
    headroom = 4 << 20
    # Double-buffered row-tiled operands + live accumulator/gate temporaries.
    per_row = (2 * x.shape[1] * jnp.dtype(x.dtype).itemsize
               + 2 * P * 4 + P * 4 + 8 * G * 4)

    if N <= 8:
        bn = N                                   # single full block
    else:
        # >=2 programs so a "parallel" row axis spans both v7x TensorCores;
        # rows stay a multiple of 8 (sublane tile).  Cap by VMEM budget.
        bn = min(row_block, _round_up(-(-N // 2), 8))
        bn_fit = max(8, ((budget - inv_bytes - headroom) // per_row) // 8 * 8)
        bn = max(8, min(bn, bn_fit))
    grid = (pl.cdiv(N, bn),)

    interleave = 2 if (bn >= 16 and bn % 16 == 0) else 1

    vmem_limit = int(min(max(bn * per_row + inv_bytes + headroom, 32 << 20),
                         budget))

    kernel = functools.partial(_lstm_level_kernel, hidden=H, steps=T,
                               interleave=interleave, fuse_input=fuse_input)

    x_spec = pl.BlockSpec((bn, x.shape[1]), lambda i: (i, 0))
    if fuse_input:
        operands = (x, w_in, w_hh_t, b_in, proj_w, proj_b)
        in_specs = [x_spec,
                    _single_buffer_spec((din, G)),
                    _single_buffer_spec((H, G)),
                    _single_buffer_spec((1, G)),
                    _single_buffer_spec((K, P)),
                    _single_buffer_spec((1, P))]
    else:
        operands = (x, w_hh_t, proj_w, proj_b)
        in_specs = [x_spec,
                    _single_buffer_spec((H, G)),
                    _single_buffer_spec((K, P)),
                    _single_buffer_spec((1, P))]

    return pl.pallas_call(
        kernel,
        out_shape=jax.ShapeDtypeStruct((N, P), jnp.float32),
        grid=grid,
        in_specs=in_specs,
        out_specs=pl.BlockSpec((bn, P), lambda i: (i, 0)),
        compiler_params=pltpu.CompilerParams(
            dimension_semantics=("parallel",),    # rows independent -> megacore
            vmem_limit_bytes=vmem_limit),
    )(*operands)


# ---------------------------- Parameter init --------------------------------
def init_params(key, vocab_size, embedding_dim, low_hidden, high_hidden,
                num_classes, max_word_length, max_sen_length):
    ks = jax.random.split(key, 12)

    def unif(k, shape, bound):
        return jax.random.uniform(k, shape, jnp.float32, -bound, bound)

    lb = 1.0 / math.sqrt(low_hidden)
    hb = 1.0 / math.sqrt(high_hidden)
    high_in = low_hidden * max_word_length
    out_in = high_hidden * max_sen_length
    ob = 1.0 / math.sqrt(out_in)

    return {
        "emb": jax.random.normal(ks[0], (vocab_size, embedding_dim), jnp.float32),
        # low (character-level) LSTM
        "low_w_ih": unif(ks[1], (4 * low_hidden, embedding_dim), lb),
        "low_w_hh": unif(ks[2], (4 * low_hidden, low_hidden), lb),
        "low_b_ih": unif(ks[3], (4 * low_hidden,), lb),
        "low_b_hh": unif(ks[4], (4 * low_hidden,), lb),
        # high (word-level) LSTM
        "high_w_ih": unif(ks[5], (4 * high_hidden, high_in), hb),
        "high_w_hh": unif(ks[6], (4 * high_hidden, high_hidden), hb),
        "high_b_ih": unif(ks[7], (4 * high_hidden,), hb),
        "high_b_hh": unif(ks[8], (4 * high_hidden,), hb),
        # output linear
        "out_w": unif(ks[9], (num_classes, out_in), ob),
        "out_b": unif(ks[10], (num_classes,), ob),
    }


# ------------------------------ Forward pass --------------------------------
def hier_rnn_forward(params, x, *, row_block=2048):
    B, S, W = x.shape
    E = params["emb"].shape[1]
    Hh = params["high_w_hh"].shape[1]
    C = params["out_w"].shape[0]
    bf16 = jnp.bfloat16

    # Character embedding gather (XLA glue); transported to the kernel in bf16
    # (T*E wide) instead of a f32 XW slab (T*4H wide).
    emb = jnp.take(params["emb"], x.reshape(B * S * W), axis=0)       # (B*S*W, E)
    emb = emb.astype(bf16).reshape(B * S, W * E)                      # contiguous

    # Low (character) LSTM: input projection fused into the per-step loop,
    # folded epilogue emits the high-LSTM gate pre-activations directly
    # (word_repr never touches HBM).
    xw_high = lstm_scan_project(
        emb,
        params["low_w_hh"].T.astype(bf16),                            # (Hl, 4Hl)
        params["high_w_ih"].T.astype(bf16),                           # (W*Hl, 4Hh)
        (params["high_b_ih"] + params["high_b_hh"])[None, :],
        w_in=params["low_w_ih"].T.astype(bf16),                       # (E, 4Hl)
        b_in=(params["low_b_ih"] + params["low_b_hh"])[None, :],
        row_block=row_block,
    )                                                                 # (B*S, 4Hh)
    xw_high = xw_high.reshape(B, S * 4 * Hh)                          # contiguous

    # Classifier, lane-padded to a multiple of 128 so the fused epilogue
    # issues full (unmasked) stores; padded columns are zero.
    Cp = ((C + 127) // 128) * 128
    out_w = jnp.zeros((S * Hh, Cp), bf16).at[:, :C].set(
        params["out_w"].T.astype(bf16))
    out_b = jnp.zeros((1, Cp), jnp.float32).at[:, :C].set(
        params["out_b"][None, :])

    # High (word) LSTM over precomputed pre-activations; folded epilogue is
    # the output classifier.
    logits = lstm_scan_project(
        xw_high,
        params["high_w_hh"].T.astype(bf16),                           # (Hh, 4Hh)
        out_w, out_b,
        row_block=row_block,
    )                                                                 # (B, Cp)
    return logits[:, :C]


# ----------------------- pure-JAX reference (f32) ---------------------------
def _lstm_ref(x_seq, w_ih, w_hh, b_ih, b_hh):
    H = w_hh.shape[1]
    N = x_seq.shape[0]

    def step(carry, x_t):
        h, c = carry
        gates = x_t @ w_ih.T + h @ w_hh.T + b_ih + b_hh
        i = jax.nn.sigmoid(gates[:, 0 * H:1 * H])
        f = jax.nn.sigmoid(gates[:, 1 * H:2 * H])
        g = jnp.tanh(gates[:, 2 * H:3 * H])
        o = jax.nn.sigmoid(gates[:, 3 * H:4 * H])
        c = f * c + i * g
        h = o * jnp.tanh(c)
        return (h, c), h

    init = (jnp.zeros((N, H), jnp.float32), jnp.zeros((N, H), jnp.float32))
    _, hs = jax.lax.scan(step, init, jnp.swapaxes(x_seq, 0, 1))
    return jnp.swapaxes(hs, 0, 1)                                     # (N, T, H)


def hier_rnn_reference(params, x):
    B, S, W = x.shape
    Hl = params["low_w_hh"].shape[1]
    emb = params["emb"][x]                                            # (B,S,W,E)
    low_h = _lstm_ref(emb.reshape(B * S, W, -1), params["low_w_ih"],
                      params["low_w_hh"], params["low_b_ih"], params["low_b_hh"])
    word_repr = low_h.reshape(B, S, W * Hl)
    high_h = _lstm_ref(word_repr, params["high_w_ih"], params["high_w_hh"],
                       params["high_b_ih"], params["high_b_hh"])
    sent = high_h.reshape(B, -1)
    return sent @ params["out_w"].T + params["out_b"]


# TODO(synk): use_highway=False path only; the optional Highway block is not
# instantiated in the reference config and is not implemented here.
# nn.LSTM dropout is a no-op for single-layer LSTMs, so it is omitted.

if __name__ == "__main__":
    vocab_size = 50
    embedding_dim = 8
    low_hidden_size = 16
    high_hidden_size = 32
    num_classes = 6
    max_word_length = 8
    max_sen_length = 6
    batch = 2

    key = jax.random.PRNGKey(0)
    pkey, xkey = jax.random.split(key)
    params = init_params(pkey, vocab_size, embedding_dim, low_hidden_size,
                         high_hidden_size, num_classes, max_word_length,
                         max_sen_length)
    x = jax.random.randint(
        xkey, (batch, max_sen_length, max_word_length), 0, vocab_size, jnp.int32)

    fwd = jax.jit(functools.partial(hier_rnn_forward, params))
    out = jax.block_until_ready(fwd(x))
    assert out.shape == (batch, num_classes)
    assert out.dtype == jnp.float32

    ref = jax.block_until_ready(
        jax.jit(functools.partial(hier_rnn_reference, params))(x))
    assert jnp.allclose(out, ref, rtol=5e-2, atol=5e-2), (
        "max abs err %s" % jnp.max(jnp.abs(out - ref)))
    print("KERNEL_OK")
</pallas_src>

<mosaic_0001>
module attributes {stable_mosaic.version = 11 : i64} {
  func.func @_lstm_level_kernel(%arg0: i32, %arg1: memref<2x768xf32, #tpu.memory_space<vmem>>, %arg2: memref<32x128xbf16, #tpu.memory_space<vmem>>, %arg3: memref<192x128xbf16, #tpu.memory_space<vmem>>, %arg4: memref<1x128xf32, #tpu.memory_space<vmem>>, %arg5: memref<2x128xf32, #tpu.memory_space<vmem>>) attributes {dimension_semantics = [#tpu.dimension_semantics<parallel>], iteration_bounds = array<i64: 1>, scalar_prefetch = 0 : i64, scratch_operands = 0 : i64, tpu.core_type = #tpu.core_type<tc>, window_params = [{transform_indices = @transform_0, window_bounds = array<i64: 2, 768>}, {pipeline_mode = #tpu.pipeline_mode<synchronous>, transform_indices = @transform_1, window_bounds = array<i64: 32, 128>}, {pipeline_mode = #tpu.pipeline_mode<synchronous>, transform_indices = @transform_2, window_bounds = array<i64: 192, 128>}, {pipeline_mode = #tpu.pipeline_mode<synchronous>, transform_indices = @transform_3, window_bounds = array<i64: 1, 128>}, {transform_indices = @transform_4, window_bounds = array<i64: 2, 128>}]} {
    %c0 = arith.constant 0 : index
    %c0_0 = arith.constant 0 : index
    %0 = vector.load %arg2[%c0, %c0_0] : memref<32x128xbf16, #tpu.memory_space<vmem>>, vector<32x128xbf16>
    %1 = tpu.iota {dimensions = array<i32: 1>} : vector<2x128xi32>
    %c64_i32 = arith.constant 64 : i32
    %2 = vector.broadcast %c64_i32 : i32 to vector<2x128xi32>
    %3 = arith.cmpi sge, %1, %2 : vector<2x128xi32>
    %c96_i32 = arith.constant 96 : i32
    %4 = vector.broadcast %c96_i32 : i32 to vector<2x128xi32>
    %5 = arith.cmpi slt, %1, %4 : vector<2x128xi32>
    %6 = arith.andi %3, %5 : vector<2x128xi1>
    %cst = arith.constant 0.000000e+00 : f32
    %7 = vector.broadcast %cst : f32 to vector<2x32xf32>
    %cst_1 = arith.constant 0.000000e+00 : f32
    %8 = vector.broadcast %cst_1 : f32 to vector<2x32xf32>
    %cst_2 = arith.constant 0.000000e+00 : f32
    %9 = vector.broadcast %cst_2 : f32 to vector<2x128xf32>
    %c0_3 = arith.constant 0 : index
    %c0_4 = arith.constant 0 : index
    %10 = vector.load %arg3[%c0_3, %c0_4] : memref<192x128xbf16, #tpu.memory_space<vmem>>, vector<32x128xbf16>
    %11 = arith.truncf %7 : vector<2x32xf32> to vector<2x32xbf16>
    %cst_5 = arith.constant dense<0.000000e+00> : vector<2x128xf32>
    %12 = tpu.matmul %11, %0, %cst_5 {dimension_numbers = #tpu.dot_dimension_numbers<[1], [0], [0], [1], [0, 0, 1, 1], [], []>} : vector<2x32xbf16>, vector<32x128xbf16>, vector<2x128xf32> -> vector<2x128xf32>
    %c0_6 = arith.constant 0 : index
    %c0_7 = arith.constant 0 : index
    %13 = vector.load %arg1[%c0_6, %c0_7] : memref<2x768xf32, #tpu.memory_space<vmem>>, vector<2x128xf32>
    %14 = arith.addf %13, %12 : vector<2x128xf32>
    %15 = arith.negf %14 : vector<2x128xf32>
    %16 = math.exp %15 : vector<2x128xf32>
    %cst_8 = arith.constant 1.000000e+00 : f32
    %17 = vector.broadcast %cst_8 : f32 to vector<2x128xf32>
    %18 = arith.addf %17, %16 : vector<2x128xf32>
    %19 = arith.divf %17, %18 : vector<2x128xf32>
    %20 = math.tanh %14 : vector<2x128xf32>
    %21 = arith.select %6, %20, %19 : vector<2x128xi1>, vector<2x128xf32>
    %22 = vector.extract_strided_slice %21 {offsets = [0, 0], sizes = [2, 32], strides = [1, 1]} : vector<2x128xf32> to vector<2x32xf32>
    %23 = vector.extract_strided_slice %21 {offsets = [0, 32], sizes = [2, 32], strides = [1, 1]} : vector<2x128xf32> to vector<2x32xf32>
    %24 = vector.extract_strided_slice %21 {offsets = [0, 64], sizes = [2, 32], strides = [1, 1]} : vector<2x128xf32> to vector<2x32xf32>
    %25 = vector.extract_strided_slice %21 {offsets = [0, 96], sizes = [2, 32], strides = [1, 1]} : vector<2x128xf32> to vector<2x32xf32>
    %26 = arith.mulf %23, %8 : vector<2x32xf32>
    %27 = arith.mulf %22, %24 : vector<2x32xf32>
    %28 = arith.addf %26, %27 : vector<2x32xf32>
    %29 = math.tanh %28 : vector<2x32xf32>
    %30 = arith.mulf %25, %29 : vector<2x32xf32>
    %31 = arith.truncf %30 : vector<2x32xf32> to vector<2x32xbf16>
    %cst_9 = arith.constant dense<0.000000e+00> : vector<2x128xf32>
    %32 = tpu.matmul %31, %10, %cst_9 {dimension_numbers = #tpu.dot_dimension_numbers<[1], [0], [0], [1], [0, 0, 1, 1], [], []>} : vector<2x32xbf16>, vector<32x128xbf16>, vector<2x128xf32> -> vector<2x128xf32>
    %33 = arith.addf %9, %32 : vector<2x128xf32>
    %c32 = arith.constant 32 : index
    %c0_10 = arith.constant 0 : index
    %34 = vector.load %arg3[%c32, %c0_10] : memref<192x128xbf16, #tpu.memory_space<vmem>>, vector<32x128xbf16>
    %35 = arith.truncf %30 : vector<2x32xf32> to vector<2x32xbf16>
    %cst_11 = arith.constant dense<0.000000e+00> : vector<2x128xf32>
    %36 = tpu.matmul %35, %0, %cst_11 {dimension_numbers = #tpu.dot_dimension_numbers<[1], [0], [0], [1], [0, 0, 1, 1], [], []>} : vector<2x32xbf16>, vector<32x128xbf16>, vector<2x128xf32> -> vector<2x128xf32>
    %c0_12 = arith.constant 0 : index
    %c128 = arith.constant 128 : index
    %37 = vector.load %arg1[%c0_12, %c128] : memref<2x768xf32, #tpu.memory_space<vmem>>, vector<2x128xf32>
    %38 = arith.addf %37, %36 : vector<2x128xf32>
    %39 = arith.negf %38 : vector<2x128xf32>
    %40 = math.exp %39 : vector<2x128xf32>
    %cst_13 = arith.constant 1.000000e+00 : f32
    %41 = vector.broadcast %cst_13 : f32 to vector<2x128xf32>
    %42 = arith.addf %41, %40 : vector<2x128xf32>
    %43 = arith.divf %41, %42 : vector<2x128xf32>
    %44 = math.tanh %38 : vector<2x128xf32>
    %45 = arith.select %6, %44, %43 : vector<2x128xi1>, vector<2x128xf32>
    %46 = vector.extract_strided_slice %45 {offsets = [0, 0], sizes = [2, 32], strides = [1, 1]} : vector<2x128xf32> to vector<2x32xf32>
    %47 = vector.extract_strided_slice %45 {offsets = [0, 32], sizes = [2, 32], strides = [1, 1]} : vector<2x128xf32> to vector<2x32xf32>
    %48 = vector.extract_strided_slice %45 {offsets = [0, 64], sizes = [2, 32], strides = [1, 1]} : vector<2x128xf32> to vector<2x32xf32>
    %49 = vector.extract_strided_slice %45 {offsets = [0, 96], sizes = [2, 32], strides = [1, 1]} : vector<2x128xf32> to vector<2x32xf32>
    %50 = arith.mulf %47, %28 : vector<2x32xf32>
    %51 = arith.mulf %46, %48 : vector<2x32xf32>
    %52 = arith.addf %50, %51 : vector<2x32xf32>
    %53 = math.tanh %52 : vector<2x32xf32>
    %54 = arith.mulf %49, %53 : vector<2x32xf32>
    %55 = arith.truncf %54 : vector<2x32xf32> to vector<2x32xbf16>
    %cst_14 = arith.constant dense<0.000000e+00> : vector<2x128xf32>
    %56 = tpu.matmul %55, %34, %cst_14 {dimension_numbers = #tpu.dot_dimension_numbers<[1], [0], [0], [1], [0, 0, 1, 1], [], []>} : vector<2x32xbf16>, vector<32x128xbf16>, vector<2x128xf32> -> vector<2x128xf32>
    %57 = arith.addf %33, %56 : vector<2x128xf32>
    %c64 = arith.constant 64 : index
    %c0_15 = arith.constant 0 : index
    %58 = vector.load %arg3[%c64, %c0_15] : memref<192x128xbf16, #tpu.memory_space<vmem>>, vector<32x128xbf16>
    %59 = arith.truncf %54 : vector<2x32xf32> to vector<2x32xbf16>
    %cst_16 = arith.constant dense<0.000000e+00> : vector<2x128xf32>
    %60 = tpu.matmul %59, %0, %cst_16 {dimension_numbers = #tpu.dot_dimension_numbers<[1], [0], [0], [1], [0, 0, 1, 1], [], []>} : vector<2x32xbf16>, vector<32x128xbf16>, vector<2x128xf32> -> vector<2x128xf32>
    %c0_17 = arith.constant 0 : index
    %c256 = arith.constant 256 : index
    %61 = vector.load %arg1[%c0_17, %c256] : memref<2x768xf32, #tpu.memory_space<vmem>>, vector<2x128xf32>
    %62 = arith.addf %61, %60 : vector<2x128xf32>
    %63 = arith.negf %62 : vector<2x128xf32>
    %64 = math.exp %63 : vector<2x128xf32>
    %cst_18 = arith.constant 1.000000e+00 : f32
    %65 = vector.broadcast %cst_18 : f32 to vector<2x128xf32>
    %66 = arith.addf %65, %64 : vector<2x128xf32>
    %67 = arith.divf %65, %66 : vector<2x128xf32>
    %68 = math.tanh %62 : vector<2x128xf32>
    %69 = arith.select %6, %68, %67 : vector<2x128xi1>, vector<2x128xf32>
    %70 = vector.extract_strided_slice %69 {offsets = [0, 0], sizes = [2, 32], strides = [1, 1]} : vector<2x128xf32> to vector<2x32xf32>
    %71 = vector.extract_strided_slice %69 {offsets = [0, 32], sizes = [2, 32], strides = [1, 1]} : vector<2x128xf32> to vector<2x32xf32>
    %72 = vector.extract_strided_slice %69 {offsets = [0, 64], sizes = [2, 32], strides = [1, 1]} : vector<2x128xf32> to vector<2x32xf32>
    %73 = vector.extract_strided_slice %69 {offsets = [0, 96], sizes = [2, 32], strides = [1, 1]} : vector<2x128xf32> to vector<2x32xf32>
    %74 = arith.mulf %71, %52 : vector<2x32xf32>
    %75 = arith.mulf %70, %72 : vector<2x32xf32>
    %76 = arith.addf %74, %75 : vector<2x32xf32>
    %77 = math.tanh %76 : vector<2x32xf32>
    %78 = arith.mulf %73, %77 : vector<2x32xf32>
    %79 = arith.truncf %78 : vector<2x32xf32> to vector<2x32xbf16>
    %cst_19 = arith.constant dense<0.000000e+00> : vector<2x128xf32>
    %80 = tpu.matmul %79, %58, %cst_19 {dimension_numbers = #tpu.dot_dimension_numbers<[1], [0], [0], [1], [0, 0, 1, 1], [], []>} : vector<2x32xbf16>, vector<32x128xbf16>, vector<2x128xf32> -> vector<2x128xf32>
    %81 = arith.addf %57, %80 : vector<2x128xf32>
    %c96 = arith.constant 96 : index
    %c0_20 = arith.constant 0 : index
    %82 = vector.load %arg3[%c96, %c0_20] : memref<192x128xbf16, #tpu.memory_space<vmem>>, vector<32x128xbf16>
    %83 = arith.truncf %78 : vector<2x32xf32> to vector<2x32xbf16>
    %cst_21 = arith.constant dense<0.000000e+00> : vector<2x128xf32>
    %84 = tpu.matmul %83, %0, %cst_21 {dimension_numbers = #tpu.dot_dimension_numbers<[1], [0], [0], [1], [0, 0, 1, 1], [], []>} : vector<2x32xbf16>, vector<32x128xbf16>, vector<2x128xf32> -> vector<2x128xf32>
    %c0_22 = arith.constant 0 : index
    %c384 = arith.constant 384 : index
    %85 = vector.load %arg1[%c0_22, %c384] : memref<2x768xf32, #tpu.memory_space<vmem>>, vector<2x128xf32>
    %86 = arith.addf %85, %84 : vector<2x128xf32>
    %87 = arith.negf %86 : vector<2x128xf32>
    %88 = math.exp %87 : vector<2x128xf32>
    %cst_23 = arith.constant 1.000000e+00 : f32
    %89 = vector.broadcast %cst_23 : f32 to vector<2x128xf32>
    %90 = arith.addf %89, %88 : vector<2x128xf32>
    %91 = arith.divf %89, %90 : vector<2x128xf32>
    %92 = math.tanh %86 : vector<2x128xf32>
    %93 = arith.select %6, %92, %91 : vector<2x128xi1>, vector<2x128xf32>
    %94 = vector.extract_strided_slice %93 {offsets = [0, 0], sizes = [2, 32], strides = [1, 1]} : vector<2x128xf32> to vector<2x32xf32>
    %95 = vector.extract_strided_slice %93 {offsets = [0, 32], sizes = [2, 32], strides = [1, 1]} : vector<2x128xf32> to vector<2x32xf32>
    %96 = vector.extract_strided_slice %93 {offsets = [0, 64], sizes = [2, 32], strides = [1, 1]} : vector<2x128xf32> to vector<2x32xf32>
    %97 = vector.extract_strided_slice %93 {offsets = [0, 96], sizes = [2, 32], strides = [1, 1]} : vector<2x128xf32> to vector<2x32xf32>
    %98 = arith.mulf %95, %76 : vector<2x32xf32>
    %99 = arith.mulf %94, %96 : vector<2x32xf32>
    %100 = arith.addf %98, %99 : vector<2x32xf32>
    %101 = math.tanh %100 : vector<2x32xf32>
    %102 = arith.mulf %97, %101 : vector<2x32xf32>
    %103 = arith.truncf %102 : vector<2x32xf32> to vector<2x32xbf16>
    %cst_24 = arith.constant dense<0.000000e+00> : vector<2x128xf32>
    %104 = tpu.matmul %103, %82, %cst_24 {dimension_numbers = #tpu.dot_dimension_numbers<[1], [0], [0], [1], [0, 0, 1, 1], [], []>} : vector<2x32xbf16>, vector<32x128xbf16>, vector<2x128xf32> -> vector<2x128xf32>
    %105 = arith.addf %81, %104 : vector<2x128xf32>
    %c128_25 = arith.constant 128 : index
    %c0_26 = arith.constant 0 : index
    %106 = vector.load %arg3[%c128_25, %c0_26] : memref<192x128xbf16, #tpu.memory_space<vmem>>, vector<32x128xbf16>
    %107 = arith.truncf %102 : vector<2x32xf32> to vector<2x32xbf16>
    %cst_27 = arith.constant dense<0.000000e+00> : vector<2x128xf32>
    %108 = tpu.matmul %107, %0, %cst_27 {dimension_numbers = #tpu.dot_dimension_numbers<[1], [0], [0], [1], [0, 0, 1, 1], [], []>} : vector<2x32xbf16>, vector<32x128xbf16>, vector<2x128xf32> -> vector<2x128xf32>
    %c0_28 = arith.constant 0 : index
    %c512 = arith.constant 512 : index
    %109 = vector.load %arg1[%c0_28, %c512] : memref<2x768xf32, #tpu.memory_space<vmem>>, vector<2x128xf32>
    %110 = arith.addf %109, %108 : vector<2x128xf32>
    %111 = arith.negf %110 : vector<2x128xf32>
    %112 = math.exp %111 : vector<2x128xf32>
    %cst_29 = arith.constant 1.000000e+00 : f32
    %113 = vector.broadcast %cst_29 : f32 to vector<2x128xf32>
    %114 = arith.addf %113, %112 : vector<2x128xf32>
    %115 = arith.divf %113, %114 : vector<2x128xf32>
    %116 = math.tanh %110 : vector<2x128xf32>
    %117 = arith.select %6, %116, %115 : vector<2x128xi1>, vector<2x128xf32>
    %118 = vector.extract_strided_slice %117 {offsets = [0, 0], sizes = [2, 32], strides = [1, 1]} : vector<2x128xf32> to vector<2x32xf32>
    %119 = vector.extract_strided_slice %117 {offsets = [0, 32], sizes = [2, 32], strides = [1, 1]} : vector<2x128xf32> to vector<2x32xf32>
    %120 = vector.extract_strided_slice %117 {offsets = [0, 64], sizes = [2, 32], strides = [1, 1]} : vector<2x128xf32> to vector<2x32xf32>
    %121 = vector.extract_strided_slice %117 {offsets = [0, 96], sizes = [2, 32], strides = [1, 1]} : vector<2x128xf32> to vector<2x32xf32>
    %122 = arith.mulf %119, %100 : vector<2x32xf32>
    %123 = arith.mulf %118, %120 : vector<2x32xf32>
    %124 = arith.addf %122, %123 : vector<2x32xf32>
    %125 = math.tanh %124 : vector<2x32xf32>
    %126 = arith.mulf %121, %125 : vector<2x32xf32>
    %127 = arith.truncf %126 : vector<2x32xf32> to vector<2x32xbf16>
    %cst_30 = arith.constant dense<0.000000e+00> : vector<2x128xf32>
    %128 = tpu.matmul %127, %106, %cst_30 {dimension_numbers = #tpu.dot_dimension_numbers<[1], [0], [0], [1], [0, 0, 1, 1], [], []>} : vector<2x32xbf16>, vector<32x128xbf16>, vector<2x128xf32> -> vector<2x128xf32>
    %129 = arith.addf %105, %128 : vector<2x128xf32>
    %c160 = arith.constant 160 : index
    %c0_31 = arith.constant 0 : index
    %130 = vector.load %arg3[%c160, %c0_31] : memref<192x128xbf16, #tpu.memory_space<vmem>>, vector<32x128xbf16>
    %131 = arith.truncf %126 : vector<2x32xf32> to vector<2x32xbf16>
    %cst_32 = arith.constant dense<0.000000e+00> : vector<2x128xf32>
    %132 = tpu.matmul %131, %0, %cst_32 {dimension_numbers = #tpu.dot_dimension_numbers<[1], [0], [0], [1], [0, 0, 1, 1], [], []>} : vector<2x32xbf16>, vector<32x128xbf16>, vector<2x128xf32> -> vector<2x128xf32>
    %c0_33 = arith.constant 0 : index
    %c640 = arith.constant 640 : index
    %133 = vector.load %arg1[%c0_33, %c640] : memref<2x768xf32, #tpu.memory_space<vmem>>, vector<2x128xf32>
    %134 = arith.addf %133, %132 : vector<2x128xf32>
    %135 = arith.negf %134 : vector<2x128xf32>
    %136 = math.exp %135 : vector<2x128xf32>
    %cst_34 = arith.constant 1.000000e+00 : f32
    %137 = vector.broadcast %cst_34 : f32 to vector<2x128xf32>
    %138 = arith.addf %137, %136 : vector<2x128xf32>
    %139 = arith.divf %137, %138 : vector<2x128xf32>
    %140 = math.tanh %134 : vector<2x128xf32>
    %141 = arith.select %6, %140, %139 : vector<2x128xi1>, vector<2x128xf32>
    %142 = vector.extract_strided_slice %141 {offsets = [0, 0], sizes = [2, 32], strides = [1, 1]} : vector<2x128xf32> to vector<2x32xf32>
    %143 = vector.extract_strided_slice %141 {offsets = [0, 32], sizes = [2, 32], strides = [1, 1]} : vector<2x128xf32> to vector<2x32xf32>
    %144 = vector.extract_strided_slice %141 {offsets = [0, 64], sizes = [2, 32], strides = [1, 1]} : vector<2x128xf32> to vector<2x32xf32>
    %145 = vector.extract_strided_slice %141 {offsets = [0, 96], sizes = [2, 32], strides = [1, 1]} : vector<2x128xf32> to vector<2x32xf32>
    %146 = arith.mulf %143, %124 : vector<2x32xf32>
    %147 = arith.mulf %142, %144 : vector<2x32xf32>
    %148 = arith.addf %146, %147 : vector<2x32xf32>
    %149 = math.tanh %148 : vector<2x32xf32>
    %150 = arith.mulf %145, %149 : vector<2x32xf32>
    %151 = arith.truncf %150 : vector<2x32xf32> to vector<2x32xbf16>
    %cst_35 = arith.constant dense<0.000000e+00> : vector<2x128xf32>
    %152 = tpu.matmul %151, %130, %cst_35 {dimension_numbers = #tpu.dot_dimension_numbers<[1], [0], [0], [1], [0, 0, 1, 1], [], []>} : vector<2x32xbf16>, vector<32x128xbf16>, vector<2x128xf32> -> vector<2x128xf32>
    %153 = arith.addf %129, %152 : vector<2x128xf32>
    %c0_36 = arith.constant 0 : index
    %c0_37 = arith.constant 0 : index
    %154 = vector.load %arg4[%c0_36, %c0_37] : memref<1x128xf32, #tpu.memory_space<vmem>>, vector<1x128xf32>
    %155 = vector.broadcast %154 : vector<1x128xf32> to vector<2x128xf32>
    %156 = arith.addf %153, %155 : vector<2x128xf32>
    %c0_38 = arith.constant 0 : index
    %c0_39 = arith.constant 0 : index
    %157 = vector.load %arg5[%c0_38, %c0_39] : memref<2x128xf32, #tpu.memory_space<vmem>>, vector<2x128xf32>
    tpu.vector_store %arg5[%c0_38, %c0_39], %156 {strides = array<i32>} : memref<2x128xf32, #tpu.memory_space<vmem>>, vector<2x128xf32>,
    return
  }
  func.func @transform_0(%arg0: i32) -> (i32, i32) {
    %c0_i32 = arith.constant 0 : i32
    %c0_i32_0 = arith.constant 0 : i32
    return %arg0, %c0_i32 : i32, i32
  }
  func.func @transform_1(%arg0: i32) -> (i32, i32) {
    %c0_i32 = arith.constant 0 : i32
    %c0_i32_0 = arith.constant 0 : i32
    %c0_i32_1 = arith.constant 0 : i32
    return %c0_i32, %c0_i32_0 : i32, i32
  }
  func.func @transform_2(%arg0: i32) -> (i32, i32) {
    %c0_i32 = arith.constant 0 : i32
    %c0_i32_0 = arith.constant 0 : i32
    %c0_i32_1 = arith.constant 0 : i32
    return %c0_i32, %c0_i32_0 : i32, i32
  }
  func.func @transform_3(%arg0: i32) -> (i32, i32) {
    %c0_i32 = arith.constant 0 : i32
    %c0_i32_0 = arith.constant 0 : i32
    %c0_i32_1 = arith.constant 0 : i32
    return %c0_i32, %c0_i32_0 : i32, i32
  }
  func.func @transform_4(%arg0: i32) -> (i32, i32) {
    %c0_i32 = arith.constant 0 : i32
    %c0_i32_0 = arith.constant 0 : i32
    return %arg0, %c0_i32 : i32, i32
  }
}

module attributes {stable_mosaic.version = 11 : i64} {
  func.func @_lstm_level_kernel(%arg0: i32, %arg1: memref<8x64xbf16, #tpu.memory_space<vmem>>, %arg2: memref<8x64xbf16, #tpu.memory_space<vmem>>, %arg3: memref<16x64xbf16, #tpu.memory_space<vmem>>, %arg4: memref<1x64xf32, #tpu.memory_space<vmem>>, %arg5: memref<128x128xbf16, #tpu.memory_space<vmem>>, %arg6: memref<1x128xf32, #tpu.memory_space<vmem>>, %arg7: memref<8x128xf32, #tpu.memory_space<vmem>>) attributes {dimension_semantics = [#tpu.dimension_semantics<parallel>], iteration_bounds = array<i64: 2>, scalar_prefetch = 0 : i64, scratch_operands = 0 : i64, tpu.core_type = #tpu.core_type<tc>, window_params = [{transform_indices = @transform_0, window_bounds = array<i64: 8, 64>}, {pipeline_mode = #tpu.pipeline_mode<synchronous>, transform_indices = @transform_1, window_bounds = array<i64: 8, 64>}, {pipeline_mode = #tpu.pipeline_mode<synchronous>, transform_indices = @transform_2, window_bounds = array<i64: 16, 64>}, {pipeline_mode = #tpu.pipeline_mode<synchronous>, transform_indices = @transform_3, window_bounds = array<i64: 1, 64>}, {pipeline_mode = #tpu.pipeline_mode<synchronous>, transform_indices = @transform_4, window_bounds = array<i64: 128, 128>}, {pipeline_mode = #tpu.pipeline_mode<synchronous>, transform_indices = @transform_5, window_bounds = array<i64: 1, 128>}, {transform_indices = @transform_6, window_bounds = array<i64: 8, 128>}]} {
    %c0 = arith.constant 0 : index
    %c0_0 = arith.constant 0 : index
    %0 = vector.load %arg3[%c0, %c0_0] : memref<16x64xbf16, #tpu.memory_space<vmem>>, vector<16x64xbf16>
    %c0_1 = arith.constant 0 : index
    %c0_2 = arith.constant 0 : index
    %1 = vector.load %arg2[%c0_1, %c0_2] : memref<8x64xbf16, #tpu.memory_space<vmem>>, vector<8x64xbf16>
    %c0_3 = arith.constant 0 : index
    %c0_4 = arith.constant 0 : index
    %2 = vector.load %arg4[%c0_3, %c0_4] : memref<1x64xf32, #tpu.memory_space<vmem>>, vector<1x64xf32>
    %3 = tpu.iota {dimensions = array<i32: 1>} : vector<8x64xi32>
    %c32_i32 = arith.constant 32 : i32
    %4 = vector.broadcast %c32_i32 : i32 to vector<8x64xi32>
    %5 = arith.cmpi sge, %3, %4 : vector<8x64xi32>
    %c48_i32 = arith.constant 48 : i32
    %6 = vector.broadcast %c48_i32 : i32 to vector<8x64xi32>
    %7 = arith.cmpi slt, %3, %6 : vector<8x64xi32>
    %8 = arith.andi %5, %7 : vector<8x64xi1>
    %cst = arith.constant 0.000000e+00 : f32
    %9 = vector.broadcast %cst : f32 to vector<8x16xf32>
    %cst_5 = arith.constant 0.000000e+00 : f32
    %10 = vector.broadcast %cst_5 : f32 to vector<8x16xf32>
    %cst_6 = arith.constant 0.000000e+00 : f32
    %11 = vector.broadcast %cst_6 : f32 to vector<8x128xf32>
    %c0_7 = arith.constant 0 : index
    %c0_8 = arith.constant 0 : index
    %12 = vector.load %arg5[%c0_7, %c0_8] : memref<128x128xbf16, #tpu.memory_space<vmem>>, vector<16x128xbf16>
    %13 = arith.truncf %9 : vector<8x16xf32> to vector<8x16xbf16>
    %cst_9 = arith.constant dense<0.000000e+00> : vector<8x64xf32>
    %14 = tpu.matmul %13, %0, %cst_9 {dimension_numbers = #tpu.dot_dimension_numbers<[1], [0], [0], [1], [0, 0, 1, 1], [], []>} : vector<8x16xbf16>, vector<16x64xbf16>, vector<8x64xf32> -> vector<8x64xf32>
    %c0_10 = arith.constant 0 : index
    %c0_11 = arith.constant 0 : index
    %15 = vector.load %arg1[%c0_10, %c0_11] : memref<8x64xbf16, #tpu.memory_space<vmem>>, vector<8x8xbf16>
    %16 = vector.broadcast %2 : vector<1x64xf32> to vector<8x64xf32>
    %17 = arith.addf %16, %14 : vector<8x64xf32>
    %cst_12 = arith.constant dense<0.000000e+00> : vector<8x64xf32>
    %18 = tpu.matmul %15, %1, %cst_12 {dimension_numbers = #tpu.dot_dimension_numbers<[1], [0], [0], [1], [0, 0, 1, 1], [], []>} : vector<8x8xbf16>, vector<8x64xbf16>, vector<8x64xf32> -> vector<8x64xf32>
    %19 = arith.addf %17, %18 : vector<8x64xf32>
    %20 = arith.negf %19 : vector<8x64xf32>
    %21 = math.exp %20 : vector<8x64xf32>
    %cst_13 = arith.constant 1.000000e+00 : f32
    %22 = vector.broadcast %cst_13 : f32 to vector<8x64xf32>
    %23 = arith.addf %22, %21 : vector<8x64xf32>
    %24 = arith.divf %22, %23 : vector<8x64xf32>
    %25 = math.tanh %19 : vector<8x64xf32>
    %26 = arith.select %8, %25, %24 : vector<8x64xi1>, vector<8x64xf32>
    %27 = vector.extract_strided_slice %26 {offsets = [0, 0], sizes = [8, 16], strides = [1, 1]} : vector<8x64xf32> to vector<8x16xf32>
    %28 = vector.extract_strided_slice %26 {offsets = [0, 16], sizes = [8, 16], strides = [1, 1]} : vector<8x64xf32> to vector<8x16xf32>
    %29 = vector.extract_strided_slice %26 {offsets = [0, 32], sizes = [8, 16], strides = [1, 1]} : vector<8x64xf32> to vector<8x16xf32>
    %30 = vector.extract_strided_slice %26 {offsets = [0, 48], sizes = [8, 16], strides = [1, 1]} : vector<8x64xf32> to vector<8x16xf32>
    %31 = arith.mulf %28, %10 : vector<8x16xf32>
    %32 = arith.mulf %27, %29 : vector<8x16xf32>
    %33 = arith.addf %31, %32 : vector<8x16xf32>
    %34 = math.tanh %33 : vector<8x16xf32>
    %35 = arith.mulf %30, %34 : vector<8x16xf32>
    %36 = arith.truncf %35 : vector<8x16xf32> to vector<8x16xbf16>
    %cst_14 = arith.constant dense<0.000000e+00> : vector<8x128xf32>
    %37 = tpu.matmul %36, %12, %cst_14 {dimension_numbers = #tpu.dot_dimension_numbers<[1], [0], [0], [1], [0, 0, 1, 1], [], []>} : vector<8x16xbf16>, vector<16x128xbf16>, vector<8x128xf32> -> vector<8x128xf32>
    %38 = arith.addf %11, %37 : vector<8x128xf32>
    %c16 = arith.constant 16 : index
    %c0_15 = arith.constant 0 : index
    %39 = vector.load %arg5[%c16, %c0_15] : memref<128x128xbf16, #tpu.memory_space<vmem>>, vector<16x128xbf16>
    %40 = arith.truncf %35 : vector<8x16xf32> to vector<8x16xbf16>
    %cst_16 = arith.constant dense<0.000000e+00> : vector<8x64xf32>
    %41 = tpu.matmul %40, %0, %cst_16 {dimension_numbers = #tpu.dot_dimension_numbers<[1], [0], [0], [1], [0, 0, 1, 1], [], []>} : vector<8x16xbf16>, vector<16x64xbf16>, vector<8x64xf32> -> vector<8x64xf32>
    %c0_17 = arith.constant 0 : index
    %c8 = arith.constant 8 : index
    %42 = vector.load %arg1[%c0_17, %c8] : memref<8x64xbf16, #tpu.memory_space<vmem>>, vector<8x8xbf16>
    %43 = vector.broadcast %2 : vector<1x64xf32> to vector<8x64xf32>
    %44 = arith.addf %43, %41 : vector<8x64xf32>
    %cst_18 = arith.constant dense<0.000000e+00> : vector<8x64xf32>
    %45 = tpu.matmul %42, %1, %cst_18 {dimension_numbers = #tpu.dot_dimension_numbers<[1], [0], [0], [1], [0, 0, 1, 1], [], []>} : vector<8x8xbf16>, vector<8x64xbf16>, vector<8x64xf32> -> vector<8x64xf32>
    %46 = arith.addf %44, %45 : vector<8x64xf32>
    %47 = arith.negf %46 : vector<8x64xf32>
    %48 = math.exp %47 : vector<8x64xf32>
    %cst_19 = arith.constant 1.000000e+00 : f32
    %49 = vector.broadcast %cst_19 : f32 to vector<8x64xf32>
    %50 = arith.addf %49, %48 : vector<8x64xf32>
    %51 = arith.divf %49, %50 : vector<8x64xf32>
    %52 = math.tanh %46 : vector<8x64xf32>
    %53 = arith.select %8, %52, %51 : vector<8x64xi1>, vector<8x64xf32>
    %54 = vector.extract_strided_slice %53 {offsets = [0, 0], sizes = [8, 16], strides = [1, 1]} : vector<8x64xf32> to vector<8x16xf32>
    %55 = vector.extract_strided_slice %53 {offsets = [0, 16], sizes = [8, 16], strides = [1, 1]} : vector<8x64xf32> to vector<8x16xf32>
    %56 = vector.extract_strided_slice %53 {offsets = [0, 32], sizes = [8, 16], strides = [1, 1]} : vector<8x64xf32> to vector<8x16xf32>
    %57 = vector.extract_strided_slice %53 {offsets = [0, 48], sizes = [8, 16], strides = [1, 1]} : vector<8x64xf32> to vector<8x16xf32>
    %58 = arith.mulf %55, %33 : vector<8x16xf32>
    %59 = arith.mulf %54, %56 : vector<8x16xf32>
    %60 = arith.addf %58, %59 : vector<8x16xf32>
    %61 = math.tanh %60 : vector<8x16xf32>
    %62 = arith.mulf %57, %61 : vector<8x16xf32>
    %63 = arith.truncf %62 : vector<8x16xf32> to vector<8x16xbf16>
    %cst_20 = arith.constant dense<0.000000e+00> : vector<8x128xf32>
    %64 = tpu.matmul %63, %39, %cst_20 {dimension_numbers = #tpu.dot_dimension_numbers<[1], [0], [0], [1], [0, 0, 1, 1], [], []>} : vector<8x16xbf16>, vector<16x128xbf16>, vector<8x128xf32> -> vector<8x128xf32>
    %65 = arith.addf %38, %64 : vector<8x128xf32>
    %c32 = arith.constant 32 : index
    %c0_21 = arith.constant 0 : index
    %66 = vector.load %arg5[%c32, %c0_21] : memref<128x128xbf16, #tpu.memory_space<vmem>>, vector<16x128xbf16>
    %67 = arith.truncf %62 : vector<8x16xf32> to vector<8x16xbf16>
    %cst_22 = arith.constant dense<0.000000e+00> : vector<8x64xf32>
    %68 = tpu.matmul %67, %0, %cst_22 {dimension_numbers = #tpu.dot_dimension_numbers<[1], [0], [0], [1], [0, 0, 1, 1], [], []>} : vector<8x16xbf16>, vector<16x64xbf16>, vector<8x64xf32> -> vector<8x64xf32>
    %c0_23 = arith.constant 0 : index
    %c16_24 = arith.constant 16 : index
    %69 = vector.load %arg1[%c0_23, %c16_24] : memref<8x64xbf16, #tpu.memory_space<vmem>>, vector<8x8xbf16>
    %70 = vector.broadcast %2 : vector<1x64xf32> to vector<8x64xf32>
    %71 = arith.addf %70, %68 : vector<8x64xf32>
    %cst_25 = arith.constant dense<0.000000e+00> : vector<8x64xf32>
    %72 = tpu.matmul %69, %1, %cst_25 {dimension_numbers = #tpu.dot_dimension_numbers<[1], [0], [0], [1], [0, 0, 1, 1], [], []>} : vector<8x8xbf16>, vector<8x64xbf16>, vector<8x64xf32> -> vector<8x64xf32>
    %73 = arith.addf %71, %72 : vector<8x64xf32>
    %74 = arith.negf %73 : vector<8x64xf32>
    %75 = math.exp %74 : vector<8x64xf32>
    %cst_26 = arith.constant 1.000000e+00 : f32
    %76 = vector.broadcast %cst_26 : f32 to vector<8x64xf32>
    %77 = arith.addf %76, %75 : vector<8x64xf32>
    %78 = arith.divf %76, %77 : vector<8x64xf32>
    %79 = math.tanh %73 : vector<8x64xf32>
    %80 = arith.select %8, %79, %78 : vector<8x64xi1>, vector<8x64xf32>
    %81 = vector.extract_strided_slice %80 {offsets = [0, 0], sizes = [8, 16], strides = [1, 1]} : vector<8x64xf32> to vector<8x16xf32>
    %82 = vector.extract_strided_slice %80 {offsets = [0, 16], sizes = [8, 16], strides = [1, 1]} : vector<8x64xf32> to vector<8x16xf32>
    %83 = vector.extract_strided_slice %80 {offsets = [0, 32], sizes = [8, 16], strides = [1, 1]} : vector<8x64xf32> to vector<8x16xf32>
    %84 = vector.extract_strided_slice %80 {offsets = [0, 48], sizes = [8, 16], strides = [1, 1]} : vector<8x64xf32> to vector<8x16xf32>
    %85 = arith.mulf %82, %60 : vector<8x16xf32>
    %86 = arith.mulf %81, %83 : vector<8x16xf32>
    %87 = arith.addf %85, %86 : vector<8x16xf32>
    %88 = math.tanh %87 : vector<8x16xf32>
    %89 = arith.mulf %84, %88 : vector<8x16xf32>
    %90 = arith.truncf %89 : vector<8x16xf32> to vector<8x16xbf16>
    %cst_27 = arith.constant dense<0.000000e+00> : vector<8x128xf32>
    %91 = tpu.matmul %90, %66, %cst_27 {dimension_numbers = #tpu.dot_dimension_numbers<[1], [0], [0], [1], [0, 0, 1, 1], [], []>} : vector<8x16xbf16>, vector<16x128xbf16>, vector<8x128xf32> -> vector<8x128xf32>
    %92 = arith.addf %65, %91 : vector<8x128xf32>
    %c48 = arith.constant 48 : index
    %c0_28 = arith.constant 0 : index
    %93 = vector.load %arg5[%c48, %c0_28] : memref<128x128xbf16, #tpu.memory_space<vmem>>, vector<16x128xbf16>
    %94 = arith.truncf %89 : vector<8x16xf32> to vector<8x16xbf16>
    %cst_29 = arith.constant dense<0.000000e+00> : vector<8x64xf32>
    %95 = tpu.matmul %94, %0, %cst_29 {dimension_numbers = #tpu.dot_dimension_numbers<[1], [0], [0], [1], [0, 0, 1, 1], [], []>} : vector<8x16xbf16>, vector<16x64xbf16>, vector<8x64xf32> -> vector<8x64xf32>
    %c0_30 = arith.constant 0 : index
    %c24 = arith.constant 24 : index
    %96 = vector.load %arg1[%c0_30, %c24] : memref<8x64xbf16, #tpu.memory_space<vmem>>, vector<8x8xbf16>
    %97 = vector.broadcast %2 : vector<1x64xf32> to vector<8x64xf32>
    %98 = arith.addf %97, %95 : vector<8x64xf32>
    %cst_31 = arith.constant dense<0.000000e+00> : vector<8x64xf32>
    %99 = tpu.matmul %96, %1, %cst_31 {dimension_numbers = #tpu.dot_dimension_numbers<[1], [0], [0], [1], [0, 0, 1, 1], [], []>} : vector<8x8xbf16>, vector<8x64xbf16>, vector<8x64xf32> -> vector<8x64xf32>
    %100 = arith.addf %98, %99 : vector<8x64xf32>
    %101 = arith.negf %100 : vector<8x64xf32>
    %102 = math.exp %101 : vector<8x64xf32>
    %cst_32 = arith.constant 1.000000e+00 : f32
    %103 = vector.broadcast %cst_32 : f32 to vector<8x64xf32>
    %104 = arith.addf %103, %102 : vector<8x64xf32>
    %105 = arith.divf %103, %104 : vector<8x64xf32>
    %106 = math.tanh %100 : vector<8x64xf32>
    %107 = arith.select %8, %106, %105 : vector<8x64xi1>, vector<8x64xf32>
    %108 = vector.extract_strided_slice %107 {offsets = [0, 0], sizes = [8, 16], strides = [1, 1]} : vector<8x64xf32> to vector<8x16xf32>
    %109 = vector.extract_strided_slice %107 {offsets = [0, 16], sizes = [8, 16], strides = [1, 1]} : vector<8x64xf32> to vector<8x16xf32>
    %110 = vector.extract_strided_slice %107 {offsets = [0, 32], sizes = [8, 16], strides = [1, 1]} : vector<8x64xf32> to vector<8x16xf32>
    %111 = vector.extract_strided_slice %107 {offsets = [0, 48], sizes = [8, 16], strides = [1, 1]} : vector<8x64xf32> to vector<8x16xf32>
    %112 = arith.mulf %109, %87 : vector<8x16xf32>
    %113 = arith.mulf %108, %110 : vector<8x16xf32>
    %114 = arith.addf %112, %113 : vector<8x16xf32>
    %115 = math.tanh %114 : vector<8x16xf32>
    %116 = arith.mulf %111, %115 : vector<8x16xf32>
    %117 = arith.truncf %116 : vector<8x16xf32> to vector<8x16xbf16>
    %cst_33 = arith.constant dense<0.000000e+00> : vector<8x128xf32>
    %118 = tpu.matmul %117, %93, %cst_33 {dimension_numbers = #tpu.dot_dimension_numbers<[1], [0], [0], [1], [0, 0, 1, 1], [], []>} : vector<8x16xbf16>, vector<16x128xbf16>, vector<8x128xf32> -> vector<8x128xf32>
    %119 = arith.addf %92, %118 : vector<8x128xf32>
    %c64 = arith.constant 64 : index
    %c0_34 = arith.constant 0 : index
    %120 = vector.load %arg5[%c64, %c0_34] : memref<128x128xbf16, #tpu.memory_space<vmem>>, vector<16x128xbf16>
    %121 = arith.truncf %116 : vector<8x16xf32> to vector<8x16xbf16>
    %cst_35 = arith.constant dense<0.000000e+00> : vector<8x64xf32>
    %122 = tpu.matmul %121, %0, %cst_35 {dimension_numbers = #tpu.dot_dimension_numbers<[1], [0], [0], [1], [0, 0, 1, 1], [], []>} : vector<8x16xbf16>, vector<16x64xbf16>, vector<8x64xf32> -> vector<8x64xf32>
    %c0_36 = arith.constant 0 : index
    %c32_37 = arith.constant 32 : index
    %123 = vector.load %arg1[%c0_36, %c32_37] : memref<8x64xbf16, #tpu.memory_space<vmem>>, vector<8x8xbf16>
    %124 = vector.broadcast %2 : vector<1x64xf32> to vector<8x64xf32>
    %125 = arith.addf %124, %122 : vector<8x64xf32>
    %cst_38 = arith.constant dense<0.000000e+00> : vector<8x64xf32>
    %126 = tpu.matmul %123, %1, %cst_38 {dimension_numbers = #tpu.dot_dimension_numbers<[1], [0], [0], [1], [0, 0, 1, 1], [], []>} : vector<8x8xbf16>, vector<8x64xbf16>, vector<8x64xf32> -> vector<8x64xf32>
    %127 = arith.addf %125, %126 : vector<8x64xf32>
    %128 = arith.negf %127 : vector<8x64xf32>
    %129 = math.exp %128 : vector<8x64xf32>
    %cst_39 = arith.constant 1.000000e+00 : f32
    %130 = vector.broadcast %cst_39 : f32 to vector<8x64xf32>
    %131 = arith.addf %130, %129 : vector<8x64xf32>
    %132 = arith.divf %130, %131 : vector<8x64xf32>
    %133 = math.tanh %127 : vector<8x64xf32>
    %134 = arith.select %8, %133, %132 : vector<8x64xi1>, vector<8x64xf32>
    %135 = vector.extract_strided_slice %134 {offsets = [0, 0], sizes = [8, 16], strides = [1, 1]} : vector<8x64xf32> to vector<8x16xf32>
    %136 = vector.extract_strided_slice %134 {offsets = [0, 16], sizes = [8, 16], strides = [1, 1]} : vector<8x64xf32> to vector<8x16xf32>
    %137 = vector.extract_strided_slice %134 {offsets = [0, 32], sizes = [8, 16], strides = [1, 1]} : vector<8x64xf32> to vector<8x16xf32>
    %138 = vector.extract_strided_slice %134 {offsets = [0, 48], sizes = [8, 16], strides = [1, 1]} : vector<8x64xf32> to vector<8x16xf32>
    %139 = arith.mulf %136, %114 : vector<8x16xf32>
    %140 = arith.mulf %135, %137 : vector<8x16xf32>
    %141 = arith.addf %139, %140 : vector<8x16xf32>
    %142 = math.tanh %141 : vector<8x16xf32>
    %143 = arith.mulf %138, %142 : vector<8x16xf32>
    %144 = arith.truncf %143 : vector<8x16xf32> to vector<8x16xbf16>
    %cst_40 = arith.constant dense<0.000000e+00> : vector<8x128xf32>
    %145 = tpu.matmul %144, %120, %cst_40 {dimension_numbers = #tpu.dot_dimension_numbers<[1], [0], [0], [1], [0, 0, 1, 1], [], []>} : vector<8x16xbf16>, vector<16x128xbf16>, vector<8x128xf32> -> vector<8x128xf32>
    %146 = arith.addf %119, %145 : vector<8x128xf32>
    %c80 = arith.constant 80 : index
    %c0_41 = arith.constant 0 : index
    %147 = vector.load %arg5[%c80, %c0_41] : memref<128x128xbf16, #tpu.memory_space<vmem>>, vector<16x128xbf16>
    %148 = arith.truncf %143 : vector<8x16xf32> to vector<8x16xbf16>
    %cst_42 = arith.constant dense<0.000000e+00> : vector<8x64xf32>
    %149 = tpu.matmul %148, %0, %cst_42 {dimension_numbers = #tpu.dot_dimension_numbers<[1], [0], [0], [1], [0, 0, 1, 1], [], []>} : vector<8x16xbf16>, vector<16x64xbf16>, vector<8x64xf32> -> vector<8x64xf32>
    %c0_43 = arith.constant 0 : index
    %c40 = arith.constant 40 : index
    %150 = vector.load %arg1[%c0_43, %c40] : memref<8x64xbf16, #tpu.memory_space<vmem>>, vector<8x8xbf16>
    %151 = vector.broadcast %2 : vector<1x64xf32> to vector<8x64xf32>
    %152 = arith.addf %151, %149 : vector<8x64xf32>
    %cst_44 = arith.constant dense<0.000000e+00> : vector<8x64xf32>
    %153 = tpu.matmul %150, %1, %cst_44 {dimension_numbers = #tpu.dot_dimension_numbers<[1], [0], [0], [1], [0, 0, 1, 1], [], []>} : vector<8x8xbf16>, vector<8x64xbf16>, vector<8x64xf32> -> vector<8x64xf32>
    %154 = arith.addf %152, %153 : vector<8x64xf32>
    %155 = arith.negf %154 : vector<8x64xf32>
    %156 = math.exp %155 : vector<8x64xf32>
    %cst_45 = arith.constant 1.000000e+00 : f32
    %157 = vector.broadcast %cst_45 : f32 to vector<8x64xf32>
    %158 = arith.addf %157, %156 : vector<8x64xf32>
    %159 = arith.divf %157, %158 : vector<8x64xf32>
    %160 = math.tanh %154 : vector<8x64xf32>
    %161 = arith.select %8, %160, %159 : vector<8x64xi1>, vector<8x64xf32>
    %162 = vector.extract_strided_slice %161 {offsets = [0, 0], sizes = [8, 16], strides = [1, 1]} : vector<8x64xf32> to vector<8x16xf32>
    %163 = vector.extract_strided_slice %161 {offsets = [0, 16], sizes = [8, 16], strides = [1, 1]} : vector<8x64xf32> to vector<8x16xf32>
    %164 = vector.extract_strided_slice %161 {offsets = [0, 32], sizes = [8, 16], strides = [1, 1]} : vector<8x64xf32> to vector<8x16xf32>
    %165 = vector.extract_strided_slice %161 {offsets = [0, 48], sizes = [8, 16], strides = [1, 1]} : vector<8x64xf32> to vector<8x16xf32>
    %166 = arith.mulf %163, %141 : vector<8x16xf32>
    %167 = arith.mulf %162, %164 : vector<8x16xf32>
    %168 = arith.addf %166, %167 : vector<8x16xf32>
    %169 = math.tanh %168 : vector<8x16xf32>
    %170 = arith.mulf %165, %169 : vector<8x16xf32>
    %171 = arith.truncf %170 : vector<8x16xf32> to vector<8x16xbf16>
    %cst_46 = arith.constant dense<0.000000e+00> : vector<8x128xf32>
    %172 = tpu.matmul %171, %147, %cst_46 {dimension_numbers = #tpu.dot_dimension_numbers<[1], [0], [0], [1], [0, 0, 1, 1], [], []>} : vector<8x16xbf16>, vector<16x128xbf16>, vector<8x128xf32> -> vector<8x128xf32>
    %173 = arith.addf %146, %172 : vector<8x128xf32>
    %c96 = arith.constant 96 : index
    %c0_47 = arith.constant 0 : index
    %174 = vector.load %arg5[%c96, %c0_47] : memref<128x128xbf16, #tpu.memory_space<vmem>>, vector<16x128xbf16>
    %175 = arith.truncf %170 : vector<8x16xf32> to vector<8x16xbf16>
    %cst_48 = arith.constant dense<0.000000e+00> : vector<8x64xf32>
    %176 = tpu.matmul %175, %0, %cst_48 {dimension_numbers = #tpu.dot_dimension_numbers<[1], [0], [0], [1], [0, 0, 1, 1], [], []>} : vector<8x16xbf16>, vector<16x64xbf16>, vector<8x64xf32> -> vector<8x64xf32>
    %c0_49 = arith.constant 0 : index
    %c48_50 = arith.constant 48 : index
    %177 = vector.load %arg1[%c0_49, %c48_50] : memref<8x64xbf16, #tpu.memory_space<vmem>>, vector<8x8xbf16>
    %178 = vector.broadcast %2 : vector<1x64xf32> to vector<8x64xf32>
    %179 = arith.addf %178, %176 : vector<8x64xf32>
    %cst_51 = arith.constant dense<0.000000e+00> : vector<8x64xf32>
    %180 = tpu.matmul %177, %1, %cst_51 {dimension_numbers = #tpu.dot_dimension_numbers<[1], [0], [0], [1], [0, 0, 1, 1], [], []>} : vector<8x8xbf16>, vector<8x64xbf16>, vector<8x64xf32> -> vector<8x64xf32>
    %181 = arith.addf %179, %180 : vector<8x64xf32>
    %182 = arith.negf %181 : vector<8x64xf32>
    %183 = math.exp %182 : vector<8x64xf32>
    %cst_52 = arith.constant 1.000000e+00 : f32
    %184 = vector.broadcast %cst_52 : f32 to vector<8x64xf32>
    %185 = arith.addf %184, %183 : vector<8x64xf32>
    %186 = arith.divf %184, %185 : vector<8x64xf32>
    %187 = math.tanh %181 : vector<8x64xf32>
    %188 = arith.select %8, %187, %186 : vector<8x64xi1>, vector<8x64xf32>
    %189 = vector.extract_strided_slice %188 {offsets = [0, 0], sizes = [8, 16], strides = [1, 1]} : vector<8x64xf32> to vector<8x16xf32>
    %190 = vector.extract_strided_slice %188 {offsets = [0, 16], sizes = [8, 16], strides = [1, 1]} : vector<8x64xf32> to vector<8x16xf32>
    %191 = vector.extract_strided_slice %188 {offsets = [0, 32], sizes = [8, 16], strides = [1, 1]} : vector<8x64xf32> to vector<8x16xf32>
    %192 = vector.extract_strided_slice %188 {offsets = [0, 48], sizes = [8, 16], strides = [1, 1]} : vector<8x64xf32> to vector<8x16xf32>
    %193 = arith.mulf %190, %168 : vector<8x16xf32>
    %194 = arith.mulf %189, %191 : vector<8x16xf32>
    %195 = arith.addf %193, %194 : vector<8x16xf32>
    %196 = math.tanh %195 : vector<8x16xf32>
    %197 = arith.mulf %192, %196 : vector<8x16xf32>
    %198 = arith.truncf %197 : vector<8x16xf32> to vector<8x16xbf16>
    %cst_53 = arith.constant dense<0.000000e+00> : vector<8x128xf32>
    %199 = tpu.matmul %198, %174, %cst_53 {dimension_numbers = #tpu.dot_dimension_numbers<[1], [0], [0], [1], [0, 0, 1, 1], [], []>} : vector<8x16xbf16>, vector<16x128xbf16>, vector<8x128xf32> -> vector<8x128xf32>
    %200 = arith.addf %173, %199 : vector<8x128xf32>
    %c112 = arith.constant 112 : index
    %c0_54 = arith.constant 0 : index
    %201 = vector.load %arg5[%c112, %c0_54] : memref<128x128xbf16, #tpu.memory_space<vmem>>, vector<16x128xbf16>
    %202 = arith.truncf %197 : vector<8x16xf32> to vector<8x16xbf16>
    %cst_55 = arith.constant dense<0.000000e+00> : vector<8x64xf32>
    %203 = tpu.matmul %202, %0, %cst_55 {dimension_numbers = #tpu.dot_dimension_numbers<[1], [0], [0], [1], [0, 0, 1, 1], [], []>} : vector<8x16xbf16>, vector<16x64xbf16>, vector<8x64xf32> -> vector<8x64xf32>
    %c0_56 = arith.constant 0 : index
    %c56 = arith.constant 56 : index
    %204 = vector.load %arg1[%c0_56, %c56] : memref<8x64xbf16, #tpu.memory_space<vmem>>, vector<8x8xbf16>
    %205 = vector.broadcast %2 : vector<1x64xf32> to vector<8x64xf32>
    %206 = arith.addf %205, %203 : vector<8x64xf32>
    %cst_57 = arith.constant dense<0.000000e+00> : vector<8x64xf32>
    %207 = tpu.matmul %204, %1, %cst_57 {dimension_numbers = #tpu.dot_dimension_numbers<[1], [0], [0], [1], [0, 0, 1, 1], [], []>} : vector<8x8xbf16>, vector<8x64xbf16>, vector<8x64xf32> -> vector<8x64xf32>
    %208 = arith.addf %206, %207 : vector<8x64xf32>
    %209 = arith.negf %208 : vector<8x64xf32>
    %210 = math.exp %209 : vector<8x64xf32>
    %cst_58 = arith.constant 1.000000e+00 : f32
    %211 = vector.broadcast %cst_58 : f32 to vector<8x64xf32>
    %212 = arith.addf %211, %210 : vector<8x64xf32>
    %213 = arith.divf %211, %212 : vector<8x64xf32>
    %214 = math.tanh %208 : vector<8x64xf32>
    %215 = arith.select %8, %214, %213 : vector<8x64xi1>, vector<8x64xf32>
    %216 = vector.extract_strided_slice %215 {offsets = [0, 0], sizes = [8, 16], strides = [1, 1]} : vector<8x64xf32> to vector<8x16xf32>
    %217 = vector.extract_strided_slice %215 {offsets = [0, 16], sizes = [8, 16], strides = [1, 1]} : vector<8x64xf32> to vector<8x16xf32>
    %218 = vector.extract_strided_slice %215 {offsets = [0, 32], sizes = [8, 16], strides = [1, 1]} : vector<8x64xf32> to vector<8x16xf32>
    %219 = vector.extract_strided_slice %215 {offsets = [0, 48], sizes = [8, 16], strides = [1, 1]} : vector<8x64xf32> to vector<8x16xf32>
    %220 = arith.mulf %217, %195 : vector<8x16xf32>
    %221 = arith.mulf %216, %218 : vector<8x16xf32>
    %222 = arith.addf %220, %221 : vector<8x16xf32>
    %223 = math.tanh %222 : vector<8x16xf32>
    %224 = arith.mulf %219, %223 : vector<8x16xf32>
    %225 = arith.truncf %224 : vector<8x16xf32> to vector<8x16xbf16>
    %cst_59 = arith.constant dense<0.000000e+00> : vector<8x128xf32>
    %226 = tpu.matmul %225, %201, %cst_59 {dimension_numbers = #tpu.dot_dimension_numbers<[1], [0], [0], [1], [0, 0, 1, 1], [], []>} : vector<8x16xbf16>, vector<16x128xbf16>, vector<8x128xf32> -> vector<8x128xf32>
    %227 = arith.addf %200, %226 : vector<8x128xf32>
    %c0_60 = arith.constant 0 : index
    %c0_61 = arith.constant 0 : index
    %228 = vector.load %arg6[%c0_60, %c0_61] : memref<1x128xf32, #tpu.memory_space<vmem>>, vector<1x128xf32>
    %229 = vector.broadcast %228 : vector<1x128xf32> to vector<8x128xf32>
    %230 = arith.addf %227, %229 : vector<8x128xf32>
    %c0_62 = arith.constant 0 : index
    %c0_63 = arith.constant 0 : index
    %231 = vector.load %arg7[%c0_62, %c0_63] : memref<8x128xf32, #tpu.memory_space<vmem>>, vector<8x128xf32>
    tpu.vector_store %arg7[%c0_62, %c0_63], %230 {strides = array<i32>} : memref<8x128xf32, #tpu.memory_space<vmem>>, vector<8x128xf32>,
    return
  }
  func.func @transform_0(%arg0: i32) -> (i32, i32) {
    %c0_i32 = arith.constant 0 : i32
    %c0_i32_0 = arith.constant 0 : i32
    return %arg0, %c0_i32 : i32, i32
  }
  func.func @transform_1(%arg0: i32) -> (i32, i32) {
    %c0_i32 = arith.constant 0 : i32
    %c0_i32_0 = arith.constant 0 : i32
    %c0_i32_1 = arith.constant 0 : i32
    return %c0_i32, %c0_i32_0 : i32, i32
  }
  func.func @transform_2(%arg0: i32) -> (i32, i32) {
    %c0_i32 = arith.constant 0 : i32
    %c0_i32_0 = arith.constant 0 : i32
    %c0_i32_1 = arith.constant 0 : i32
    return %c0_i32, %c0_i32_0 : i32, i32
  }
  func.func @transform_3(%arg0: i32) -> (i32, i32) {
    %c0_i32 = arith.constant 0 : i32
    %c0_i32_0 = arith.constant 0 : i32
    %c0_i32_1 = arith.constant 0 : i32
    return %c0_i32, %c0_i32_0 : i32, i32
  }
  func.func @transform_4(%arg0: i32) -> (i32, i32) {
    %c0_i32 = arith.constant 0 : i32
    %c0_i32_0 = arith.constant 0 : i32
    %c0_i32_1 = arith.constant 0 : i32
    return %c0_i32, %c0_i32_0 : i32, i32
  }
  func.func @transform_5(%arg0: i32) -> (i32, i32) {
    %c0_i32 = arith.constant 0 : i32
    %c0_i32_0 = arith.constant 0 : i32
    %c0_i32_1 = arith.constant 0 : i32
    return %c0_i32, %c0_i32_0 : i32, i32
  }
  func.func @transform_6(%arg0: i32) -> (i32, i32) {
    %c0_i32 = arith.constant 0 : i32
    %c0_i32_0 = arith.constant 0 : i32
    return %arg0, %c0_i32 : i32, i32
  }
}

</mosaic_0001>

<llo_original>
// kernel: hier_rnn_forward.3
$region0: #{hier_rnn_forward.3}
  #allocation0 [shape = 'u32[]', space=smem, size = 0x4, offset = 0x4, fixed_abs, tag = 'smem constant byte address 0x4 - core index']
  #allocation1 [shape = 'u32[144,128]{1,0:T(1,128)}', space=vmem, size = 0x12000, scoped, tag = 'internal scratch']
  %s0 = inlined_call_operand.vmem [shape: f32[2,768], index: 0, kind: input, shape index: {}]
  %s1 = inlined_call_operand.vmem [shape: bf16[32,128], index: 1, kind: input, shape index: {}]
  %s2 = inlined_call_operand.vmem [shape: bf16[192,128], index: 2, kind: input, shape index: {}]
  %s3 = inlined_call_operand.vmem [shape: f32[1,128], index: 3, kind: input, shape index: {}]
  %s4 = inlined_call_operand.hbm [shape: f32[2,128], index: 4, kind: output, shape index: {}]
  %s5 = sld [smem:[#allocation0]]
  $region26: #{hier_rnn_forward.3} parent=0
    _
  %s7 = ssub.s32 1, %s5
  %s8 = scalar_select 0, %s7, %s5
  $region1: #{hier_rnn_forward.3} parent=0
    #allocation2 [shape = 'u8[1024]{0}', space=vmem, size = 0x400, scoped, tag = 'output window, operand 0, single buffered']
    #allocation3 [shape = 's32[1]{0}', space=sflag, size = 0x4, scoped, tag = 'scoped memory for hier_rnn_forward.3']
    %9 = vsyncpa [#allocation3], 0
    // Predicated region
    $region2: #{hier_rnn_forward.3} parent=1 // pred_check
      _
    $region3: #{hier_rnn_forward.3} parent=1 // pred_check_branch
      %11 = sbr.rel (0) target = $region5
    $region4: #{hier_rnn_forward.3} parent=1 // pred_region
      _
    $region5: #{hier_rnn_forward.3} parent=1 // pred_fallthru
      _
    // Predicated region
    $region6: #{hier_rnn_forward.3} parent=1 // pred_check
      _
    $region7: #{hier_rnn_forward.3} parent=1 // pred_check_branch
      %13 = sbr.rel (0) target = $region9
    $region8: #{hier_rnn_forward.3} parent=1 // pred_region
      _
    $region9: #{hier_rnn_forward.3} parent=1 // pred_fallthru
      _
    // Predicated region
    $region10: #{hier_rnn_forward.3} parent=1 // pred_check
      _
    $region11: #{hier_rnn_forward.3} parent=1 // pred_check_branch
      %15 = sbr.rel (0) target = $region13
    $region12: #{hier_rnn_forward.3} parent=1 // pred_region
      _
    $region13: #{hier_rnn_forward.3} parent=1 // pred_fallthru
      _
    // Predicated region
    $region14: #{hier_rnn_forward.3} parent=1 // pred_check
      _
    $region15: #{hier_rnn_forward.3} parent=1 // pred_check_branch
      %17 = sbr.rel (0) target = $region17
    $region16: #{hier_rnn_forward.3} parent=1 // pred_region
      _
    $region17: #{hier_rnn_forward.3} parent=1 // pred_fallthru
      _
    %v19 = vld [vmem:[%s1] sm:$0xf]
    %v20 = vld [vmem:[%s1 + $0x4] sm:$0xf]
    %v21 = vld [vmem:[%s1 + $0x8] sm:$0xf]
    %v22 = vld [vmem:[%s1 + $0xc] sm:$0xf]
    %v23 = vlaneseq
    %v24 = vand.u32 %v23, 127
    %vm25 = vcmp.ge.s32.totalorder %v24, 64
    %vm26 = vcmp.lt.s32.totalorder %v24, 96
    %vm27 = vmand %vm25, %vm26
    %v28 = vld [vmem:[%s2] sm:$0xf]
    %v29 = vld [vmem:[%s2 + $0x4] sm:$0xf]
    %v30 = vld [vmem:[%s2 + $0x8] sm:$0xf]
    %v31 = vld [vmem:[%s2 + $0xc] sm:$0xf]
    %v36 = vunpack.c.l.b16 %v19
    %v37 = vunpack.c.l.b16 %v20
    %v38 = vunpack.c.l.b16 %v21
    %v39 = vunpack.c.l.b16 %v22
    %v40 = vpack.c.b16 %v37, %v36
    %v41 = vpack.c.b16 %v39, %v38
    %vm44 = vcmask 261120
    %v46 = vsel %vm44, 0, 0
    %48 = vmatprep.subr.bf16.mxu0 0
    %49 = vmatpush1.bf16.msra.mxu0 0
    %50 = vmatprep.subr.bf16.mxu0 0
    %51 = vmatpush1.bf16.msra.mxu0 0
    %52 = vmatprep.subr.bf16.mxu0 0
    %53 = vmatpush1.bf16.msra.mxu0 0
    %54 = vmatprep.subr.bf16.mxu0 0
    %55 = vmatpush1.bf16.msra.mxu0 0
    %56 = vmatprep.subr.bf16.mxu0 0
    %57 = vmatpush1.bf16.msra.mxu0 0
    %58 = vmatprep.subr.bf16.mxu0 0
    %59 = vmatpush1.bf16.msra.mxu0 0
    %60 = vmatprep.subr.bf16.mxu0 0
    %61 = vmatpush1.bf16.msra.mxu0 %v41
    %62 = vmatprep.subr.bf16.mxu0 0
    %63 = vmatpush1.bf16.msra.mxu0 %v40
    %64 = vmatprep.subr.bf16.mxu0 0
    %65 = vmatpush2.bf16.msra.mxu0 0
    %66 = vmatprep.subr.bf16.mxu0 0
    %67 = vmatpush2.bf16.msra.mxu0 0
    %68 = vmatprep.subr.bf16.mxu0 0
    %69 = vmatpush2.bf16.msra.mxu0 0
    %70 = vmatprep.subr.bf16.mxu0 0
    %71 = vmatpush2.bf16.msra.mxu0 0
    %72 = vmatprep.subr.bf16.mxu0 0
    %73 = vmatpush2.bf16.msra.mxu0 0
    %74 = vmatprep.subr.bf16.mxu0 0
    %75 = vmatpush2.bf16.msra.mxu0 0
    %76 = vmatprep.subr.bf16.mxu0 0
    %77 = vmatpush2.bf16.msra.mxu0 0
    %78 = vmatprep.subr.bf16.mxu0 0
    %79 = vmatpush2.bf16.msra.mxu0 0
    %80 = vmatprep.mubr.bf16.mxu0 0
    %81 = vmatmul.mubr.bf16.gmra.mxu0 %v46
    %v82 = vpop.f32.mrf.mxu0
    %v83 = vadd.f32 0.0, %v82
    %v84 = vpop.f32.mrf.mxu0
    %v85 = vpop.f32.mrf.mxu0
    %v86 = vpop.f32.mrf.mxu0
    %87 = vdwg.mxu0
    %v88 = vld [vmem:[%s0] sm:$0x3]
    %v89 = vadd.f32 %v88, %v83
    %v90 = vxor.u32 %v89, 2147483648
    %v91 = vmul.f32 %v90, 1.442695
    %v92 = vpow.pop %v91
    %v93 = vadd.f32 %v92, 1.0
    %v94 = vrcp.pop %v93
    %v95 = vmul.f32 1.0, %v94
    %v96 = vtanh.pop %v89
    %v97 = vsel %vm27, %v96, %v95
    %v98 = vmul.f32 %v97, 0.0
    %100 = vrot.lane.b32.xlu0 %v97, 64
    %v101 = vpop.permute.xlu0 %100
    %v103 = vmul.f32 %v97, %v101
    %105 = vrot.lane.b32.xlu0 %v103, 32
    %v106 = vpop.permute.xlu0 %105
    %v108 = vadd.f32 %v98, %v106
    %v109 = vtanh.pop %v108
    %111 = vrot.lane.b32.xlu0 %v109, 64
    %v112 = vpop.permute.xlu0 %111
    %v114 = vmul.f32 %v97, %v112
    %v115 = vpack.c.bf16 %v114, %v114
    %v116 = vld [vmem:[%s2 + $0x10] sm:$0xf]
    %v117 = vld [vmem:[%s2 + $0x14] sm:$0xf]
    %v118 = vld [vmem:[%s2 + $0x18] sm:$0xf]
    %v119 = vld [vmem:[%s2 + $0x1c] sm:$0xf]
    %121 = vrot.lane.b32.xlu0 %v115, 32
    %v122 = vpop.permute.xlu0 %121
    %v124 = vsel %vm44, %v122, 0
    %126 = vmatprep.subr.bf16.mxu0 0
    %127 = vmatpush1.bf16.msra.mxu0 0
    %128 = vmatprep.subr.bf16.mxu0 0
    %129 = vmatpush1.bf16.msra.mxu0 0
    %130 = vmatprep.subr.bf16.mxu0 0
    %131 = vmatpush1.bf16.msra.mxu0 0
    %132 = vmatprep.subr.bf16.mxu0 0
    %133 = vmatpush1.bf16.msra.mxu0 0
    %134 = vmatprep.subr.bf16.mxu0 0
    %135 = vmatpush1.bf16.msra.mxu0 0
    %136 = vmatprep.subr.bf16.mxu0 0
    %137 = vmatpush1.bf16.msra.mxu0 0
    %138 = vmatprep.subr.bf16.mxu0 0
    %139 = vmatpush1.bf16.msra.mxu0 %v41
    %140 = vmatprep.subr.bf16.mxu0 0
    %141 = vmatpush1.bf16.msra.mxu0 %v40
    %142 = vmatprep.subr.bf16.mxu0 0
    %143 = vmatpush2.bf16.msra.mxu0 0
    %144 = vmatprep.subr.bf16.mxu0 0
    %145 = vmatpush2.bf16.msra.mxu0 0
    %146 = vmatprep.subr.bf16.mxu0 0
    %147 = vmatpush2.bf16.msra.mxu0 0
    %148 = vmatprep.subr.bf16.mxu0 0
    %149 = vmatpush2.bf16.msra.mxu0 0
    %150 = vmatprep.subr.bf16.mxu0 0
    %151 = vmatpush2.bf16.msra.mxu0 0
    %152 = vmatprep.subr.bf16.mxu0 0
    %153 = vmatpush2.bf16.msra.mxu0 0
    %154 = vmatprep.subr.bf16.mxu0 0
    %155 = vmatpush2.bf16.msra.mxu0 0
    %156 = vmatprep.subr.bf16.mxu0 0
    %157 = vmatpush2.bf16.msra.mxu0 0
    %158 = vmatprep.mubr.bf16.mxu0 0
    %159 = vmatmul.mubr.bf16.gmra.mxu0 %v124
    %v160 = vpop.f32.mrf.mxu0
    %v161 = vadd.f32 0.0, %v160
    %v162 = vpop.f32.mrf.mxu0
    %v163 = vpop.f32.mrf.mxu0
    %v164 = vpop.f32.mrf.mxu0
    %165 = vdwg.mxu0
    %v166 = vld [vmem:[%s0 + $0x2] sm:$0x3]
    %v167 = vadd.f32 %v166, %v161
    %v168 = vxor.u32 %v167, 2147483648
    %v169 = vmul.f32 %v168, 1.442695
    %v170 = vpow.pop %v169
    %v171 = vadd.f32 %v170, 1.0
    %v172 = vrcp.pop %v171
    %v173 = vmul.f32 1.0, %v172
    %v174 = vtanh.pop %v167
    %v175 = vsel %vm27, %v174, %v173
    %v176 = vmul.f32 %v175, %v108
    %178 = vrot.lane.b32.xlu0 %v175, 64
    %v179 = vpop.permute.xlu0 %178
    %v181 = vmul.f32 %v175, %v179
    %183 = vrot.lane.b32.xlu0 %v181, 32
    %v184 = vpop.permute.xlu0 %183
    %v186 = vadd.f32 %v176, %v184
    %v187 = vtanh.pop %v186
    %189 = vrot.lane.b32.xlu0 %v187, 64
    %v190 = vpop.permute.xlu0 %189
    %v192 = vmul.f32 %v175, %v190
    %v193 = vpack.c.bf16 %v192, %v192
    %195 = vrot.lane.b32.xlu0 %v193, 32
    %v196 = vpop.permute.xlu0 %195
    %v201 = vunpack.c.l.b16 %v116
    %v202 = vunpack.c.l.b16 %v117
    %v203 = vunpack.c.l.b16 %v118
    %v204 = vunpack.c.l.b16 %v119
    %v205 = vpack.c.b16 %v202, %v201
    %v206 = vpack.c.b16 %v204, %v203
    %v210 = vsel %vm44, %v196, 0
    %212 = vmatprep.subr.bf16.mxu0 0
    %213 = vmatpush1.bf16.msra.mxu0 0
    %214 = vmatprep.subr.bf16.mxu0 0
    %215 = vmatpush1.bf16.msra.mxu0 0
    %216 = vmatprep.subr.bf16.mxu0 0
    %217 = vmatpush1.bf16.msra.mxu0 0
    %218 = vmatprep.subr.bf16.mxu0 0
    %219 = vmatpush1.bf16.msra.mxu0 0
    %220 = vmatprep.subr.bf16.mxu0 0
    %221 = vmatpush1.bf16.msra.mxu0 0
    %222 = vmatprep.subr.bf16.mxu0 0
    %223 = vmatpush1.bf16.msra.mxu0 0
    %224 = vmatprep.subr.bf16.mxu0 0
    %225 = vmatpush1.bf16.msra.mxu0 %v206
    %226 = vmatprep.subr.bf16.mxu0 0
    %227 = vmatpush1.bf16.msra.mxu0 %v205
    %228 = vmatprep.subr.bf16.mxu0 0
    %229 = vmatpush2.bf16.msra.mxu0 0
    %230 = vmatprep.subr.bf16.mxu0 0
    %231 = vmatpush2.bf16.msra.mxu0 0
    %232 = vmatprep.subr.bf16.mxu0 0
    %233 = vmatpush2.bf16.msra.mxu0 0
    %234 = vmatprep.subr.bf16.mxu0 0
    %235 = vmatpush2.bf16.msra.mxu0 0
    %236 = vmatprep.subr.bf16.mxu0 0
    %237 = vmatpush2.bf16.msra.mxu0 0
    %238 = vmatprep.subr.bf16.mxu0 0
    %239 = vmatpush2.bf16.msra.mxu0 0
    %240 = vmatprep.subr.bf16.mxu0 0
    %241 = vmatpush2.bf16.msra.mxu0 0
    %242 = vmatprep.subr.bf16.mxu0 0
    %243 = vmatpush2.bf16.msra.mxu0 0
    %244 = vmatprep.mubr.bf16.mxu0 0
    %245 = vmatmul.mubr.bf16.gmra.mxu0 %v210
    %v246 = vpop.f32.mrf.mxu0
    %v247 = vadd.f32 0.0, %v246
    %v248 = vpop.f32.mrf.mxu0
    %v249 = vpop.f32.mrf.mxu0
    %v250 = vpop.f32.mrf.mxu0
    %251 = vdwg.mxu0
    %v256 = vunpack.c.l.b16 %v28
    %v257 = vunpack.c.l.b16 %v29
    %v258 = vunpack.c.l.b16 %v30
    %v259 = vunpack.c.l.b16 %v31
    %v260 = vpack.c.b16 %v257, %v256
    %v261 = vpack.c.b16 %v259, %v258
    %264 = vmatprep.subr.bf16.mxu0 0
    %265 = vmatpush1.bf16.msra.mxu0 0
    %266 = vmatprep.subr.bf16.mxu0 0
    %267 = vmatpush1.bf16.msra.mxu0 0
    %268 = vmatprep.subr.bf16.mxu0 0
    %269 = vmatpush1.bf16.msra.mxu0 0
    %270 = vmatprep.subr.bf16.mxu0 0
    %271 = vmatpush1.bf16.msra.mxu0 0
    %272 = vmatprep.subr.bf16.mxu0 0
    %273 = vmatpush1.bf16.msra.mxu0 0
    %274 = vmatprep.subr.bf16.mxu0 0
    %275 = vmatpush1.bf16.msra.mxu0 0
    %276 = vmatprep.subr.bf16.mxu0 0
    %277 = vmatpush1.bf16.msra.mxu0 %v261
    %278 = vmatprep.subr.bf16.mxu0 0
    %279 = vmatpush1.bf16.msra.mxu0 %v260
    %280 = vmatprep.subr.bf16.mxu0 0
    %281 = vmatpush2.bf16.msra.mxu0 0
    %282 = vmatprep.subr.bf16.mxu0 0
    %283 = vmatpush2.bf16.msra.mxu0 0
    %284 = vmatprep.subr.bf16.mxu0 0
    %285 = vmatpush2.bf16.msra.mxu0 0
    %286 = vmatprep.subr.bf16.mxu0 0
    %287 = vmatpush2.bf16.msra.mxu0 0
    %288 = vmatprep.subr.bf16.mxu0 0
    %289 = vmatpush2.bf16.msra.mxu0 0
    %290 = vmatprep.subr.bf16.mxu0 0
    %291 = vmatpush2.bf16.msra.mxu0 0
    %292 = vmatprep.subr.bf16.mxu0 0
    %293 = vmatpush2.bf16.msra.mxu0 0
    %294 = vmatprep.subr.bf16.mxu0 0
    %295 = vmatpush2.bf16.msra.mxu0 0
    %296 = vmatprep.mubr.bf16.mxu0 0
    %297 = vmatmul.mubr.bf16.gmra.mxu0 %v124
    %v298 = vpop.f32.mrf.mxu0
    %v299 = vadd.f32 %v247, %v298
    %v300 = vpop.f32.mrf.mxu0
    %v301 = vpop.f32.mrf.mxu0
    %v302 = vpop.f32.mrf.mxu0
    %303 = vdwg.mxu0
    %v304 = vld [vmem:[%s2 + $0x20] sm:$0xf]
    %v305 = vld [vmem:[%s2 + $0x24] sm:$0xf]
    %v306 = vld [vmem:[%s2 + $0x28] sm:$0xf]
    %v307 = vld [vmem:[%s2 + $0x2c] sm:$0xf]
    %308 = vmatprep.subr.bf16.mxu0 0
    %309 = vmatpush1.bf16.msra.mxu0 0
    %310 = vmatprep.subr.bf16.mxu0 0
    %311 = vmatpush1.bf16.msra.mxu0 0
    %312 = vmatprep.subr.bf16.mxu0 0
    %313 = vmatpush1.bf16.msra.mxu0 0
    %314 = vmatprep.subr.bf16.mxu0 0
    %315 = vmatpush1.bf16.msra.mxu0 0
    %316 = vmatprep.subr.bf16.mxu0 0
    %317 = vmatpush1.bf16.msra.mxu0 0
    %318 = vmatprep.subr.bf16.mxu0 0
    %319 = vmatpush1.bf16.msra.mxu0 0
    %320 = vmatprep.subr.bf16.mxu0 0
    %321 = vmatpush1.bf16.msra.mxu0 %v41
    %322 = vmatprep.subr.bf16.mxu0 0
    %323 = vmatpush1.bf16.msra.mxu0 %v40
    %324 = vmatprep.subr.bf16.mxu0 0
    %325 = vmatpush2.bf16.msra.mxu0 0
    %326 = vmatprep.subr.bf16.mxu0 0
    %327 = vmatpush2.bf16.msra.mxu0 0
    %328 = vmatprep.subr.bf16.mxu0 0
    %329 = vmatpush2.bf16.msra.mxu0 0
    %330 = vmatprep.subr.bf16.mxu0 0
    %331 = vmatpush2.bf16.msra.mxu0 0
    %332 = vmatprep.subr.bf16.mxu0 0
    %333 = vmatpush2.bf16.msra.mxu0 0
    %334 = vmatprep.subr.bf16.mxu0 0
    %335 = vmatpush2.bf16.msra.mxu0 0
    %336 = vmatprep.subr.bf16.mxu0 0
    %337 = vmatpush2.bf16.msra.mxu0 0
    %338 = vmatprep.subr.bf16.mxu0 0
    %339 = vmatpush2.bf16.msra.mxu0 0
    %340 = vmatprep.mubr.bf16.mxu0 0
    %341 = vmatmul.mubr.bf16.gmra.mxu0 %v210
    %v342 = vpop.f32.mrf.mxu0
    %v343 = vadd.f32 0.0, %v342
    %v344 = vpop.f32.mrf.mxu0
    %v345 = vpop.f32.mrf.mxu0
    %v346 = vpop.f32.mrf.mxu0
    %347 = vdwg.mxu0
    %v348 = vld [vmem:[%s0 + $0x4] sm:$0x3]
    %v349 = vadd.f32 %v348, %v343
    %v350 = vxor.u32 %v349, 2147483648
    %v351 = vmul.f32 %v350, 1.442695
    %v352 = vpow.pop %v351
    %v353 = vadd.f32 %v352, 1.0
    %v354 = vrcp.pop %v353
    %v355 = vmul.f32 1.0, %v354
    %v356 = vtanh.pop %v349
    %v357 = vsel %vm27, %v356, %v355
    %v358 = vmul.f32 %v357, %v186
    %360 = vrot.lane.b32.xlu0 %v357, 64
    %v361 = vpop.permute.xlu0 %360
    %v363 = vmul.f32 %v357, %v361
    %365 = vrot.lane.b32.xlu0 %v363, 32
    %v366 = vpop.permute.xlu0 %365
    %v368 = vadd.f32 %v358, %v366
    %v369 = vtanh.pop %v368
    %371 = vrot.lane.b32.xlu0 %v369, 64
    %v372 = vpop.permute.xlu0 %371
    %v374 = vmul.f32 %v357, %v372
    %v375 = vpack.c.bf16 %v374, %v374
    %377 = vrot.lane.b32.xlu0 %v375, 32
    %v378 = vpop.permute.xlu0 %377
    %v383 = vunpack.c.l.b16 %v304
    %v384 = vunpack.c.l.b16 %v305
    %v385 = vunpack.c.l.b16 %v306
    %v386 = vunpack.c.l.b16 %v307
    %v387 = vpack.c.b16 %v384, %v383
    %v388 = vpack.c.b16 %v386, %v385
    %v392 = vsel %vm44, %v378, 0
    %394 = vmatprep.subr.bf16.mxu0 0
    %395 = vmatpush1.bf16.msra.mxu0 0
    %396 = vmatprep.subr.bf16.mxu0 0
    %397 = vmatpush1.bf16.msra.mxu0 0
    %398 = vmatprep.subr.bf16.mxu0 0
    %399 = vmatpush1.bf16.msra.mxu0 0
    %400 = vmatprep.subr.bf16.mxu0 0
    %401 = vmatpush1.bf16.msra.mxu0 0
    %402 = vmatprep.subr.bf16.mxu0 0
    %403 = vmatpush1.bf16.msra.mxu0 0
    %404 = vmatprep.subr.bf16.mxu0 0
    %405 = vmatpush1.bf16.msra.mxu0 0
    %406 = vmatprep.subr.bf16.mxu0 0
    %407 = vmatpush1.bf16.msra.mxu0 %v388
    %408 = vmatprep.subr.bf16.mxu0 0
    %409 = vmatpush1.bf16.msra.mxu0 %v387
    %410 = vmatprep.subr.bf16.mxu0 0
    %411 = vmatpush2.bf16.msra.mxu0 0
    %412 = vmatprep.subr.bf16.mxu0 0
    %413 = vmatpush2.bf16.msra.mxu0 0
    %414 = vmatprep.subr.bf16.mxu0 0
    %415 = vmatpush2.bf16.msra.mxu0 0
    %416 = vmatprep.subr.bf16.mxu0 0
    %417 = vmatpush2.bf16.msra.mxu0 0
    %418 = vmatprep.subr.bf16.mxu0 0
    %419 = vmatpush2.bf16.msra.mxu0 0
    %420 = vmatprep.subr.bf16.mxu0 0
    %421 = vmatpush2.bf16.msra.mxu0 0
    %422 = vmatprep.subr.bf16.mxu0 0
    %423 = vmatpush2.bf16.msra.mxu0 0
    %424 = vmatprep.subr.bf16.mxu0 0
    %425 = vmatpush2.bf16.msra.mxu0 0
    %426 = vmatprep.mubr.bf16.mxu0 0
    %427 = vmatmul.mubr.bf16.gmra.mxu0 %v392
    %v428 = vpop.f32.mrf.mxu0
    %v429 = vadd.f32 0.0, %v428
    %v430 = vpop.f32.mrf.mxu0
    %v431 = vpop.f32.mrf.mxu0
    %v432 = vpop.f32.mrf.mxu0
    %433 = vdwg.mxu0
    %v434 = vadd.f32 %v299, %v429
    %v435 = vld [vmem:[%s2 + $0x30] sm:$0xf]
    %v436 = vld [vmem:[%s2 + $0x34] sm:$0xf]
    %v437 = vld [vmem:[%s2 + $0x38] sm:$0xf]
    %v438 = vld [vmem:[%s2 + $0x3c] sm:$0xf]
    %439 = vmatprep.subr.bf16.mxu0 0
    %440 = vmatpush1.bf16.msra.mxu0 0
    %441 = vmatprep.subr.bf16.mxu0 0
    %442 = vmatpush1.bf16.msra.mxu0 0
    %443 = vmatprep.subr.bf16.mxu0 0
    %444 = vmatpush1.bf16.msra.mxu0 0
    %445 = vmatprep.subr.bf16.mxu0 0
    %446 = vmatpush1.bf16.msra.mxu0 0
    %447 = vmatprep.subr.bf16.mxu0 0
    %448 = vmatpush1.bf16.msra.mxu0 0
    %449 = vmatprep.subr.bf16.mxu0 0
    %450 = vmatpush1.bf16.msra.mxu0 0
    %451 = vmatprep.subr.bf16.mxu0 0
    %452 = vmatpush1.bf16.msra.mxu0 %v41
    %453 = vmatprep.subr.bf16.mxu0 0
    %454 = vmatpush1.bf16.msra.mxu0 %v40
    %455 = vmatprep.subr.bf16.mxu0 0
    %456 = vmatpush2.bf16.msra.mxu0 0
    %457 = vmatprep.subr.bf16.mxu0 0
    %458 = vmatpush2.bf16.msra.mxu0 0
    %459 = vmatprep.subr.bf16.mxu0 0
    %460 = vmatpush2.bf16.msra.mxu0 0
    %461 = vmatprep.subr.bf16.mxu0 0
    %462 = vmatpush2.bf16.msra.mxu0 0
    %463 = vmatprep.subr.bf16.mxu0 0
    %464 = vmatpush2.bf16.msra.mxu0 0
    %465 = vmatprep.subr.bf16.mxu0 0
    %466 = vmatpush2.bf16.msra.mxu0 0
    %467 = vmatprep.subr.bf16.mxu0 0
    %468 = vmatpush2.bf16.msra.mxu0 0
    %469 = vmatprep.subr.bf16.mxu0 0
    %470 = vmatpush2.bf16.msra.mxu0 0
    %471 = vmatprep.mubr.bf16.mxu0 0
    %472 = vmatmul.mubr.bf16.gmra.mxu0 %v392
    %v473 = vpop.f32.mrf.mxu0
    %v474 = vadd.f32 0.0, %v473
    %v475 = vpop.f32.mrf.mxu0
    %v476 = vpop.f32.mrf.mxu0
    %v477 = vpop.f32.mrf.mxu0
    %478 = vdwg.mxu0
    %v479 = vld [vmem:[%s0 + $0x6] sm:$0x3]
    %v480 = vadd.f32 %v479, %v474
    %v481 = vxor.u32 %v480, 2147483648
    %v482 = vmul.f32 %v481, 1.442695
    %v483 = vpow.pop %v482
    %v484 = vadd.f32 %v483, 1.0
    %v485 = vrcp.pop %v484
    %v486 = vmul.f32 1.0, %v485
    %v487 = vtanh.pop %v480
    %v488 = vsel %vm27, %v487, %v486
    %v489 = vmul.f32 %v488, %v368
    %491 = vrot.lane.b32.xlu0 %v488, 64
    %v492 = vpop.permute.xlu0 %491
    %v494 = vmul.f32 %v488, %v492
    %496 = vrot.lane.b32.xlu0 %v494, 32
    %v497 = vpop.permute.xlu0 %496
    %v499 = vadd.f32 %v489, %v497
    %v500 = vtanh.pop %v499
    %502 = vrot.lane.b32.xlu0 %v500, 64
    %v503 = vpop.permute.xlu0 %502
    %v505 = vmul.f32 %v488, %v503
    %v506 = vpack.c.bf16 %v505, %v505
    %508 = vrot.lane.b32.xlu0 %v506, 32
    %v509 = vpop.permute.xlu0 %508
    %v514 = vunpack.c.l.b16 %v435
    %v515 = vunpack.c.l.b16 %v436
    %v516 = vunpack.c.l.b16 %v437
    %v517 = vunpack.c.l.b16 %v438
    %v518 = vpack.c.b16 %v515, %v514
    %v519 = vpack.c.b16 %v517, %v516
    %v523 = vsel %vm44, %v509, 0
    %525 = vmatprep.subr.bf16.mxu0 0
    %526 = vmatpush1.bf16.msra.mxu0 0
    %527 = vmatprep.subr.bf16.mxu0 0
    %528 = vmatpush1.bf16.msra.mxu0 0
    %529 = vmatprep.subr.bf16.mxu0 0
    %530 = vmatpush1.bf16.msra.mxu0 0
    %531 = vmatprep.subr.bf16.mxu0 0
    %532 = vmatpush1.bf16.msra.mxu0 0
    %533 = vmatprep.subr.bf16.mxu0 0
    %534 = vmatpush1.bf16.msra.mxu0 0
    %535 = vmatprep.subr.bf16.mxu0 0
    %536 = vmatpush1.bf16.msra.mxu0 0
    %537 = vmatprep.subr.bf16.mxu0 0
    %538 = vmatpush1.bf16.msra.mxu0 %v519
    %539 = vmatprep.subr.bf16.mxu0 0
    %540 = vmatpush1.bf16.msra.mxu0 %v518
    %541 = vmatprep.subr.bf16.mxu0 0
    %542 = vmatpush2.bf16.msra.mxu0 0
    %543 = vmatprep.subr.bf16.mxu0 0
    %544 = vmatpush2.bf16.msra.mxu0 0
    %545 = vmatprep.subr.bf16.mxu0 0
    %546 = vmatpush2.bf16.msra.mxu0 0
    %547 = vmatprep.subr.bf16.mxu0 0
    %548 = vmatpush2.bf16.msra.mxu0 0
    %549 = vmatprep.subr.bf16.mxu0 0
    %550 = vmatpush2.bf16.msra.mxu0 0
    %551 = vmatprep.subr.bf16.mxu0 0
    %552 = vmatpush2.bf16.msra.mxu0 0
    %553 = vmatprep.subr.bf16.mxu0 0
    %554 = vmatpush2.bf16.msra.mxu0 0
    %555 = vmatprep.subr.bf16.mxu0 0
    %556 = vmatpush2.bf16.msra.mxu0 0
    %557 = vmatprep.mubr.bf16.mxu0 0
    %558 = vmatmul.mubr.bf16.gmra.mxu0 %v523
    %v559 = vpop.f32.mrf.mxu0
    %v560 = vadd.f32 0.0, %v559
    %v561 = vpop.f32.mrf.mxu0
    %v562 = vpop.f32.mrf.mxu0
    %v563 = vpop.f32.mrf.mxu0
    %564 = vdwg.mxu0
    %v565 = vadd.f32 %v434, %v560
    %v566 = vld [vmem:[%s2 + $0x40] sm:$0xf]
    %v567 = vld [vmem:[%s2 + $0x44] sm:$0xf]
    %v568 = vld [vmem:[%s2 + $0x48] sm:$0xf]
    %v569 = vld [vmem:[%s2 + $0x4c] sm:$0xf]
    %570 = vmatprep.subr.bf16.mxu0 0
    %571 = vmatpush1.bf16.msra.mxu0 0
    %572 = vmatprep.subr.bf16.mxu0 0
    %573 = vmatpush1.bf16.msra.mxu0 0
    %574 = vmatprep.subr.bf16.mxu0 0
    %575 = vmatpush1.bf16.msra.mxu0 0
    %576 = vmatprep.subr.bf16.mxu0 0
    %577 = vmatpush1.bf16.msra.mxu0 0
    %578 = vmatprep.subr.bf16.mxu0 0
    %579 = vmatpush1.bf16.msra.mxu0 0
    %580 = vmatprep.subr.bf16.mxu0 0
    %581 = vmatpush1.bf16.msra.mxu0 0
    %582 = vmatprep.subr.bf16.mxu0 0
    %583 = vmatpush1.bf16.msra.mxu0 %v41
    %584 = vmatprep.subr.bf16.mxu0 0
    %585 = vmatpush1.bf16.msra.mxu0 %v40
    %586 = vmatprep.subr.bf16.mxu0 0
    %587 = vmatpush2.bf16.msra.mxu0 0
    %588 = vmatprep.subr.bf16.mxu0 0
    %589 = vmatpush2.bf16.msra.mxu0 0
    %590 = vmatprep.subr.bf16.mxu0 0
    %591 = vmatpush2.bf16.msra.mxu0 0
    %592 = vmatprep.subr.bf16.mxu0 0
    %593 = vmatpush2.bf16.msra.mxu0 0
    %594 = vmatprep.subr.bf16.mxu0 0
    %595 = vmatpush2.bf16.msra.mxu0 0
    %596 = vmatprep.subr.bf16.mxu0 0
    %597 = vmatpush2.bf16.msra.mxu0 0
    %598 = vmatprep.subr.bf16.mxu0 0
    %599 = vmatpush2.bf16.msra.mxu0 0
    %600 = vmatprep.subr.bf16.mxu0 0
    %601 = vmatpush2.bf16.msra.mxu0 0
    %602 = vmatprep.mubr.bf16.mxu0 0
    %603 = vmatmul.mubr.bf16.gmra.mxu0 %v523
    %v604 = vpop.f32.mrf.mxu0
    %v605 = vadd.f32 0.0, %v604
    %v606 = vpop.f32.mrf.mxu0
    %v607 = vpop.f32.mrf.mxu0
    %v608 = vpop.f32.mrf.mxu0
    %609 = vdwg.mxu0
    %v610 = vld [vmem:[%s0 + $0x8] sm:$0x3]
    %v611 = vadd.f32 %v610, %v605
    %v612 = vxor.u32 %v611, 2147483648
    %v613 = vmul.f32 %v612, 1.442695
    %v614 = vpow.pop %v613
    %v615 = vadd.f32 %v614, 1.0
    %v616 = vrcp.pop %v615
    %v617 = vmul.f32 1.0, %v616
    %v618 = vtanh.pop %v611
    %v619 = vsel %vm27, %v618, %v617
    %v620 = vmul.f32 %v619, %v499
    %622 = vrot.lane.b32.xlu0 %v619, 64
    %v623 = vpop.permute.xlu0 %622
    %v625 = vmul.f32 %v619, %v623
    %627 = vrot.lane.b32.xlu0 %v625, 32
    %v628 = vpop.permute.xlu0 %627
    %v630 = vadd.f32 %v620, %v628
    %v631 = vtanh.pop %v630
    %633 = vrot.lane.b32.xlu0 %v631, 64
    %v634 = vpop.permute.xlu0 %633
    %v636 = vmul.f32 %v619, %v634
    %v637 = vpack.c.bf16 %v636, %v636
    %639 = vrot.lane.b32.xlu0 %v637, 32
    %v640 = vpop.permute.xlu0 %639
    %v645 = vunpack.c.l.b16 %v566
    %v646 = vunpack.c.l.b16 %v567
    %v647 = vunpack.c.l.b16 %v568
    %v648 = vunpack.c.l.b16 %v569
    %v649 = vpack.c.b16 %v646, %v645
    %v650 = vpack.c.b16 %v648, %v647
    %v654 = vsel %vm44, %v640, 0
    %656 = vmatprep.subr.bf16.mxu0 0
    %657 = vmatpush1.bf16.msra.mxu0 0
    %658 = vmatprep.subr.bf16.mxu0 0
    %659 = vmatpush1.bf16.msra.mxu0 0
    %660 = vmatprep.subr.bf16.mxu0 0
    %661 = vmatpush1.bf16.msra.mxu0 0
    %662 = vmatprep.subr.bf16.mxu0 0
    %663 = vmatpush1.bf16.msra.mxu0 0
    %664 = vmatprep.subr.bf16.mxu0 0
    %665 = vmatpush1.bf16.msra.mxu0 0
    %666 = vmatprep.subr.bf16.mxu0 0
    %667 = vmatpush1.bf16.msra.mxu0 0
    %668 = vmatprep.subr.bf16.mxu0 0
    %669 = vmatpush1.bf16.msra.mxu0 %v650
    %670 = vmatprep.subr.bf16.mxu0 0
    %671 = vmatpush1.bf16.msra.mxu0 %v649
    %672 = vmatprep.subr.bf16.mxu0 0
    %673 = vmatpush2.bf16.msra.mxu0 0
    %674 = vmatprep.subr.bf16.mxu0 0
    %675 = vmatpush2.bf16.msra.mxu0 0
    %676 = vmatprep.subr.bf16.mxu0 0
    %677 = vmatpush2.bf16.msra.mxu0 0
    %678 = vmatprep.subr.bf16.mxu0 0
    %679 = vmatpush2.bf16.msra.mxu0 0
    %680 = vmatprep.subr.bf16.mxu0 0
    %681 = vmatpush2.bf16.msra.mxu0 0
    %682 = vmatprep.subr.bf16.mxu0 0
    %683 = vmatpush2.bf16.msra.mxu0 0
    %684 = vmatprep.subr.bf16.mxu0 0
    %685 = vmatpush2.bf16.msra.mxu0 0
    %686 = vmatprep.subr.bf16.mxu0 0
    %687 = vmatpush2.bf16.msra.mxu0 0
    %688 = vmatprep.mubr.bf16.mxu0 0
    %689 = vmatmul.mubr.bf16.gmra.mxu0 %v654
    %v690 = vpop.f32.mrf.mxu0
    %v691 = vadd.f32 0.0, %v690
    %v692 = vpop.f32.mrf.mxu0
    %v693 = vpop.f32.mrf.mxu0
    %v694 = vpop.f32.mrf.mxu0
    %695 = vdwg.mxu0
    %v696 = vadd.f32 %v565, %v691
    %v697 = vld [vmem:[%s2 + $0x50] sm:$0xf]
    %v698 = vld [vmem:[%s2 + $0x54] sm:$0xf]
    %v699 = vld [vmem:[%s2 + $0x58] sm:$0xf]
    %v700 = vld [vmem:[%s2 + $0x5c] sm:$0xf]
    %701 = vmatprep.subr.bf16.mxu0 0
    %702 = vmatpush1.bf16.msra.mxu0 0
    %703 = vmatprep.subr.bf16.mxu0 0
    %704 = vmatpush1.bf16.msra.mxu0 0
    %705 = vmatprep.subr.bf16.mxu0 0
    %706 = vmatpush1.bf16.msra.mxu0 0
    %707 = vmatprep.subr.bf16.mxu0 0
    %708 = vmatpush1.bf16.msra.mxu0 0
    %709 = vmatprep.subr.bf16.mxu0 0
    %710 = vmatpush1.bf16.msra.mxu0 0
    %711 = vmatprep.subr.bf16.mxu0 0
    %712 = vmatpush1.bf16.msra.mxu0 0
    %713 = vmatprep.subr.bf16.mxu0 0
    %714 = vmatpush1.bf16.msra.mxu0 %v41
    %715 = vmatprep.subr.bf16.mxu0 0
    %716 = vmatpush1.bf16.msra.mxu0 %v40
    %717 = vmatprep.subr.bf16.mxu0 0
    %718 = vmatpush2.bf16.msra.mxu0 0
    %719 = vmatprep.subr.bf16.mxu0 0
    %720 = vmatpush2.bf16.msra.mxu0 0
    %721 = vmatprep.subr.bf16.mxu0 0
    %722 = vmatpush2.bf16.msra.mxu0 0
    %723 = vmatprep.subr.bf16.mxu0 0
    %724 = vmatpush2.bf16.msra.mxu0 0
    %725 = vmatprep.subr.bf16.mxu0 0
    %726 = vmatpush2.bf16.msra.mxu0 0
    %727 = vmatprep.subr.bf16.mxu0 0
    %728 = vmatpush2.bf16.msra.mxu0 0
    %729 = vmatprep.subr.bf16.mxu0 0
    %730 = vmatpush2.bf16.msra.mxu0 0
    %731 = vmatprep.subr.bf16.mxu0 0
    %732 = vmatpush2.bf16.msra.mxu0 0
    %733 = vmatprep.mubr.bf16.mxu0 0
    %734 = vmatmul.mubr.bf16.gmra.mxu0 %v654
    %v735 = vpop.f32.mrf.mxu0
    %v736 = vadd.f32 0.0, %v735
    %v737 = vpop.f32.mrf.mxu0
    %v738 = vpop.f32.mrf.mxu0
    %v739 = vpop.f32.mrf.mxu0
    %740 = vdwg.mxu0
    %v741 = vld [vmem:[%s0 + $0xa] sm:$0x3]
    %v742 = vadd.f32 %v741, %v736
    %v743 = vxor.u32 %v742, 2147483648
    %v744 = vmul.f32 %v743, 1.442695
    %v745 = vpow.pop %v744
    %v746 = vadd.f32 %v745, 1.0
    %v747 = vrcp.pop %v746
    %v748 = vmul.f32 1.0, %v747
    %v749 = vtanh.pop %v742
    %v750 = vsel %vm27, %v749, %v748
    %v751 = vmul.f32 %v750, %v630
    %753 = vrot.lane.b32.xlu0 %v750, 64
    %v754 = vpop.permute.xlu0 %753
    %v756 = vmul.f32 %v750, %v754
    %758 = vrot.lane.b32.xlu0 %v756, 32
    %v759 = vpop.permute.xlu0 %758
    %v761 = vadd.f32 %v751, %v759
    %v762 = vtanh.pop %v761
    %764 = vrot.lane.b32.xlu0 %v762, 64
    %v765 = vpop.permute.xlu0 %764
    %v767 = vmul.f32 %v750, %v765
    %v768 = vpack.c.bf16 %v767, %v767
    %770 = vrot.lane.b32.xlu0 %v768, 32
    %v771 = vpop.permute.xlu0 %770
    %v776 = vunpack.c.l.b16 %v697
    %v777 = vunpack.c.l.b16 %v698
    %v778 = vunpack.c.l.b16 %v699
    %v779 = vunpack.c.l.b16 %v700
    %v780 = vpack.c.b16 %v777, %v776
    %v781 = vpack.c.b16 %v779, %v778
    %v785 = vsel %vm44, %v771, 0
    %787 = vmatprep.subr.bf16.mxu0 0
    %788 = vmatpush1.bf16.msra.mxu0 0
    %789 = vmatprep.subr.bf16.mxu0 0
    %790 = vmatpush1.bf16.msra.mxu0 0
    %791 = vmatprep.subr.bf16.mxu0 0
    %792 = vmatpush1.bf16.msra.mxu0 0
    %793 = vmatprep.subr.bf16.mxu0 0
    %794 = vmatpush1.bf16.msra.mxu0 0
    %795 = vmatprep.subr.bf16.mxu0 0
    %796 = vmatpush1.bf16.msra.mxu0 0
    %797 = vmatprep.subr.bf16.mxu0 0
    %798 = vmatpush1.bf16.msra.mxu0 0
    %799 = vmatprep.subr.bf16.mxu0 0
    %800 = vmatpush1.bf16.msra.mxu0 %v781
    %801 = vmatprep.subr.bf16.mxu0 0
    %802 = vmatpush1.bf16.msra.mxu0 %v780
    %803 = vmatprep.subr.bf16.mxu0 0
    %804 = vmatpush2.bf16.msra.mxu0 0
    %805 = vmatprep.subr.bf16.mxu0 0
    %806 = vmatpush2.bf16.msra.mxu0 0
    %807 = vmatprep.subr.bf16.mxu0 0
    %808 = vmatpush2.bf16.msra.mxu0 0
    %809 = vmatprep.subr.bf16.mxu0 0
    %810 = vmatpush2.bf16.msra.mxu0 0
    %811 = vmatprep.subr.bf16.mxu0 0
    %812 = vmatpush2.bf16.msra.mxu0 0
    %813 = vmatprep.subr.bf16.mxu0 0
    %814 = vmatpush2.bf16.msra.mxu0 0
    %815 = vmatprep.subr.bf16.mxu0 0
    %816 = vmatpush2.bf16.msra.mxu0 0
    %817 = vmatprep.subr.bf16.mxu0 0
    %818 = vmatpush2.bf16.msra.mxu0 0
    %819 = vmatprep.mubr.bf16.mxu0 0
    %820 = vmatmul.mubr.bf16.gmra.mxu0 %v785
    %v821 = vpop.f32.mrf.mxu0
    %v822 = vadd.f32 0.0, %v821
    %v823 = vpop.f32.mrf.mxu0
    %v824 = vpop.f32.mrf.mxu0
    %v825 = vpop.f32.mrf.mxu0
    %826 = vdwg.mxu0
    %v827 = vadd.f32 %v696, %v822
    %v828 = vld [vmem:[%s3] sm:$0x1]
    %v830 = vlaneseq
    %v831 = vshrl.u32 %v830, 7
    %v832 = vsub.s32 0, %v831
    %v833 = vrot.slane %v828, %v832
    %v835 = vadd.f32 %v827, %v833
    %836 = vst [vmem:[#allocation2] sm:$0x3] %v835
    // Predicated region
    $region18: #{hier_rnn_forward.3} parent=1 // pred_check
      _
    $region19: #{hier_rnn_forward.3} parent=1 // pred_check_branch
      %838 = sbr.rel (0) target = $region21
    $region20: #{hier_rnn_forward.3} parent=1 // pred_region
      %s840 = ssub.s32 32, 32
      %841 = vsyncadd [#allocation3], %s840
      %s843 = sshll.u32 [#allocation2], 4
      %s844 = int_to_ptr.vmem [resolvable:$true] %s843
      %846 = dma.vmem_to_hbm [thread:$0]  %s844, 32, %s4, [#allocation3]
    $region21: #{hier_rnn_forward.3} parent=1 // pred_fallthru
      _
    // Predicated region
    $region22: #{hier_rnn_forward.3} parent=1 // pred_check
      _
    $region23: #{hier_rnn_forward.3} parent=1 // pred_check_branch
      %848 = sbr.rel (0) target = $region25
    $region24: #{hier_rnn_forward.3} parent=1 // pred_region
      %849 = dma.done [#allocation3], 32
    $region25: #{hier_rnn_forward.3} parent=1 // pred_fallthru
      _
    %850 = vsyncpa [#allocation3], 1

// kernel: hier_rnn_forward.2
$region0: #{hier_rnn_forward.2}
  #allocation0 [shape = 'u32[]', space=smem, size = 0x4, offset = 0x4, fixed_abs, tag = 'smem constant byte address 0x4 - core index']
  #allocation1 [shape = 'u32[144,128]{1,0:T(1,128)}', space=vmem, size = 0x12000, scoped, tag = 'internal scratch']
  %s0 = inlined_call_operand.vmem [shape: bf16[12,64], index: 0, kind: input, shape index: {}]
  %s1 = inlined_call_operand.vmem [shape: bf16[8,64], index: 1, kind: input, shape index: {}]
  %s2 = inlined_call_operand.vmem [shape: bf16[16,64], index: 2, kind: input, shape index: {}]
  %s3 = inlined_call_operand.vmem [shape: f32[1,64], index: 3, kind: input, shape index: {}]
  %s4 = inlined_call_operand.vmem [shape: bf16[128,128], index: 4, kind: input, shape index: {}]
  %s5 = inlined_call_operand.vmem [shape: f32[1,128], index: 5, kind: input, shape index: {}]
  %s6 = inlined_call_operand.vmem [shape: f32[12,128], index: 6, kind: output, shape index: {}]
  %s7 = sld [smem:[#allocation0]]
  $region57: #{hier_rnn_forward.2} parent=0
    _
  %s9 = ssub.s32 1, %s7
  %s10 = scalar_select 0, %s9, %s7
  loop: start=0, step=1, limit=4
  $region2: #{hier_rnn_forward.2} parent=0 // loop_pre_header
    _
  $region3: #{hier_rnn_forward.2} parent=0 // loop_header
    %s12 = sphi 0, %s16
    %p13 = scmp.ge.s32.totalorder %s12, 4
    %s22 = sphi 0, %s24
    %s25 = sphi 0, %s22
    %s26 = sphi 0, %s25
    %s42 = sphi 0, %s26
    %s46 = sphi 0, %s46
    %s48 = sphi 0, %s46
    %s49 = sphi 0, %s48
    %s63 = sphi 0, %s49
    %s67 = sphi 0, %s67
    %s69 = sphi 0, %s67
    %s70 = sphi 0, %s69
    %s84 = sphi 0, %s70
    %s88 = sphi 0, %s88
    %s90 = sphi 0, %s88
    %s91 = sphi 0, %s90
    %s105 = sphi 0, %s91
    %s109 = sphi 0, %s109
    %s111 = sphi 0, %s109
    %s112 = sphi 0, %s111
    %s126 = sphi 0, %s112
    %s130 = sphi 0, %s130
    %s132 = sphi 0, %s130
    %s133 = sphi 0, %s132
    %s147 = sphi 0, %s133
    %s153 = sphi 0, %s155
    %s156 = sphi 0, %s153
    %s157 = sphi 0, %s156
    %s173 = sphi 0, %s157
  $region4: #{hier_rnn_forward.2} parent=0 // loop_header_branch
    %15 = sbr.rel (%p13) target = $region8
  $region5: #{hier_rnn_forward.2} parent=0 // loop_body
    %s17 = ssub.s32 %s12, 1
    %s18 = ssub.s32 %s12, 2
    %s19 = sadd.s32 %s12, 1
    %s20 = ssub.s32 %s12, %s19
    %p21 = scmp.eq.s32.totalorder %s20, 0
    %s23 = sadd.s32 %s22, 1
    %s24 = scalar_select %p21, %s22, %s23
    %p27 = pneg %p21
    %p28 = scmp.eq.s32.totalorder %s12, 1
    %p29 = por %p27, %p28
    %p30 = scmp.ne.s32.totalorder %s22, %s25
    %p31 = scmp.eq.s32.totalorder %s12, 0
    %p32 = por %p30, %p31
    %p33 = scmp.ne.s32.totalorder %s22, %s25
    %p34 = scmp.eq.s32.totalorder %s17, 1
    %p35 = por %p33, %p34
    %p36 = scmp.ne.s32.totalorder %s25, %s26
    %p37 = scmp.eq.s32.totalorder %s17, 0
    %p38 = por %p36, %p37
    %p39 = scmp.ne.s32.totalorder %s25, %s26
    %p40 = scmp.eq.s32.totalorder %s18, 1
    %p41 = por %p39, %p40
    %p43 = scmp.ne.s32.totalorder %s26, %s42
    %p44 = scmp.eq.s32.totalorder %s18, 0
    %p45 = por %p43, %p44
    %s47 = sadd.s32 %s46, 1
    %p50 = scmp.eq.s32.totalorder %s12, 1
    %p51 = scmp.ne.s32.totalorder %s46, %s48
    %p52 = scmp.eq.s32.totalorder %s12, 0
    %p53 = por %p51, %p52
    %p54 = scmp.ne.s32.totalorder %s46, %s48
    %p55 = scmp.eq.s32.totalorder %s17, 1
    %p56 = por %p54, %p55
    %p57 = scmp.ne.s32.totalorder %s48, %s49
    %p58 = scmp.eq.s32.totalorder %s17, 0
    %p59 = por %p57, %p58
    %p60 = scmp.ne.s32.totalorder %s48, %s49
    %p61 = scmp.eq.s32.totalorder %s18, 1
    %p62 = por %p60, %p61
    %p64 = scmp.ne.s32.totalorder %s49, %s63
    %p65 = scmp.eq.s32.totalorder %s18, 0
    %p66 = por %p64, %p65
    %s68 = sadd.s32 %s67, 1
    %p71 = scmp.eq.s32.totalorder %s12, 1
    %p72 = scmp.ne.s32.totalorder %s67, %s69
    %p73 = scmp.eq.s32.totalorder %s12, 0
    %p74 = por %p72, %p73
    %p75 = scmp.ne.s32.totalorder %s67, %s69
    %p76 = scmp.eq.s32.totalorder %s17, 1
    %p77 = por %p75, %p76
    %p78 = scmp.ne.s32.totalorder %s69, %s70
    %p79 = scmp.eq.s32.totalorder %s17, 0
    %p80 = por %p78, %p79
    %p81 = scmp.ne.s32.totalorder %s69, %s70
    %p82 = scmp.eq.s32.totalorder %s18, 1
    %p83 = por %p81, %p82
    %p85 = scmp.ne.s32.totalorder %s70, %s84
    %p86 = scmp.eq.s32.totalorder %s18, 0
    %p87 = por %p85, %p86
    %s89 = sadd.s32 %s88, 1
    %p92 = scmp.eq.s32.totalorder %s12, 1
    %p93 = scmp.ne.s32.totalorder %s88, %s90
    %p94 = scmp.eq.s32.totalorder %s12, 0
    %p95 = por %p93, %p94
    %p96 = scmp.ne.s32.totalorder %s88, %s90
    %p97 = scmp.eq.s32.totalorder %s17, 1
    %p98 = por %p96, %p97
    %p99 = scmp.ne.s32.totalorder %s90, %s91
    %p100 = scmp.eq.s32.totalorder %s17, 0
    %p101 = por %p99, %p100
    %p102 = scmp.ne.s32.totalorder %s90, %s91
    %p103 = scmp.eq.s32.totalorder %s18, 1
    %p104 = por %p102, %p103
    %p106 = scmp.ne.s32.totalorder %s91, %s105
    %p107 = scmp.eq.s32.totalorder %s18, 0
    %p108 = por %p106, %p107
    %s110 = sadd.s32 %s109, 1
    %p113 = scmp.eq.s32.totalorder %s12, 1
    %p114 = scmp.ne.s32.totalorder %s109, %s111
    %p115 = scmp.eq.s32.totalorder %s12, 0
    %p116 = por %p114, %p115
    %p117 = scmp.ne.s32.totalorder %s109, %s111
    %p118 = scmp.eq.s32.totalorder %s17, 1
    %p119 = por %p117, %p118
    %p120 = scmp.ne.s32.totalorder %s111, %s112
    %p121 = scmp.eq.s32.totalorder %s17, 0
    %p122 = por %p120, %p121
    %p123 = scmp.ne.s32.totalorder %s111, %s112
    %p124 = scmp.eq.s32.totalorder %s18, 1
    %p125 = por %p123, %p124
    %p127 = scmp.ne.s32.totalorder %s112, %s126
    %p128 = scmp.eq.s32.totalorder %s18, 0
    %p129 = por %p127, %p128
    %s131 = sadd.s32 %s130, 1
    %p134 = scmp.eq.s32.totalorder %s12, 1
    %p135 = scmp.ne.s32.totalorder %s130, %s132
    %p136 = scmp.eq.s32.totalorder %s12, 0
    %p137 = por %p135, %p136
    %p138 = scmp.ne.s32.totalorder %s130, %s132
    %p139 = scmp.eq.s32.totalorder %s17, 1
    %p140 = por %p138, %p139
    %p141 = scmp.ne.s32.totalorder %s132, %s133
    %p142 = scmp.eq.s32.totalorder %s17, 0
    %p143 = por %p141, %p142
    %p144 = scmp.ne.s32.totalorder %s132, %s133
    %p145 = scmp.eq.s32.totalorder %s18, 1
    %p146 = por %p144, %p145
    %p148 = scmp.ne.s32.totalorder %s133, %s147
    %p149 = scmp.eq.s32.totalorder %s18, 0
    %p150 = por %p148, %p149
    %s151 = ssub.s32 %s12, %s19
    %p152 = scmp.eq.s32.totalorder %s151, 0
    %s154 = sadd.s32 %s153, 1
    %s155 = scalar_select %p152, %s153, %s154
    %p158 = pneg %p152
    %p159 = scmp.eq.s32.totalorder %s12, 1
    %p160 = por %p158, %p159
    %p161 = scmp.ne.s32.totalorder %s153, %s156
    %p162 = scmp.eq.s32.totalorder %s12, 0
    %p163 = por %p161, %p162
    %p164 = scmp.ne.s32.totalorder %s153, %s156
    %p165 = scmp.eq.s32.totalorder %s17, 1
    %p166 = por %p164, %p165
    %p167 = scmp.ne.s32.totalorder %s156, %s157
    %p168 = scmp.eq.s32.totalorder %s17, 0
    %p169 = por %p167, %p168
    %p170 = scmp.ne.s32.totalorder %s156, %s157
    %p171 = scmp.eq.s32.totalorder %s18, 1
    %p172 = por %p170, %p171
    %p174 = scmp.ne.s32.totalorder %s157, %s173
    %p175 = scmp.eq.s32.totalorder %s18, 0
    %p176 = por %p174, %p175
    %p177 = scmp.le.s32.totalorder 1, %s12
    %p178 = scmp.lt.s32.totalorder %s12, 3
    %p179 = pnand %p177, %p178
    %p180 = pneg %p179
    // Predicated region
    $region9: #{hier_rnn_forward.2} parent=5 // pred_check
      _
    $region10: #{hier_rnn_forward.2} parent=5 // pred_check_branch
      %182 = sbr.rel (%p179) target = $region12
    $region11: #{hier_rnn_forward.2} parent=5 // pred_region
      %s183 = ssub.s32 %s12, 1
      // Predicated region
      $region13: #{hier_rnn_forward.2} parent=11 // pred_check
        %p184 = pneg %p59
      $region14: #{hier_rnn_forward.2} parent=11 // pred_check_branch
        %186 = sbr.rel (%p184) target = $region16
      $region15: #{hier_rnn_forward.2} parent=11 // pred_region
        _
      $region16: #{hier_rnn_forward.2} parent=11 // pred_fallthru
        _
      // Predicated region
      $region17: #{hier_rnn_forward.2} parent=11 // pred_check
        %p187 = pneg %p80
      $region18: #{hier_rnn_forward.2} parent=11 // pred_check_branch
        %189 = sbr.rel (%p187) target = $region20
      $region19: #{hier_rnn_forward.2} parent=11 // pred_region
        _
      $region20: #{hier_rnn_forward.2} parent=11 // pred_fallthru
        _
      // Predicated region
      $region21: #{hier_rnn_forward.2} parent=11 // pred_check
        %p190 = pneg %p101
      $region22: #{hier_rnn_forward.2} parent=11 // pred_check_branch
        %192 = sbr.rel (%p190) target = $region24
      $region23: #{hier_rnn_forward.2} parent=11 // pred_region
        _
      $region24: #{hier_rnn_forward.2} parent=11 // pred_fallthru
        _
      // Predicated region
      $region25: #{hier_rnn_forward.2} parent=11 // pred_check
        %p193 = pneg %p122
      $region26: #{hier_rnn_forward.2} parent=11 // pred_check_branch
        %195 = sbr.rel (%p193) target = $region28
      $region27: #{hier_rnn_forward.2} parent=11 // pred_region
        _
      $region28: #{hier_rnn_forward.2} parent=11 // pred_fallthru
        _
      // Predicated region
      $region29: #{hier_rnn_forward.2} parent=11 // pred_check
        %p196 = pneg %p143
      $region30: #{hier_rnn_forward.2} parent=11 // pred_check_branch
        %198 = sbr.rel (%p196) target = $region32
      $region31: #{hier_rnn_forward.2} parent=11 // pred_region
        _
      $region32: #{hier_rnn_forward.2} parent=11 // pred_fallthru
        _
    $region12: #{hier_rnn_forward.2} parent=5 // pred_fallthru
      _
    %p199 = scmp.lt.s32.totalorder %s12, 2
    // Predicated region
    $region33: #{hier_rnn_forward.2} parent=5 // pred_check
      %p200 = pneg %p199
    $region34: #{hier_rnn_forward.2} parent=5 // pred_check_branch
      %202 = sbr.rel (%p200) target = $region36
    $region35: #{hier_rnn_forward.2} parent=5 // pred_region
      // Predicated region
      $region37: #{hier_rnn_forward.2} parent=35 // pred_check
        %p203 = pneg %p32
      $region38: #{hier_rnn_forward.2} parent=35 // pred_check_branch
        %205 = sbr.rel (%p203) target = $region40
      $region39: #{hier_rnn_forward.2} parent=35 // pred_region
        %p206 = scmp.lt.s32.totalorder %s12, 1
        %s207 = scalar_select %p206, %s12, 1
        %s208 = smul.addr %s207, 4
        %s209 = scalar_lea.vmem %s0, %s208
      $region40: #{hier_rnn_forward.2} parent=35 // pred_fallthru
        _
    $region36: #{hier_rnn_forward.2} parent=5 // pred_fallthru
      _
    %p210 = scmp.le.s32.totalorder 1, %s12
    %p211 = scmp.lt.s32.totalorder %s12, 3
    %p212 = pnand %p210, %p211
    %p213 = pneg %p212
    // Predicated region
    $region41: #{hier_rnn_forward.2} parent=5 // pred_check
      _
    $region42: #{hier_rnn_forward.2} parent=5 // pred_check_branch
      %215 = sbr.rel (%p212) target = $region44
    $region43: #{hier_rnn_forward.2} parent=5 // pred_region
      %s216 = ssub.s32 %s12, 1
      %p217 = scmp.lt.s32.totalorder %s17, 1
      %s218 = scalar_select %p217, %s17, 1
      %s219 = smul.addr %s218, 4
      %s220 = scalar_lea.vmem %s0, %s219
      %p221 = pneg %p38
      %p222 = pneg %p35
      %p223 = pneg %p59
      %p224 = pneg %p56
      %p225 = pneg %p80
      %p226 = pneg %p77
      %p227 = pneg %p101
      %p228 = pneg %p98
      %p229 = pneg %p122
      %p230 = pneg %p119
      %p231 = pneg %p143
      %p232 = pneg %p140
      %p233 = pneg %p169
      %p234 = pneg %p166
      %p235 = scmp.lt.s32.totalorder %s17, 1
      %s236 = scalar_select %p235, %s17, 1
      %s237 = smul.addr %s236, 8
      %s238 = scalar_lea.vmem %s6, %s237
      %p239 = scmp.lt.s32.totalorder %s17, 1
      %s240 = scalar_select %p239, %s17, 1
      %s241 = smul.addr %s240, 4
      %s242 = scalar_lea.vmem %s0, %s241
      %p243 = scmp.lt.s32.totalorder %s17, 1
      %s244 = scalar_select %p243, %s17, 1
      %s245 = smul.addr %s244, 8
      %s246 = scalar_lea.vmem %s6, %s245
      %v248 = vld [vmem:[%s2] sm:$0xf]
      %v249 = vld [vmem:[%s2 + $0x4] sm:$0xf]
      %v250 = vld [vmem:[%s1] sm:$0xf]
      %v251 = vld [vmem:[%s3] sm:$0x1]
      %v252 = vlaneseq
      %v253 = vand.u32 %v252, 127
      %vm254 = vcmp.ge.s32.totalorder %v253, 32
      %vm255 = vcmp.lt.s32.totalorder %v253, 48
      %vm256 = vmand %vm254, %vm255
      %v257 = vld [vmem:[%s4] sm:$0xf]
      %v258 = vld [vmem:[%s4 + $0x4] sm:$0xf]
      %v261 = vunpack.c.l.b16 %v248
      %v262 = vunpack.c.l.b16 %v249
      %v263 = vpack.c.b16 %v262, %v261
      %vm265 = vcmask 130048
      %v267 = vsel %vm265, 0, 0
      %269 = vmatprep.subr.bf16.mxu0 0
      %270 = vmatpush1.bf16.msra.mxu0 0
      %271 = vmatprep.subr.bf16.mxu0 0
      %272 = vmatpush1.bf16.msra.mxu0 0
      %273 = vmatprep.subr.bf16.mxu0 0
      %274 = vmatpush1.bf16.msra.mxu0 0
      %275 = vmatprep.subr.bf16.mxu0 0
      %276 = vmatpush1.bf16.msra.mxu0 0
      %277 = vmatprep.subr.bf16.mxu0 0
      %278 = vmatpush1.bf16.msra.mxu0 0
      %279 = vmatprep.subr.bf16.mxu0 0
      %280 = vmatpush1.bf16.msra.mxu0 0
      %281 = vmatprep.subr.bf16.mxu0 0
      %282 = vmatpush1.bf16.msra.mxu0 0
      %283 = vmatprep.subr.bf16.mxu0 0
      %284 = vmatpush1.bf16.msra.mxu0 %v263
      %285 = vmatprep.subr.bf16.mxu0 0
      %286 = vmatpush2.bf16.msra.mxu0 0
      %287 = vmatprep.subr.bf16.mxu0 0
      %288 = vmatpush2.bf16.msra.mxu0 0
      %289 = vmatprep.subr.bf16.mxu0 0
      %290 = vmatpush2.bf16.msra.mxu0 0
      %291 = vmatprep.subr.bf16.mxu0 0
      %292 = vmatpush2.bf16.msra.mxu0 0
      %293 = vmatprep.subr.bf16.mxu0 0
      %294 = vmatpush2.bf16.msra.mxu0 0
      %295 = vmatprep.subr.bf16.mxu0 0
      %296 = vmatpush2.bf16.msra.mxu0 0
      %297 = vmatprep.subr.bf16.mxu0 0
      %298 = vmatpush2.bf16.msra.mxu0 0
      %299 = vmatprep.subr.bf16.mxu0 0
      %300 = vmatpush2.bf16.msra.mxu0 0
      %301 = vmatprep.mubr.bf16.mxu0 0
      %302 = vmatmul.mubr.bf16.gmra.mxu0 %v267
      %v303 = vpop.f32.mrf.mxu0
      %v304 = vadd.f32 0.0, %v303
      %v305 = vpop.f32.mrf.mxu0
      %v306 = vpop.f32.mrf.mxu0
      %v307 = vpop.f32.mrf.mxu0
      %308 = vdwg.mxu0
      %v309 = vld [vmem:[%s242] sm:$0xf]
      %v311 = vlaneseq
      %v312 = vshrl.u32 %v311, 7
      %v313 = vsub.s32 0, %v312
      %v314 = vrot.slane %v251, %v313
      %v316 = vadd.f32 %v314, %v304
      %vm317 = vcmask 64512
      %v319 = vsel %vm317, %v309, 0
      %vm321 = vcmask 1043456
      %v323 = vsel %vm321, %v250, 0
      %325 = vmatprep.subr.bf16.mxu0 0
      %326 = vmatpush1.bf16.msra.mxu0 0
      %327 = vmatprep.subr.bf16.mxu0 0
      %328 = vmatpush1.bf16.msra.mxu0 0
      %329 = vmatprep.subr.bf16.mxu0 0
      %330 = vmatpush1.bf16.msra.mxu0 0
      %331 = vmatprep.subr.bf16.mxu0 0
      %332 = vmatpush1.bf16.msra.mxu0 0
      %333 = vmatprep.subr.bf16.mxu0 0
      %334 = vmatpush1.bf16.msra.mxu0 0
      %335 = vmatprep.subr.bf16.mxu0 0
      %336 = vmatpush1.bf16.msra.mxu0 0
      %337 = vmatprep.subr.bf16.mxu0 0
      %338 = vmatpush1.bf16.msra.mxu0 0
      %339 = vmatprep.subr.bf16.mxu0 0
      %340 = vmatpush1.bf16.msra.mxu0 %v323
      %341 = vmatprep.subr.bf16.mxu0 0
      %342 = vmatpush2.bf16.msra.mxu0 0
      %343 = vmatprep.subr.bf16.mxu0 0
      %344 = vmatpush2.bf16.msra.mxu0 0
      %345 = vmatprep.subr.bf16.mxu0 0
      %346 = vmatpush2.bf16.msra.mxu0 0
      %347 = vmatprep.subr.bf16.mxu0 0
      %348 = vmatpush2.bf16.msra.mxu0 0
      %349 = vmatprep.subr.bf16.mxu0 0
      %350 = vmatpush2.bf16.msra.mxu0 0
      %351 = vmatprep.subr.bf16.mxu0 0
      %352 = vmatpush2.bf16.msra.mxu0 0
      %353 = vmatprep.subr.bf16.mxu0 0
      %354 = vmatpush2.bf16.msra.mxu0 0
      %355 = vmatprep.subr.bf16.mxu0 0
      %356 = vmatpush2.bf16.msra.mxu0 0
      %357 = vmatprep.mubr.bf16.mxu0 0
      %358 = vmatmul.mubr.bf16.gmra.mxu0 %v319
      %v359 = vpop.f32.mrf.mxu0
      %v360 = vadd.f32 0.0, %v359
      %v361 = vpop.f32.mrf.mxu0
      %v362 = vpop.f32.mrf.mxu0
      %v363 = vpop.f32.mrf.mxu0
      %364 = vdwg.mxu0
      %v365 = vadd.f32 %v316, %v360
      %v366 = vxor.u32 %v365, 2147483648
      %v367 = vmul.f32 %v366, 1.442695
      %v368 = vpow.pop %v367
      %v369 = vadd.f32 %v368, 1.0
      %v370 = vrcp.pop %v369
      %v371 = vmul.f32 1.0, %v370
      %v372 = vtanh.pop %v365
      %v373 = vsel %vm256, %v372, %v371
      %v374 = vmul.f32 %v373, 0.0
      %376 = vrot.lane.b32.xlu0 %v373, 96
      %v377 = vpop.permute.xlu0 %376
      %v379 = vmul.f32 %v373, %v377
      %381 = vrot.lane.b32.xlu0 %v379, 16
      %v382 = vpop.permute.xlu0 %381
      %v384 = vadd.f32 %v374, %v382
      %v385 = vtanh.pop %v384
      %387 = vrot.lane.b32.xlu0 %v385, 32
      %v388 = vpop.permute.xlu0 %387
      %v390 = vmul.f32 %v373, %v388
      %v391 = vpack.c.bf16 %v390, %v390
      %v392 = vld [vmem:[%s4 + $0x8] sm:$0xf]
      %v393 = vld [vmem:[%s4 + $0xc] sm:$0xf]
      %395 = vrot.lane.b32.xlu0 %v391, 80
      %v396 = vpop.permute.xlu0 %395
      %v398 = vsel %vm265, %v396, 0
      %400 = vmatprep.subr.bf16.mxu0 0
      %401 = vmatpush1.bf16.msra.mxu0 0
      %402 = vmatprep.subr.bf16.mxu0 0
      %403 = vmatpush1.bf16.msra.mxu0 0
      %404 = vmatprep.subr.bf16.mxu0 0
      %405 = vmatpush1.bf16.msra.mxu0 0
      %406 = vmatprep.subr.bf16.mxu0 0
      %407 = vmatpush1.bf16.msra.mxu0 0
      %408 = vmatprep.subr.bf16.mxu0 0
      %409 = vmatpush1.bf16.msra.mxu0 0
      %410 = vmatprep.subr.bf16.mxu0 0
      %411 = vmatpush1.bf16.msra.mxu0 0
      %412 = vmatprep.subr.bf16.mxu0 0
      %413 = vmatpush1.bf16.msra.mxu0 0
      %414 = vmatprep.subr.bf16.mxu0 0
      %415 = vmatpush1.bf16.msra.mxu0 %v263
      %416 = vmatprep.subr.bf16.mxu0 0
      %417 = vmatpush2.bf16.msra.mxu0 0
      %418 = vmatprep.subr.bf16.mxu0 0
      %419 = vmatpush2.bf16.msra.mxu0 0
      %420 = vmatprep.subr.bf16.mxu0 0
      %421 = vmatpush2.bf16.msra.mxu0 0
      %422 = vmatprep.subr.bf16.mxu0 0
      %423 = vmatpush2.bf16.msra.mxu0 0
      %424 = vmatprep.subr.bf16.mxu0 0
      %425 = vmatpush2.bf16.msra.mxu0 0
      %426 = vmatprep.subr.bf16.mxu0 0
      %427 = vmatpush2.bf16.msra.mxu0 0
      %428 = vmatprep.subr.bf16.mxu0 0
      %429 = vmatpush2.bf16.msra.mxu0 0
      %430 = vmatprep.subr.bf16.mxu0 0
      %431 = vmatpush2.bf16.msra.mxu0 0
      %432 = vmatprep.mubr.bf16.mxu0 0
      %433 = vmatmul.mubr.bf16.gmra.mxu0 %v398
      %v434 = vpop.f32.mrf.mxu0
      %v435 = vadd.f32 0.0, %v434
      %v436 = vpop.f32.mrf.mxu0
      %v437 = vpop.f32.mrf.mxu0
      %v438 = vpop.f32.mrf.mxu0
      %439 = vdwg.mxu0
      %v440 = vadd.f32 %v314, %v435
      %v442 = vunpack.c.l.b16 %v309
      %v443 = vpack.c.b16 %v442, %v442
      %444 = vrot.lane.b32.xlu0 %v443, 120
      %v445 = vpop.permute.xlu0 %444
      %v447 = vsel %vm317, %v445, 0
      %449 = vmatprep.subr.bf16.mxu0 0
      %450 = vmatpush1.bf16.msra.mxu0 0
      %451 = vmatprep.subr.bf16.mxu0 0
      %452 = vmatpush1.bf16.msra.mxu0 0
      %453 = vmatprep.subr.bf16.mxu0 0
      %454 = vmatpush1.bf16.msra.mxu0 0
      %455 = vmatprep.subr.bf16.mxu0 0
      %456 = vmatpush1.bf16.msra.mxu0 0
      %457 = vmatprep.subr.bf16.mxu0 0
      %458 = vmatpush1.bf16.msra.mxu0 0
      %459 = vmatprep.subr.bf16.mxu0 0
      %460 = vmatpush1.bf16.msra.mxu0 0
      %461 = vmatprep.subr.bf16.mxu0 0
      %462 = vmatpush1.bf16.msra.mxu0 0
      %463 = vmatprep.subr.bf16.mxu0 0
      %464 = vmatpush1.bf16.msra.mxu0 %v323
      %465 = vmatprep.subr.bf16.mxu0 0
      %466 = vmatpush2.bf16.msra.mxu0 0
      %467 = vmatprep.subr.bf16.mxu0 0
      %468 = vmatpush2.bf16.msra.mxu0 0
      %469 = vmatprep.subr.bf16.mxu0 0
      %470 = vmatpush2.bf16.msra.mxu0 0
      %471 = vmatprep.subr.bf16.mxu0 0
      %472 = vmatpush2.bf16.msra.mxu0 0
      %473 = vmatprep.subr.bf16.mxu0 0
      %474 = vmatpush2.bf16.msra.mxu0 0
      %475 = vmatprep.subr.bf16.mxu0 0
      %476 = vmatpush2.bf16.msra.mxu0 0
      %477 = vmatprep.subr.bf16.mxu0 0
      %478 = vmatpush2.bf16.msra.mxu0 0
      %479 = vmatprep.subr.bf16.mxu0 0
      %480 = vmatpush2.bf16.msra.mxu0 0
      %481 = vmatprep.mubr.bf16.mxu0 0
      %482 = vmatmul.mubr.bf16.gmra.mxu0 %v447
      %v483 = vpop.f32.mrf.mxu0
      %v484 = vadd.f32 0.0, %v483
      %v485 = vpop.f32.mrf.mxu0
      %v486 = vpop.f32.mrf.mxu0
      %v487 = vpop.f32.mrf.mxu0
      %488 = vdwg.mxu0
      %v489 = vadd.f32 %v440, %v484
      %v490 = vxor.u32 %v489, 2147483648
      %v491 = vmul.f32 %v490, 1.442695
      %v492 = vpow.pop %v491
      %v493 = vadd.f32 %v492, 1.0
      %v494 = vrcp.pop %v493
      %v495 = vmul.f32 1.0, %v494
      %v496 = vtanh.pop %v489
      %v497 = vsel %vm256, %v496, %v495
      %v498 = vmul.f32 %v497, %v384
      %500 = vrot.lane.b32.xlu0 %v497, 96
      %v501 = vpop.permute.xlu0 %500
      %v503 = vmul.f32 %v497, %v501
      %505 = vrot.lane.b32.xlu0 %v503, 16
      %v506 = vpop.permute.xlu0 %505
      %v508 = vadd.f32 %v498, %v506
      %v509 = vtanh.pop %v508
      %511 = vrot.lane.b32.xlu0 %v509, 32
      %v512 = vpop.permute.xlu0 %511
      %v514 = vmul.f32 %v497, %v512
      %v515 = vpack.c.bf16 %v514, %v514
      %517 = vrot.lane.b32.xlu0 %v515, 80
      %v518 = vpop.permute.xlu0 %517
      %v521 = vunpack.c.l.b16 %v392
      %v522 = vunpack.c.l.b16 %v393
      %v523 = vpack.c.b16 %v522, %v521
      %v526 = vsel %vm265, %v518, 0
      %528 = vmatprep.subr.bf16.mxu0 0
      %529 = vmatpush1.bf16.msra.mxu0 0
      %530 = vmatprep.subr.bf16.mxu0 0
      %531 = vmatpush1.bf16.msra.mxu0 0
      %532 = vmatprep.subr.bf16.mxu0 0
      %533 = vmatpush1.bf16.msra.mxu0 0
      %534 = vmatprep.subr.bf16.mxu0 0
      %535 = vmatpush1.bf16.msra.mxu0 0
      %536 = vmatprep.subr.bf16.mxu0 0
      %537 = vmatpush1.bf16.msra.mxu0 0
      %538 = vmatprep.subr.bf16.mxu0 0
      %539 = vmatpush1.bf16.msra.mxu0 0
      %540 = vmatprep.subr.bf16.mxu0 0
      %541 = vmatpush1.bf16.msra.mxu0 0
      %542 = vmatprep.subr.bf16.mxu0 0
      %543 = vmatpush1.bf16.msra.mxu0 %v523
      %544 = vmatprep.subr.bf16.mxu0 0
      %545 = vmatpush2.bf16.msra.mxu0 0
      %546 = vmatprep.subr.bf16.mxu0 0
      %547 = vmatpush2.bf16.msra.mxu0 0
      %548 = vmatprep.subr.bf16.mxu0 0
      %549 = vmatpush2.bf16.msra.mxu0 0
      %550 = vmatprep.subr.bf16.mxu0 0
      %551 = vmatpush2.bf16.msra.mxu0 0
      %552 = vmatprep.subr.bf16.mxu0 0
      %553 = vmatpush2.bf16.msra.mxu0 0
      %554 = vmatprep.subr.bf16.mxu0 0
      %555 = vmatpush2.bf16.msra.mxu0 0
      %556 = vmatprep.subr.bf16.mxu0 0
      %557 = vmatpush2.bf16.msra.mxu0 0
      %558 = vmatprep.subr.bf16.mxu0 0
      %559 = vmatpush2.bf16.msra.mxu0 0
      %560 = vmatprep.mubr.bf16.mxu0 0
      %561 = vmatmul.mubr.bf16.gmra.mxu0 %v526
      %v562 = vpop.f32.mrf.mxu0
      %v563 = vadd.f32 0.0, %v562
      %v564 = vpop.f32.mrf.mxu0
      %v565 = vpop.f32.mrf.mxu0
      %v566 = vpop.f32.mrf.mxu0
      %567 = vdwg.mxu0
      %v570 = vunpack.c.l.b16 %v257
      %v571 = vunpack.c.l.b16 %v258
      %v572 = vpack.c.b16 %v571, %v570
      %574 = vmatprep.subr.bf16.mxu0 0
      %575 = vmatpush1.bf16.msra.mxu0 0
      %576 = vmatprep.subr.bf16.mxu0 0
      %577 = vmatpush1.bf16.msra.mxu0 0
      %578 = vmatprep.subr.bf16.mxu0 0
      %579 = vmatpush1.bf16.msra.mxu0 0
      %580 = vmatprep.subr.bf16.mxu0 0
      %581 = vmatpush1.bf16.msra.mxu0 0
      %582 = vmatprep.subr.bf16.mxu0 0
      %583 = vmatpush1.bf16.msra.mxu0 0
      %584 = vmatprep.subr.bf16.mxu0 0
      %585 = vmatpush1.bf16.msra.mxu0 0
      %586 = vmatprep.subr.bf16.mxu0 0
      %587 = vmatpush1.bf16.msra.mxu0 0
      %588 = vmatprep.subr.bf16.mxu0 0
      %589 = vmatpush1.bf16.msra.mxu0 %v572
      %590 = vmatprep.subr.bf16.mxu0 0
      %591 = vmatpush2.bf16.msra.mxu0 0
      %592 = vmatprep.subr.bf16.mxu0 0
      %593 = vmatpush2.bf16.msra.mxu0 0
      %594 = vmatprep.subr.bf16.mxu0 0
      %595 = vmatpush2.bf16.msra.mxu0 0
      %596 = vmatprep.subr.bf16.mxu0 0
      %597 = vmatpush2.bf16.msra.mxu0 0
      %598 = vmatprep.subr.bf16.mxu0 0
      %599 = vmatpush2.bf16.msra.mxu0 0
      %600 = vmatprep.subr.bf16.mxu0 0
      %601 = vmatpush2.bf16.msra.mxu0 0
      %602 = vmatprep.subr.bf16.mxu0 0
      %603 = vmatpush2.bf16.msra.mxu0 0
      %604 = vmatprep.subr.bf16.mxu0 0
      %605 = vmatpush2.bf16.msra.mxu0 0
      %606 = vmatprep.mubr.bf16.mxu0 0
      %607 = vmatmul.mubr.bf16.gmra.mxu0 %v398
      %v608 = vpop.f32.mrf.mxu0
      %v609 = vadd.f32 %v563, %v608
      %v610 = vpop.f32.mrf.mxu0
      %v611 = vpop.f32.mrf.mxu0
      %v612 = vpop.f32.mrf.mxu0
      %613 = vdwg.mxu0
      %v614 = vld [vmem:[%s4 + $0x10] sm:$0xf]
      %v615 = vld [vmem:[%s4 + $0x14] sm:$0xf]
      %616 = vmatprep.subr.bf16.mxu0 0
      %617 = vmatpush1.bf16.msra.mxu0 0
      %618 = vmatprep.subr.bf16.mxu0 0
      %619 = vmatpush1.bf16.msra.mxu0 0
      %620 = vmatprep.subr.bf16.mxu0 0
      %621 = vmatpush1.bf16.msra.mxu0 0
      %622 = vmatprep.subr.bf16.mxu0 0
      %623 = vmatpush1.bf16.msra.mxu0 0
      %624 = vmatprep.subr.bf16.mxu0 0
      %625 = vmatpush1.bf16.msra.mxu0 0
      %626 = vmatprep.subr.bf16.mxu0 0
      %627 = vmatpush1.bf16.msra.mxu0 0
      %628 = vmatprep.subr.bf16.mxu0 0
      %629 = vmatpush1.bf16.msra.mxu0 0
      %630 = vmatprep.subr.bf16.mxu0 0
      %631 = vmatpush1.bf16.msra.mxu0 %v263
      %632 = vmatprep.subr.bf16.mxu0 0
      %633 = vmatpush2.bf16.msra.mxu0 0
      %634 = vmatprep.subr.bf16.mxu0 0
      %635 = vmatpush2.bf16.msra.mxu0 0
      %636 = vmatprep.subr.bf16.mxu0 0
      %637 = vmatpush2.bf16.msra.mxu0 0
      %638 = vmatprep.subr.bf16.mxu0 0
      %639 = vmatpush2.bf16.msra.mxu0 0
      %640 = vmatprep.subr.bf16.mxu0 0
      %641 = vmatpush2.bf16.msra.mxu0 0
      %642 = vmatprep.subr.bf16.mxu0 0
      %643 = vmatpush2.bf16.msra.mxu0 0
      %644 = vmatprep.subr.bf16.mxu0 0
      %645 = vmatpush2.bf16.msra.mxu0 0
      %646 = vmatprep.subr.bf16.mxu0 0
      %647 = vmatpush2.bf16.msra.mxu0 0
      %648 = vmatprep.mubr.bf16.mxu0 0
      %649 = vmatmul.mubr.bf16.gmra.mxu0 %v526
      %v650 = vpop.f32.mrf.mxu0
      %v651 = vadd.f32 0.0, %v650
      %v652 = vpop.f32.mrf.mxu0
      %v653 = vpop.f32.mrf.mxu0
      %v654 = vpop.f32.mrf.mxu0
      %655 = vdwg.mxu0
      %v656 = vadd.f32 %v314, %v651
      %657 = vrot.lane.b32.xlu0 %v443, 112
      %v658 = vpop.permute.xlu0 %657
      %v660 = vsel %vm317, %v658, 0
      %662 = vmatprep.subr.bf16.mxu0 0
      %663 = vmatpush1.bf16.msra.mxu0 0
      %664 = vmatprep.subr.bf16.mxu0 0
      %665 = vmatpush1.bf16.msra.mxu0 0
      %666 = vmatprep.subr.bf16.mxu0 0
      %667 = vmatpush1.bf16.msra.mxu0 0
      %668 = vmatprep.subr.bf16.mxu0 0
      %669 = vmatpush1.bf16.msra.mxu0 0
      %670 = vmatprep.subr.bf16.mxu0 0
      %671 = vmatpush1.bf16.msra.mxu0 0
      %672 = vmatprep.subr.bf16.mxu0 0
      %673 = vmatpush1.bf16.msra.mxu0 0
      %674 = vmatprep.subr.bf16.mxu0 0
      %675 = vmatpush1.bf16.msra.mxu0 0
      %676 = vmatprep.subr.bf16.mxu0 0
      %677 = vmatpush1.bf16.msra.mxu0 %v323
      %678 = vmatprep.subr.bf16.mxu0 0
      %679 = vmatpush2.bf16.msra.mxu0 0
      %680 = vmatprep.subr.bf16.mxu0 0
      %681 = vmatpush2.bf16.msra.mxu0 0
      %682 = vmatprep.subr.bf16.mxu0 0
      %683 = vmatpush2.bf16.msra.mxu0 0
      %684 = vmatprep.subr.bf16.mxu0 0
      %685 = vmatpush2.bf16.msra.mxu0 0
      %686 = vmatprep.subr.bf16.mxu0 0
      %687 = vmatpush2.bf16.msra.mxu0 0
      %688 = vmatprep.subr.bf16.mxu0 0
      %689 = vmatpush2.bf16.msra.mxu0 0
      %690 = vmatprep.subr.bf16.mxu0 0
      %691 = vmatpush2.bf16.msra.mxu0 0
      %692 = vmatprep.subr.bf16.mxu0 0
      %693 = vmatpush2.bf16.msra.mxu0 0
      %694 = vmatprep.mubr.bf16.mxu0 0
      %695 = vmatmul.mubr.bf16.gmra.mxu0 %v660
      %v696 = vpop.f32.mrf.mxu0
      %v697 = vadd.f32 0.0, %v696
      %v698 = vpop.f32.mrf.mxu0
      %v699 = vpop.f32.mrf.mxu0
      %v700 = vpop.f32.mrf.mxu0
      %701 = vdwg.mxu0
      %v702 = vadd.f32 %v656, %v697
      %v703 = vxor.u32 %v702, 2147483648
      %v704 = vmul.f32 %v703, 1.442695
      %v705 = vpow.pop %v704
      %v706 = vadd.f32 %v705, 1.0
      %v707 = vrcp.pop %v706
      %v708 = vmul.f32 1.0, %v707
      %v709 = vtanh.pop %v702
      %v710 = vsel %vm256, %v709, %v708
      %v711 = vmul.f32 %v710, %v508
      %713 = vrot.lane.b32.xlu0 %v710, 96
      %v714 = vpop.permute.xlu0 %713
      %v716 = vmul.f32 %v710, %v714
      %718 = vrot.lane.b32.xlu0 %v716, 16
      %v719 = vpop.permute.xlu0 %718
      %v721 = vadd.f32 %v711, %v719
      %v722 = vtanh.pop %v721
      %724 = vrot.lane.b32.xlu0 %v722, 32
      %v725 = vpop.permute.xlu0 %724
      %v727 = vmul.f32 %v710, %v725
      %v728 = vpack.c.bf16 %v727, %v727
      %730 = vrot.lane.b32.xlu0 %v728, 80
      %v731 = vpop.permute.xlu0 %730
      %v734 = vunpack.c.l.b16 %v614
      %v735 = vunpack.c.l.b16 %v615
      %v736 = vpack.c.b16 %v735, %v734
      %v739 = vsel %vm265, %v731, 0
      %741 = vmatprep.subr.bf16.mxu0 0
      %742 = vmatpush1.bf16.msra.mxu0 0
      %743 = vmatprep.subr.bf16.mxu0 0
      %744 = vmatpush1.bf16.msra.mxu0 0
      %745 = vmatprep.subr.bf16.mxu0 0
      %746 = vmatpush1.bf16.msra.mxu0 0
      %747 = vmatprep.subr.bf16.mxu0 0
      %748 = vmatpush1.bf16.msra.mxu0 0
      %749 = vmatprep.subr.bf16.mxu0 0
      %750 = vmatpush1.bf16.msra.mxu0 0
      %751 = vmatprep.subr.bf16.mxu0 0
      %752 = vmatpush1.bf16.msra.mxu0 0
      %753 = vmatprep.subr.bf16.mxu0 0
      %754 = vmatpush1.bf16.msra.mxu0 0
      %755 = vmatprep.subr.bf16.mxu0 0
      %756 = vmatpush1.bf16.msra.mxu0 %v736
      %757 = vmatprep.subr.bf16.mxu0 0
      %758 = vmatpush2.bf16.msra.mxu0 0
      %759 = vmatprep.subr.bf16.mxu0 0
      %760 = vmatpush2.bf16.msra.mxu0 0
      %761 = vmatprep.subr.bf16.mxu0 0
      %762 = vmatpush2.bf16.msra.mxu0 0
      %763 = vmatprep.subr.bf16.mxu0 0
      %764 = vmatpush2.bf16.msra.mxu0 0
      %765 = vmatprep.subr.bf16.mxu0 0
      %766 = vmatpush2.bf16.msra.mxu0 0
      %767 = vmatprep.subr.bf16.mxu0 0
      %768 = vmatpush2.bf16.msra.mxu0 0
      %769 = vmatprep.subr.bf16.mxu0 0
      %770 = vmatpush2.bf16.msra.mxu0 0
      %771 = vmatprep.subr.bf16.mxu0 0
      %772 = vmatpush2.bf16.msra.mxu0 0
      %773 = vmatprep.mubr.bf16.mxu0 0
      %774 = vmatmul.mubr.bf16.gmra.mxu0 %v739
      %v775 = vpop.f32.mrf.mxu0
      %v776 = vadd.f32 0.0, %v775
      %v777 = vpop.f32.mrf.mxu0
      %v778 = vpop.f32.mrf.mxu0
      %v779 = vpop.f32.mrf.mxu0
      %780 = vdwg.mxu0
      %v781 = vadd.f32 %v609, %v776
      %v782 = vld [vmem:[%s4 + $0x18] sm:$0xf]
      %v783 = vld [vmem:[%s4 + $0x1c] sm:$0xf]
      %784 = vmatprep.subr.bf16.mxu0 0
      %785 = vmatpush1.bf16.msra.mxu0 0
      %786 = vmatprep.subr.bf16.mxu0 0
      %787 = vmatpush1.bf16.msra.mxu0 0
      %788 = vmatprep.subr.bf16.mxu0 0
      %789 = vmatpush1.bf16.msra.mxu0 0
      %790 = vmatprep.subr.bf16.mxu0 0
      %791 = vmatpush1.bf16.msra.mxu0 0
      %792 = vmatprep.subr.bf16.mxu0 0
      %793 = vmatpush1.bf16.msra.mxu0 0
      %794 = vmatprep.subr.bf16.mxu0 0
      %795 = vmatpush1.bf16.msra.mxu0 0
      %796 = vmatprep.subr.bf16.mxu0 0
      %797 = vmatpush1.bf16.msra.mxu0 0
      %798 = vmatprep.subr.bf16.mxu0 0
      %799 = vmatpush1.bf16.msra.mxu0 %v263
      %800 = vmatprep.subr.bf16.mxu0 0
      %801 = vmatpush2.bf16.msra.mxu0 0
      %802 = vmatprep.subr.bf16.mxu0 0
      %803 = vmatpush2.bf16.msra.mxu0 0
      %804 = vmatprep.subr.bf16.mxu0 0
      %805 = vmatpush2.bf16.msra.mxu0 0
      %806 = vmatprep.subr.bf16.mxu0 0
      %807 = vmatpush2.bf16.msra.mxu0 0
      %808 = vmatprep.subr.bf16.mxu0 0
      %809 = vmatpush2.bf16.msra.mxu0 0
      %810 = vmatprep.subr.bf16.mxu0 0
      %811 = vmatpush2.bf16.msra.mxu0 0
      %812 = vmatprep.subr.bf16.mxu0 0
      %813 = vmatpush2.bf16.msra.mxu0 0
      %814 = vmatprep.subr.bf16.mxu0 0
      %815 = vmatpush2.bf16.msra.mxu0 0
      %816 = vmatprep.mubr.bf16.mxu0 0
      %817 = vmatmul.mubr.bf16.gmra.mxu0 %v739
      %v818 = vpop.f32.mrf.mxu0
      %v819 = vadd.f32 0.0, %v818
      %v820 = vpop.f32.mrf.mxu0
      %v821 = vpop.f32.mrf.mxu0
      %v822 = vpop.f32.mrf.mxu0
      %823 = vdwg.mxu0
      %v824 = vadd.f32 %v314, %v819
      %825 = vrot.lane.b32.xlu0 %v443, 104
      %v826 = vpop.permute.xlu0 %825
      %v828 = vsel %vm317, %v826, 0
      %830 = vmatprep.subr.bf16.mxu0 0
      %831 = vmatpush1.bf16.msra.mxu0 0
      %832 = vmatprep.subr.bf16.mxu0 0
      %833 = vmatpush1.bf16.msra.mxu0 0
      %834 = vmatprep.subr.bf16.mxu0 0
      %835 = vmatpush1.bf16.msra.mxu0 0
      %836 = vmatprep.subr.bf16.mxu0 0
      %837 = vmatpush1.bf16.msra.mxu0 0
      %838 = vmatprep.subr.bf16.mxu0 0
      %839 = vmatpush1.bf16.msra.mxu0 0
      %840 = vmatprep.subr.bf16.mxu0 0
      %841 = vmatpush1.bf16.msra.mxu0 0
      %842 = vmatprep.subr.bf16.mxu0 0
      %843 = vmatpush1.bf16.msra.mxu0 0
      %844 = vmatprep.subr.bf16.mxu0 0
      %845 = vmatpush1.bf16.msra.mxu0 %v323
      %846 = vmatprep.subr.bf16.mxu0 0
      %847 = vmatpush2.bf16.msra.mxu0 0
      %848 = vmatprep.subr.bf16.mxu0 0
      %849 = vmatpush2.bf16.msra.mxu0 0
      %850 = vmatprep.subr.bf16.mxu0 0
      %851 = vmatpush2.bf16.msra.mxu0 0
      %852 = vmatprep.subr.bf16.mxu0 0
      %853 = vmatpush2.bf16.msra.mxu0 0
      %854 = vmatprep.subr.bf16.mxu0 0
      %855 = vmatpush2.bf16.msra.mxu0 0
      %856 = vmatprep.subr.bf16.mxu0 0
      %857 = vmatpush2.bf16.msra.mxu0 0
      %858 = vmatprep.subr.bf16.mxu0 0
      %859 = vmatpush2.bf16.msra.mxu0 0
      %860 = vmatprep.subr.bf16.mxu0 0
      %861 = vmatpush2.bf16.msra.mxu0 0
      %862 = vmatprep.mubr.bf16.mxu0 0
      %863 = vmatmul.mubr.bf16.gmra.mxu0 %v828
      %v864 = vpop.f32.mrf.mxu0
      %v865 = vadd.f32 0.0, %v864
      %v866 = vpop.f32.mrf.mxu0
      %v867 = vpop.f32.mrf.mxu0
      %v868 = vpop.f32.mrf.mxu0
      %869 = vdwg.mxu0
      %v870 = vadd.f32 %v824, %v865
      %v871 = vxor.u32 %v870, 2147483648
      %v872 = vmul.f32 %v871, 1.442695
      %v873 = vpow.pop %v872
      %v874 = vadd.f32 %v873, 1.0
      %v875 = vrcp.pop %v874
      %v876 = vmul.f32 1.0, %v875
      %v877 = vtanh.pop %v870
      %v878 = vsel %vm256, %v877, %v876
      %v879 = vmul.f32 %v878, %v721
      %881 = vrot.lane.b32.xlu0 %v878, 96
      %v882 = vpop.permute.xlu0 %881
      %v884 = vmul.f32 %v878, %v882
      %886 = vrot.lane.b32.xlu0 %v884, 16
      %v887 = vpop.permute.xlu0 %886
      %v889 = vadd.f32 %v879, %v887
      %v890 = vtanh.pop %v889
      %892 = vrot.lane.b32.xlu0 %v890, 32
      %v893 = vpop.permute.xlu0 %892
      %v895 = vmul.f32 %v878, %v893
      %v896 = vpack.c.bf16 %v895, %v895
      %898 = vrot.lane.b32.xlu0 %v896, 80
      %v899 = vpop.permute.xlu0 %898
      %v902 = vunpack.c.l.b16 %v782
      %v903 = vunpack.c.l.b16 %v783
      %v904 = vpack.c.b16 %v903, %v902
      %v907 = vsel %vm265, %v899, 0
      %909 = vmatprep.subr.bf16.mxu0 0
      %910 = vmatpush1.bf16.msra.mxu0 0
      %911 = vmatprep.subr.bf16.mxu0 0
      %912 = vmatpush1.bf16.msra.mxu0 0
      %913 = vmatprep.subr.bf16.mxu0 0
      %914 = vmatpush1.bf16.msra.mxu0 0
      %915 = vmatprep.subr.bf16.mxu0 0
      %916 = vmatpush1.bf16.msra.mxu0 0
      %917 = vmatprep.subr.bf16.mxu0 0
      %918 = vmatpush1.bf16.msra.mxu0 0
      %919 = vmatprep.subr.bf16.mxu0 0
      %920 = vmatpush1.bf16.msra.mxu0 0
      %921 = vmatprep.subr.bf16.mxu0 0
      %922 = vmatpush1.bf16.msra.mxu0 0
      %923 = vmatprep.subr.bf16.mxu0 0
      %924 = vmatpush1.bf16.msra.mxu0 %v904
      %925 = vmatprep.subr.bf16.mxu0 0
      %926 = vmatpush2.bf16.msra.mxu0 0
      %927 = vmatprep.subr.bf16.mxu0 0
      %928 = vmatpush2.bf16.msra.mxu0 0
      %929 = vmatprep.subr.bf16.mxu0 0
      %930 = vmatpush2.bf16.msra.mxu0 0
      %931 = vmatprep.subr.bf16.mxu0 0
      %932 = vmatpush2.bf16.msra.mxu0 0
      %933 = vmatprep.subr.bf16.mxu0 0
      %934 = vmatpush2.bf16.msra.mxu0 0
      %935 = vmatprep.subr.bf16.mxu0 0
      %936 = vmatpush2.bf16.msra.mxu0 0
      %937 = vmatprep.subr.bf16.mxu0 0
      %938 = vmatpush2.bf16.msra.mxu0 0
      %939 = vmatprep.subr.bf16.mxu0 0
      %940 = vmatpush2.bf16.msra.mxu0 0
      %941 = vmatprep.mubr.bf16.mxu0 0
      %942 = vmatmul.mubr.bf16.gmra.mxu0 %v907
      %v943 = vpop.f32.mrf.mxu0
      %v944 = vadd.f32 0.0, %v943
      %v945 = vpop.f32.mrf.mxu0
      %v946 = vpop.f32.mrf.mxu0
      %v947 = vpop.f32.mrf.mxu0
      %948 = vdwg.mxu0
      %v949 = vadd.f32 %v781, %v944
      %v950 = vld [vmem:[%s4 + $0x20] sm:$0xf]
      %v951 = vld [vmem:[%s4 + $0x24] sm:$0xf]
      %952 = vmatprep.subr.bf16.mxu0 0
      %953 = vmatpush1.bf16.msra.mxu0 0
      %954 = vmatprep.subr.bf16.mxu0 0
      %955 = vmatpush1.bf16.msra.mxu0 0
      %956 = vmatprep.subr.bf16.mxu0 0
      %957 = vmatpush1.bf16.msra.mxu0 0
      %958 = vmatprep.subr.bf16.mxu0 0
      %959 = vmatpush1.bf16.msra.mxu0 0
      %960 = vmatprep.subr.bf16.mxu0 0
      %961 = vmatpush1.bf16.msra.mxu0 0
      %962 = vmatprep.subr.bf16.mxu0 0
      %963 = vmatpush1.bf16.msra.mxu0 0
      %964 = vmatprep.subr.bf16.mxu0 0
      %965 = vmatpush1.bf16.msra.mxu0 0
      %966 = vmatprep.subr.bf16.mxu0 0
      %967 = vmatpush1.bf16.msra.mxu0 %v263
      %968 = vmatprep.subr.bf16.mxu0 0
      %969 = vmatpush2.bf16.msra.mxu0 0
      %970 = vmatprep.subr.bf16.mxu0 0
      %971 = vmatpush2.bf16.msra.mxu0 0
      %972 = vmatprep.subr.bf16.mxu0 0
      %973 = vmatpush2.bf16.msra.mxu0 0
      %974 = vmatprep.subr.bf16.mxu0 0
      %975 = vmatpush2.bf16.msra.mxu0 0
      %976 = vmatprep.subr.bf16.mxu0 0
      %977 = vmatpush2.bf16.msra.mxu0 0
      %978 = vmatprep.subr.bf16.mxu0 0
      %979 = vmatpush2.bf16.msra.mxu0 0
      %980 = vmatprep.subr.bf16.mxu0 0
      %981 = vmatpush2.bf16.msra.mxu0 0
      %982 = vmatprep.subr.bf16.mxu0 0
      %983 = vmatpush2.bf16.msra.mxu0 0
      %984 = vmatprep.mubr.bf16.mxu0 0
      %985 = vmatmul.mubr.bf16.gmra.mxu0 %v907
      %v986 = vpop.f32.mrf.mxu0
      %v987 = vadd.f32 0.0, %v986
      %v988 = vpop.f32.mrf.mxu0
      %v989 = vpop.f32.mrf.mxu0
      %v990 = vpop.f32.mrf.mxu0
      %991 = vdwg.mxu0
      %v992 = vadd.f32 %v314, %v987
      %993 = vrot.lane.b32.xlu0 %v443, 96
      %v994 = vpop.permute.xlu0 %993
      %v996 = vsel %vm317, %v994, 0
      %998 = vmatprep.subr.bf16.mxu0 0
      %999 = vmatpush1.bf16.msra.mxu0 0
      %1000 = vmatprep.subr.bf16.mxu0 0
      %1001 = vmatpush1.bf16.msra.mxu0 0
      %1002 = vmatprep.subr.bf16.mxu0 0
      %1003 = vmatpush1.bf16.msra.mxu0 0
      %1004 = vmatprep.subr.bf16.mxu0 0
      %1005 = vmatpush1.bf16.msra.mxu0 0
      %1006 = vmatprep.subr.bf16.mxu0 0
      %1007 = vmatpush1.bf16.msra.mxu0 0
      %1008 = vmatprep.subr.bf16.mxu0 0
      %1009 = vmatpush1.bf16.msra.mxu0 0
      %1010 = vmatprep.subr.bf16.mxu0 0
      %1011 = vmatpush1.bf16.msra.mxu0 0
      %1012 = vmatprep.subr.bf16.mxu0 0
      %1013 = vmatpush1.bf16.msra.mxu0 %v323
      %1014 = vmatprep.subr.bf16.mxu0 0
      %1015 = vmatpush2.bf16.msra.mxu0 0
      %1016 = vmatprep.subr.bf16.mxu0 0
      %1017 = vmatpush2.bf16.msra.mxu0 0
      %1018 = vmatprep.subr.bf16.mxu0 0
      %1019 = vmatpush2.bf16.msra.mxu0 0
      %1020 = vmatprep.subr.bf16.mxu0 0
      %1021 = vmatpush2.bf16.msra.mxu0 0
      %1022 = vmatprep.subr.bf16.mxu0 0
      %1023 = vmatpush2.bf16.msra.mxu0 0
      %1024 = vmatprep.subr.bf16.mxu0 0
      %1025 = vmatpush2.bf16.msra.mxu0 0
      %1026 = vmatprep.subr.bf16.mxu0 0
      %1027 = vmatpush2.bf16.msra.mxu0 0
      %1028 = vmatprep.subr.bf16.mxu0 0
      %1029 = vmatpush2.bf16.msra.mxu0 0
      %1030 = vmatprep.mubr.bf16.mxu0 0
      %1031 = vmatmul.mubr.bf16.gmra.mxu0 %v996
      %v1032 = vpop.f32.mrf.mxu0
      %v1033 = vadd.f32 0.0, %v1032
      %v1034 = vpop.f32.mrf.mxu0
      %v1035 = vpop.f32.mrf.mxu0
      %v1036 = vpop.f32.mrf.mxu0
      %1037 = vdwg.mxu0
      %v1038 = vadd.f32 %v992, %v1033
      %v1039 = vxor.u32 %v1038, 2147483648
      %v1040 = vmul.f32 %v1039, 1.442695
      %v1041 = vpow.pop %v1040
      %v1042 = vadd.f32 %v1041, 1.0
      %v1043 = vrcp.pop %v1042
      %v1044 = vmul.f32 1.0, %v1043
      %v1045 = vtanh.pop %v1038
      %v1046 = vsel %vm256, %v1045, %v1044
      %v1047 = vmul.f32 %v1046, %v889
      %1049 = vrot.lane.b32.xlu0 %v1046, 96
      %v1050 = vpop.permute.xlu0 %1049
      %v1052 = vmul.f32 %v1046, %v1050
      %1054 = vrot.lane.b32.xlu0 %v1052, 16
      %v1055 = vpop.permute.xlu0 %1054
      %v1057 = vadd.f32 %v1047, %v1055
      %v1058 = vtanh.pop %v1057
      %1060 = vrot.lane.b32.xlu0 %v1058, 32
      %v1061 = vpop.permute.xlu0 %1060
      %v1063 = vmul.f32 %v1046, %v1061
      %v1064 = vpack.c.bf16 %v1063, %v1063
      %1066 = vrot.lane.b32.xlu0 %v1064, 80
      %v1067 = vpop.permute.xlu0 %1066
      %v1070 = vunpack.c.l.b16 %v950
      %v1071 = vunpack.c.l.b16 %v951
      %v1072 = vpack.c.b16 %v1071, %v1070
      %v1075 = vsel %vm265, %v1067, 0
      %1077 = vmatprep.subr.bf16.mxu0 0
      %1078 = vmatpush1.bf16.msra.mxu0 0
      %1079 = vmatprep.subr.bf16.mxu0 0
      %1080 = vmatpush1.bf16.msra.mxu0 0
      %1081 = vmatprep.subr.bf16.mxu0 0
      %1082 = vmatpush1.bf16.msra.mxu0 0
      %1083 = vmatprep.subr.bf16.mxu0 0
      %1084 = vmatpush1.bf16.msra.mxu0 0
      %1085 = vmatprep.subr.bf16.mxu0 0
      %1086 = vmatpush1.bf16.msra.mxu0 0
      %1087 = vmatprep.subr.bf16.mxu0 0
      %1088 = vmatpush1.bf16.msra.mxu0 0
      %1089 = vmatprep.subr.bf16.mxu0 0
      %1090 = vmatpush1.bf16.msra.mxu0 0
      %1091 = vmatprep.subr.bf16.mxu0 0
      %1092 = vmatpush1.bf16.msra.mxu0 %v1072
      %1093 = vmatprep.subr.bf16.mxu0 0
      %1094 = vmatpush2.bf16.msra.mxu0 0
      %1095 = vmatprep.subr.bf16.mxu0 0
      %1096 = vmatpush2.bf16.msra.mxu0 0
      %1097 = vmatprep.subr.bf16.mxu0 0
      %1098 = vmatpush2.bf16.msra.mxu0 0
      %1099 = vmatprep.subr.bf16.mxu0 0
      %1100 = vmatpush2.bf16.msra.mxu0 0
      %1101 = vmatprep.subr.bf16.mxu0 0
      %1102 = vmatpush2.bf16.msra.mxu0 0
      %1103 = vmatprep.subr.bf16.mxu0 0
      %1104 = vmatpush2.bf16.msra.mxu0 0
      %1105 = vmatprep.subr.bf16.mxu0 0
      %1106 = vmatpush2.bf16.msra.mxu0 0
      %1107 = vmatprep.subr.bf16.mxu0 0
      %1108 = vmatpush2.bf16.msra.mxu0 0
      %1109 = vmatprep.mubr.bf16.mxu0 0
      %1110 = vmatmul.mubr.bf16.gmra.mxu0 %v1075
      %v1111 = vpop.f32.mrf.mxu0
      %v1112 = vadd.f32 0.0, %v1111
      %v1113 = vpop.f32.mrf.mxu0
      %v1114 = vpop.f32.mrf.mxu0
      %v1115 = vpop.f32.mrf.mxu0
      %1116 = vdwg.mxu0
      %v1117 = vadd.f32 %v949, %v1112
      %v1118 = vld [vmem:[%s4 + $0x28] sm:$0xf]
      %v1119 = vld [vmem:[%s4 + $0x2c] sm:$0xf]
      %1120 = vmatprep.subr.bf16.mxu0 0
      %1121 = vmatpush1.bf16.msra.mxu0 0
      %1122 = vmatprep.subr.bf16.mxu0 0
      %1123 = vmatpush1.bf16.msra.mxu0 0
      %1124 = vmatprep.subr.bf16.mxu0 0
      %1125 = vmatpush1.bf16.msra.mxu0 0
      %1126 = vmatprep.subr.bf16.mxu0 0
      %1127 = vmatpush1.bf16.msra.mxu0 0
      %1128 = vmatprep.subr.bf16.mxu0 0
      %1129 = vmatpush1.bf16.msra.mxu0 0
      %1130 = vmatprep.subr.bf16.mxu0 0
      %1131 = vmatpush1.bf16.msra.mxu0 0
      %1132 = vmatprep.subr.bf16.mxu0 0
      %1133 = vmatpush1.bf16.msra.mxu0 0
      %1134 = vmatprep.subr.bf16.mxu0 0
      %1135 = vmatpush1.bf16.msra.mxu0 %v263
      %1136 = vmatprep.subr.bf16.mxu0 0
      %1137 = vmatpush2.bf16.msra.mxu0 0
      %1138 = vmatprep.subr.bf16.mxu0 0
      %1139 = vmatpush2.bf16.msra.mxu0 0
      %1140 = vmatprep.subr.bf16.mxu0 0
      %1141 = vmatpush2.bf16.msra.mxu0 0
      %1142 = vmatprep.subr.bf16.mxu0 0
      %1143 = vmatpush2.bf16.msra.mxu0 0
      %1144 = vmatprep.subr.bf16.mxu0 0
      %1145 = vmatpush2.bf16.msra.mxu0 0
      %1146 = vmatprep.subr.bf16.mxu0 0
      %1147 = vmatpush2.bf16.msra.mxu0 0
      %1148 = vmatprep.subr.bf16.mxu0 0
      %1149 = vmatpush2.bf16.msra.mxu0 0
      %1150 = vmatprep.subr.bf16.mxu0 0
      %1151 = vmatpush2.bf16.msra.mxu0 0
      %1152 = vmatprep.mubr.bf16.mxu0 0
      %1153 = vmatmul.mubr.bf16.gmra.mxu0 %v1075
      %v1154 = vpop.f32.mrf.mxu0
      %v1155 = vadd.f32 0.0, %v1154
      %v1156 = vpop.f32.mrf.mxu0
      %v1157 = vpop.f32.mrf.mxu0
      %v1158 = vpop.f32.mrf.mxu0
      %1159 = vdwg.mxu0
      %v1160 = vadd.f32 %v314, %v1155
      %1161 = vrot.lane.b32.xlu0 %v443, 88
      %v1162 = vpop.permute.xlu0 %1161
      %v1164 = vsel %vm317, %v1162, 0
      %1166 = vmatprep.subr.bf16.mxu0 0
      %1167 = vmatpush1.bf16.msra.mxu0 0
      %1168 = vmatprep.subr.bf16.mxu0 0
      %1169 = vmatpush1.bf16.msra.mxu0 0
      %1170 = vmatprep.subr.bf16.mxu0 0
      %1171 = vmatpush1.bf16.msra.mxu0 0
      %1172 = vmatprep.subr.bf16.mxu0 0
      %1173 = vmatpush1.bf16.msra.mxu0 0
      %1174 = vmatprep.subr.bf16.mxu0 0
      %1175 = vmatpush1.bf16.msra.mxu0 0
      %1176 = vmatprep.subr.bf16.mxu0 0
      %1177 = vmatpush1.bf16.msra.mxu0 0
      %1178 = vmatprep.subr.bf16.mxu0 0
      %1179 = vmatpush1.bf16.msra.mxu0 0
      %1180 = vmatprep.subr.bf16.mxu0 0
      %1181 = vmatpush1.bf16.msra.mxu0 %v323
      %1182 = vmatprep.subr.bf16.mxu0 0
      %1183 = vmatpush2.bf16.msra.mxu0 0
      %1184 = vmatprep.subr.bf16.mxu0 0
      %1185 = vmatpush2.bf16.msra.mxu0 0
      %1186 = vmatprep.subr.bf16.mxu0 0
      %1187 = vmatpush2.bf16.msra.mxu0 0
      %1188 = vmatprep.subr.bf16.mxu0 0
      %1189 = vmatpush2.bf16.msra.mxu0 0
      %1190 = vmatprep.subr.bf16.mxu0 0
      %1191 = vmatpush2.bf16.msra.mxu0 0
      %1192 = vmatprep.subr.bf16.mxu0 0
      %1193 = vmatpush2.bf16.msra.mxu0 0
      %1194 = vmatprep.subr.bf16.mxu0 0
      %1195 = vmatpush2.bf16.msra.mxu0 0
      %1196 = vmatprep.subr.bf16.mxu0 0
      %1197 = vmatpush2.bf16.msra.mxu0 0
      %1198 = vmatprep.mubr.bf16.mxu0 0
      %1199 = vmatmul.mubr.bf16.gmra.mxu0 %v1164
      %v1200 = vpop.f32.mrf.mxu0
      %v1201 = vadd.f32 0.0, %v1200
      %v1202 = vpop.f32.mrf.mxu0
      %v1203 = vpop.f32.mrf.mxu0
      %v1204 = vpop.f32.mrf.mxu0
      %1205 = vdwg.mxu0
      %v1206 = vadd.f32 %v1160, %v1201
      %v1207 = vxor.u32 %v1206, 2147483648
      %v1208 = vmul.f32 %v1207, 1.442695
      %v1209 = vpow.pop %v1208
      %v1210 = vadd.f32 %v1209, 1.0
      %v1211 = vrcp.pop %v1210
      %v1212 = vmul.f32 1.0, %v1211
      %v1213 = vtanh.pop %v1206
      %v1214 = vsel %vm256, %v1213, %v1212
      %v1215 = vmul.f32 %v1214, %v1057
      %1217 = vrot.lane.b32.xlu0 %v1214, 96
      %v1218 = vpop.permute.xlu0 %1217
      %v1220 = vmul.f32 %v1214, %v1218
      %1222 = vrot.lane.b32.xlu0 %v1220, 16
      %v1223 = vpop.permute.xlu0 %1222
      %v1225 = vadd.f32 %v1215, %v1223
      %v1226 = vtanh.pop %v1225
      %1228 = vrot.lane.b32.xlu0 %v1226, 32
      %v1229 = vpop.permute.xlu0 %1228
      %v1231 = vmul.f32 %v1214, %v1229
      %v1232 = vpack.c.bf16 %v1231, %v1231
      %1234 = vrot.lane.b32.xlu0 %v1232, 80
      %v1235 = vpop.permute.xlu0 %1234
      %v1238 = vunpack.c.l.b16 %v1118
      %v1239 = vunpack.c.l.b16 %v1119
      %v1240 = vpack.c.b16 %v1239, %v1238
      %v1243 = vsel %vm265, %v1235, 0
      %1245 = vmatprep.subr.bf16.mxu0 0
      %1246 = vmatpush1.bf16.msra.mxu0 0
      %1247 = vmatprep.subr.bf16.mxu0 0
      %1248 = vmatpush1.bf16.msra.mxu0 0
      %1249 = vmatprep.subr.bf16.mxu0 0
      %1250 = vmatpush1.bf16.msra.mxu0 0
      %1251 = vmatprep.subr.bf16.mxu0 0
      %1252 = vmatpush1.bf16.msra.mxu0 0
      %1253 = vmatprep.subr.bf16.mxu0 0
      %1254 = vmatpush1.bf16.msra.mxu0 0
      %1255 = vmatprep.subr.bf16.mxu0 0
      %1256 = vmatpush1.bf16.msra.mxu0 0
      %1257 = vmatprep.subr.bf16.mxu0 0
      %1258 = vmatpush1.bf16.msra.mxu0 0
      %1259 = vmatprep.subr.bf16.mxu0 0
      %1260 = vmatpush1.bf16.msra.mxu0 %v1240
      %1261 = vmatprep.subr.bf16.mxu0 0
      %1262 = vmatpush2.bf16.msra.mxu0 0
      %1263 = vmatprep.subr.bf16.mxu0 0
      %1264 = vmatpush2.bf16.msra.mxu0 0
      %1265 = vmatprep.subr.bf16.mxu0 0
      %1266 = vmatpush2.bf16.msra.mxu0 0
      %1267 = vmatprep.subr.bf16.mxu0 0
      %1268 = vmatpush2.bf16.msra.mxu0 0
      %1269 = vmatprep.subr.bf16.mxu0 0
      %1270 = vmatpush2.bf16.msra.mxu0 0
      %1271 = vmatprep.subr.bf16.mxu0 0
      %1272 = vmatpush2.bf16.msra.mxu0 0
      %1273 = vmatprep.subr.bf16.mxu0 0
      %1274 = vmatpush2.bf16.msra.mxu0 0
      %1275 = vmatprep.subr.bf16.mxu0 0
      %1276 = vmatpush2.bf16.msra.mxu0 0
      %1277 = vmatprep.mubr.bf16.mxu0 0
      %1278 = vmatmul.mubr.bf16.gmra.mxu0 %v1243
      %v1279 = vpop.f32.mrf.mxu0
      %v1280 = vadd.f32 0.0, %v1279
      %v1281 = vpop.f32.mrf.mxu0
      %v1282 = vpop.f32.mrf.mxu0
      %v1283 = vpop.f32.mrf.mxu0
      %1284 = vdwg.mxu0
      %v1285 = vadd.f32 %v1117, %v1280
      %v1286 = vld [vmem:[%s4 + $0x30] sm:$0xf]
      %v1287 = vld [vmem:[%s4 + $0x34] sm:$0xf]
      %1288 = vmatprep.subr.bf16.mxu0 0
      %1289 = vmatpush1.bf16.msra.mxu0 0
      %1290 = vmatprep.subr.bf16.mxu0 0
      %1291 = vmatpush1.bf16.msra.mxu0 0
      %1292 = vmatprep.subr.bf16.mxu0 0
      %1293 = vmatpush1.bf16.msra.mxu0 0
      %1294 = vmatprep.subr.bf16.mxu0 0
      %1295 = vmatpush1.bf16.msra.mxu0 0
      %1296 = vmatprep.subr.bf16.mxu0 0
      %1297 = vmatpush1.bf16.msra.mxu0 0
      %1298 = vmatprep.subr.bf16.mxu0 0
      %1299 = vmatpush1.bf16.msra.mxu0 0
      %1300 = vmatprep.subr.bf16.mxu0 0
      %1301 = vmatpush1.bf16.msra.mxu0 0
      %1302 = vmatprep.subr.bf16.mxu0 0
      %1303 = vmatpush1.bf16.msra.mxu0 %v263
      %1304 = vmatprep.subr.bf16.mxu0 0
      %1305 = vmatpush2.bf16.msra.mxu0 0
      %1306 = vmatprep.subr.bf16.mxu0 0
      %1307 = vmatpush2.bf16.msra.mxu0 0
      %1308 = vmatprep.subr.bf16.mxu0 0
      %1309 = vmatpush2.bf16.msra.mxu0 0
      %1310 = vmatprep.subr.bf16.mxu0 0
      %1311 = vmatpush2.bf16.msra.mxu0 0
      %1312 = vmatprep.subr.bf16.mxu0 0
      %1313 = vmatpush2.bf16.msra.mxu0 0
      %1314 = vmatprep.subr.bf16.mxu0 0
      %1315 = vmatpush2.bf16.msra.mxu0 0
      %1316 = vmatprep.subr.bf16.mxu0 0
      %1317 = vmatpush2.bf16.msra.mxu0 0
      %1318 = vmatprep.subr.bf16.mxu0 0
      %1319 = vmatpush2.bf16.msra.mxu0 0
      %1320 = vmatprep.mubr.bf16.mxu0 0
      %1321 = vmatmul.mubr.bf16.gmra.mxu0 %v1243
      %v1322 = vpop.f32.mrf.mxu0
      %v1323 = vadd.f32 0.0, %v1322
      %v1324 = vpop.f32.mrf.mxu0
      %v1325 = vpop.f32.mrf.mxu0
      %v1326 = vpop.f32.mrf.mxu0
      %1327 = vdwg.mxu0
      %v1328 = vadd.f32 %v314, %v1323
      %1329 = vrot.lane.b32.xlu0 %v443, 80
      %v1330 = vpop.permute.xlu0 %1329
      %v1332 = vsel %vm317, %v1330, 0
      %1334 = vmatprep.subr.bf16.mxu0 0
      %1335 = vmatpush1.bf16.msra.mxu0 0
      %1336 = vmatprep.subr.bf16.mxu0 0
      %1337 = vmatpush1.bf16.msra.mxu0 0
      %1338 = vmatprep.subr.bf16.mxu0 0
      %1339 = vmatpush1.bf16.msra.mxu0 0
      %1340 = vmatprep.subr.bf16.mxu0 0
      %1341 = vmatpush1.bf16.msra.mxu0 0
      %1342 = vmatprep.subr.bf16.mxu0 0
      %1343 = vmatpush1.bf16.msra.mxu0 0
      %1344 = vmatprep.subr.bf16.mxu0 0
      %1345 = vmatpush1.bf16.msra.mxu0 0
      %1346 = vmatprep.subr.bf16.mxu0 0
      %1347 = vmatpush1.bf16.msra.mxu0 0
      %1348 = vmatprep.subr.bf16.mxu0 0
      %1349 = vmatpush1.bf16.msra.mxu0 %v323
      %1350 = vmatprep.subr.bf16.mxu0 0
      %1351 = vmatpush2.bf16.msra.mxu0 0
      %1352 = vmatprep.subr.bf16.mxu0 0
      %1353 = vmatpush2.bf16.msra.mxu0 0
      %1354 = vmatprep.subr.bf16.mxu0 0
      %1355 = vmatpush2.bf16.msra.mxu0 0
      %1356 = vmatprep.subr.bf16.mxu0 0
      %1357 = vmatpush2.bf16.msra.mxu0 0
      %1358 = vmatprep.subr.bf16.mxu0 0
      %1359 = vmatpush2.bf16.msra.mxu0 0
      %1360 = vmatprep.subr.bf16.mxu0 0
      %1361 = vmatpush2.bf16.msra.mxu0 0
      %1362 = vmatprep.subr.bf16.mxu0 0
      %1363 = vmatpush2.bf16.msra.mxu0 0
      %1364 = vmatprep.subr.bf16.mxu0 0
      %1365 = vmatpush2.bf16.msra.mxu0 0
      %1366 = vmatprep.mubr.bf16.mxu0 0
      %1367 = vmatmul.mubr.bf16.gmra.mxu0 %v1332
      %v1368 = vpop.f32.mrf.mxu0
      %v1369 = vadd.f32 0.0, %v1368
      %v1370 = vpop.f32.mrf.mxu0
      %v1371 = vpop.f32.mrf.mxu0
      %v1372 = vpop.f32.mrf.mxu0
      %1373 = vdwg.mxu0
      %v1374 = vadd.f32 %v1328, %v1369
      %v1375 = vxor.u32 %v1374, 2147483648
      %v1376 = vmul.f32 %v1375, 1.442695
      %v1377 = vpow.pop %v1376
      %v1378 = vadd.f32 %v1377, 1.0
      %v1379 = vrcp.pop %v1378
      %v1380 = vmul.f32 1.0, %v1379
      %v1381 = vtanh.pop %v1374
      %v1382 = vsel %vm256, %v1381, %v1380
      %v1383 = vmul.f32 %v1382, %v1225
      %1385 = vrot.lane.b32.xlu0 %v1382, 96
      %v1386 = vpop.permute.xlu0 %1385
      %v1388 = vmul.f32 %v1382, %v1386
      %1390 = vrot.lane.b32.xlu0 %v1388, 16
      %v1391 = vpop.permute.xlu0 %1390
      %v1393 = vadd.f32 %v1383, %v1391
      %v1394 = vtanh.pop %v1393
      %1396 = vrot.lane.b32.xlu0 %v1394, 32
      %v1397 = vpop.permute.xlu0 %1396
      %v1399 = vmul.f32 %v1382, %v1397
      %v1400 = vpack.c.bf16 %v1399, %v1399
      %1402 = vrot.lane.b32.xlu0 %v1400, 80
      %v1403 = vpop.permute.xlu0 %1402
      %v1406 = vunpack.c.l.b16 %v1286
      %v1407 = vunpack.c.l.b16 %v1287
      %v1408 = vpack.c.b16 %v1407, %v1406
      %v1411 = vsel %vm265, %v1403, 0
      %1413 = vmatprep.subr.bf16.mxu0 0
      %1414 = vmatpush1.bf16.msra.mxu0 0
      %1415 = vmatprep.subr.bf16.mxu0 0
      %1416 = vmatpush1.bf16.msra.mxu0 0
      %1417 = vmatprep.subr.bf16.mxu0 0
      %1418 = vmatpush1.bf16.msra.mxu0 0
      %1419 = vmatprep.subr.bf16.mxu0 0
      %1420 = vmatpush1.bf16.msra.mxu0 0
      %1421 = vmatprep.subr.bf16.mxu0 0
      %1422 = vmatpush1.bf16.msra.mxu0 0
      %1423 = vmatprep.subr.bf16.mxu0 0
      %1424 = vmatpush1.bf16.msra.mxu0 0
      %1425 = vmatprep.subr.bf16.mxu0 0
      %1426 = vmatpush1.bf16.msra.mxu0 0
      %1427 = vmatprep.subr.bf16.mxu0 0
      %1428 = vmatpush1.bf16.msra.mxu0 %v1408
      %1429 = vmatprep.subr.bf16.mxu0 0
      %1430 = vmatpush2.bf16.msra.mxu0 0
      %1431 = vmatprep.subr.bf16.mxu0 0
      %1432 = vmatpush2.bf16.msra.mxu0 0
      %1433 = vmatprep.subr.bf16.mxu0 0
      %1434 = vmatpush2.bf16.msra.mxu0 0
      %1435 = vmatprep.subr.bf16.mxu0 0
      %1436 = vmatpush2.bf16.msra.mxu0 0
      %1437 = vmatprep.subr.bf16.mxu0 0
      %1438 = vmatpush2.bf16.msra.mxu0 0
      %1439 = vmatprep.subr.bf16.mxu0 0
      %1440 = vmatpush2.bf16.msra.mxu0 0
      %1441 = vmatprep.subr.bf16.mxu0 0
      %1442 = vmatpush2.bf16.msra.mxu0 0
      %1443 = vmatprep.subr.bf16.mxu0 0
      %1444 = vmatpush2.bf16.msra.mxu0 0
      %1445 = vmatprep.mubr.bf16.mxu0 0
      %1446 = vmatmul.mubr.bf16.gmra.mxu0 %v1411
      %v1447 = vpop.f32.mrf.mxu0
      %v1448 = vadd.f32 0.0, %v1447
      %v1449 = vpop.f32.mrf.mxu0
      %v1450 = vpop.f32.mrf.mxu0
      %v1451 = vpop.f32.mrf.mxu0
      %1452 = vdwg.mxu0
      %v1453 = vadd.f32 %v1285, %v1448
      %v1454 = vld [vmem:[%s4 + $0x38] sm:$0xf]
      %v1455 = vld [vmem:[%s4 + $0x3c] sm:$0xf]
      %1456 = vmatprep.subr.bf16.mxu0 0
      %1457 = vmatpush1.bf16.msra.mxu0 0
      %1458 = vmatprep.subr.bf16.mxu0 0
      %1459 = vmatpush1.bf16.msra.mxu0 0
      %1460 = vmatprep.subr.bf16.mxu0 0
      %1461 = vmatpush1.bf16.msra.mxu0 0
      %1462 = vmatprep.subr.bf16.mxu0 0
      %1463 = vmatpush1.bf16.msra.mxu0 0
      %1464 = vmatprep.subr.bf16.mxu0 0
      %1465 = vmatpush1.bf16.msra.mxu0 0
      %1466 = vmatprep.subr.bf16.mxu0 0
      %1467 = vmatpush1.bf16.msra.mxu0 0
      %1468 = vmatprep.subr.bf16.mxu0 0
      %1469 = vmatpush1.bf16.msra.mxu0 0
      %1470 = vmatprep.subr.bf16.mxu0 0
      %1471 = vmatpush1.bf16.msra.mxu0 %v263
      %1472 = vmatprep.subr.bf16.mxu0 0
      %1473 = vmatpush2.bf16.msra.mxu0 0
      %1474 = vmatprep.subr.bf16.mxu0 0
      %1475 = vmatpush2.bf16.msra.mxu0 0
      %1476 = vmatprep.subr.bf16.mxu0 0
      %1477 = vmatpush2.bf16.msra.mxu0 0
      %1478 = vmatprep.subr.bf16.mxu0 0
      %1479 = vmatpush2.bf16.msra.mxu0 0
      %1480 = vmatprep.subr.bf16.mxu0 0
      %1481 = vmatpush2.bf16.msra.mxu0 0
      %1482 = vmatprep.subr.bf16.mxu0 0
      %1483 = vmatpush2.bf16.msra.mxu0 0
      %1484 = vmatprep.subr.bf16.mxu0 0
      %1485 = vmatpush2.bf16.msra.mxu0 0
      %1486 = vmatprep.subr.bf16.mxu0 0
      %1487 = vmatpush2.bf16.msra.mxu0 0
      %1488 = vmatprep.mubr.bf16.mxu0 0
      %1489 = vmatmul.mubr.bf16.gmra.mxu0 %v1411
      %v1490 = vpop.f32.mrf.mxu0
      %v1491 = vadd.f32 0.0, %v1490
      %v1492 = vpop.f32.mrf.mxu0
      %v1493 = vpop.f32.mrf.mxu0
      %v1494 = vpop.f32.mrf.mxu0
      %1495 = vdwg.mxu0
      %v1496 = vadd.f32 %v314, %v1491
      %1497 = vrot.lane.b32.xlu0 %v443, 72
      %v1498 = vpop.permute.xlu0 %1497
      %v1500 = vsel %vm317, %v1498, 0
      %1502 = vmatprep.subr.bf16.mxu0 0
      %1503 = vmatpush1.bf16.msra.mxu0 0
      %1504 = vmatprep.subr.bf16.mxu0 0
      %1505 = vmatpush1.bf16.msra.mxu0 0
      %1506 = vmatprep.subr.bf16.mxu0 0
      %1507 = vmatpush1.bf16.msra.mxu0 0
      %1508 = vmatprep.subr.bf16.mxu0 0
      %1509 = vmatpush1.bf16.msra.mxu0 0
      %1510 = vmatprep.subr.bf16.mxu0 0
      %1511 = vmatpush1.bf16.msra.mxu0 0
      %1512 = vmatprep.subr.bf16.mxu0 0
      %1513 = vmatpush1.bf16.msra.mxu0 0
      %1514 = vmatprep.subr.bf16.mxu0 0
      %1515 = vmatpush1.bf16.msra.mxu0 0
      %1516 = vmatprep.subr.bf16.mxu0 0
      %1517 = vmatpush1.bf16.msra.mxu0 %v323
      %1518 = vmatprep.subr.bf16.mxu0 0
      %1519 = vmatpush2.bf16.msra.mxu0 0
      %1520 = vmatprep.subr.bf16.mxu0 0
      %1521 = vmatpush2.bf16.msra.mxu0 0
      %1522 = vmatprep.subr.bf16.mxu0 0
      %1523 = vmatpush2.bf16.msra.mxu0 0
      %1524 = vmatprep.subr.bf16.mxu0 0
      %1525 = vmatpush2.bf16.msra.mxu0 0
      %1526 = vmatprep.subr.bf16.mxu0 0
      %1527 = vmatpush2.bf16.msra.mxu0 0
      %1528 = vmatprep.subr.bf16.mxu0 0
      %1529 = vmatpush2.bf16.msra.mxu0 0
      %1530 = vmatprep.subr.bf16.mxu0 0
      %1531 = vmatpush2.bf16.msra.mxu0 0
      %1532 = vmatprep.subr.bf16.mxu0 0
      %1533 = vmatpush2.bf16.msra.mxu0 0
      %1534 = vmatprep.mubr.bf16.mxu0 0
      %1535 = vmatmul.mubr.bf16.gmra.mxu0 %v1500
      %v1536 = vpop.f32.mrf.mxu0
      %v1537 = vadd.f32 0.0, %v1536
      %v1538 = vpop.f32.mrf.mxu0
      %v1539 = vpop.f32.mrf.mxu0
      %v1540 = vpop.f32.mrf.mxu0
      %1541 = vdwg.mxu0
      %v1542 = vadd.f32 %v1496, %v1537
      %v1543 = vxor.u32 %v1542, 2147483648
      %v1544 = vmul.f32 %v1543, 1.442695
      %v1545 = vpow.pop %v1544
      %v1546 = vadd.f32 %v1545, 1.0
      %v1547 = vrcp.pop %v1546
      %v1548 = vmul.f32 1.0, %v1547
      %v1549 = vtanh.pop %v1542
      %v1550 = vsel %vm256, %v1549, %v1548
      %v1551 = vmul.f32 %v1550, %v1393
      %1553 = vrot.lane.b32.xlu0 %v1550, 96
      %v1554 = vpop.permute.xlu0 %1553
      %v1556 = vmul.f32 %v1550, %v1554
      %1558 = vrot.lane.b32.xlu0 %v1556, 16
      %v1559 = vpop.permute.xlu0 %1558
      %v1561 = vadd.f32 %v1551, %v1559
      %v1562 = vtanh.pop %v1561
      %1564 = vrot.lane.b32.xlu0 %v1562, 32
      %v1565 = vpop.permute.xlu0 %1564
      %v1567 = vmul.f32 %v1550, %v1565
      %v1568 = vpack.c.bf16 %v1567, %v1567
      %1570 = vrot.lane.b32.xlu0 %v1568, 80
      %v1571 = vpop.permute.xlu0 %1570
      %v1574 = vunpack.c.l.b16 %v1454
      %v1575 = vunpack.c.l.b16 %v1455
      %v1576 = vpack.c.b16 %v1575, %v1574
      %v1579 = vsel %vm265, %v1571, 0
      %1581 = vmatprep.subr.bf16.mxu0 0
      %1582 = vmatpush1.bf16.msra.mxu0 0
      %1583 = vmatprep.subr.bf16.mxu0 0
      %1584 = vmatpush1.bf16.msra.mxu0 0
      %1585 = vmatprep.subr.bf16.mxu0 0
      %1586 = vmatpush1.bf16.msra.mxu0 0
      %1587 = vmatprep.subr.bf16.mxu0 0
      %1588 = vmatpush1.bf16.msra.mxu0 0
      %1589 = vmatprep.subr.bf16.mxu0 0
      %1590 = vmatpush1.bf16.msra.mxu0 0
      %1591 = vmatprep.subr.bf16.mxu0 0
      %1592 = vmatpush1.bf16.msra.mxu0 0
      %1593 = vmatprep.subr.bf16.mxu0 0
      %1594 = vmatpush1.bf16.msra.mxu0 0
      %1595 = vmatprep.subr.bf16.mxu0 0
      %1596 = vmatpush1.bf16.msra.mxu0 %v1576
      %1597 = vmatprep.subr.bf16.mxu0 0
      %1598 = vmatpush2.bf16.msra.mxu0 0
      %1599 = vmatprep.subr.bf16.mxu0 0
      %1600 = vmatpush2.bf16.msra.mxu0 0
      %1601 = vmatprep.subr.bf16.mxu0 0
      %1602 = vmatpush2.bf16.msra.mxu0 0
      %1603 = vmatprep.subr.bf16.mxu0 0
      %1604 = vmatpush2.bf16.msra.mxu0 0
      %1605 = vmatprep.subr.bf16.mxu0 0
      %1606 = vmatpush2.bf16.msra.mxu0 0
      %1607 = vmatprep.subr.bf16.mxu0 0
      %1608 = vmatpush2.bf16.msra.mxu0 0
      %1609 = vmatprep.subr.bf16.mxu0 0
      %1610 = vmatpush2.bf16.msra.mxu0 0
      %1611 = vmatprep.subr.bf16.mxu0 0
      %1612 = vmatpush2.bf16.msra.mxu0 0
      %1613 = vmatprep.mubr.bf16.mxu0 0
      %1614 = vmatmul.mubr.bf16.gmra.mxu0 %v1579
      %v1615 = vpop.f32.mrf.mxu0
      %v1616 = vadd.f32 0.0, %v1615
      %v1617 = vpop.f32.mrf.mxu0
      %v1618 = vpop.f32.mrf.mxu0
      %v1619 = vpop.f32.mrf.mxu0
      %1620 = vdwg.mxu0
      %v1621 = vadd.f32 %v1453, %v1616
      %v1622 = vld [vmem:[%s5] sm:$0x1]
      %v1624 = vlaneseq
      %v1625 = vshrl.u32 %v1624, 7
      %v1626 = vsub.s32 0, %v1625
      %v1627 = vrot.slane %v1622, %v1626
      %v1629 = vadd.f32 %v1621, %v1627
      %1630 = vst [vmem:[%s246] sm:$0xff] %v1629
      %p1631 = scmp.lt.s32.totalorder %s17, 1
      %s1632 = scalar_select %p1631, %s17, 1
      %s1633 = smul.addr %s1632, 8
      %s1634 = scalar_lea.vmem %s6, %s1633
      // Predicated region
      $region45: #{hier_rnn_forward.2} parent=43 // pred_check
        %p1635 = pneg %p166
      $region46: #{hier_rnn_forward.2} parent=43 // pred_check_branch
        %1637 = sbr.rel (%p1635) target = $region48
      $region47: #{hier_rnn_forward.2} parent=43 // pred_region
        _
      $region48: #{hier_rnn_forward.2} parent=43 // pred_fallthru
        _
    $region44: #{hier_rnn_forward.2} parent=5 // pred_fallthru
      _
    %p1638 = scmp.le.s32.totalorder 2, %s12
    // Predicated region
    $region49: #{hier_rnn_forward.2} parent=5 // pred_check
      %p1639 = pneg %p1638
    $region50: #{hier_rnn_forward.2} parent=5 // pred_check_branch
      %1641 = sbr.rel (%p1639) target = $region52
    $region51: #{hier_rnn_forward.2} parent=5 // pred_region
      %s1642 = ssub.s32 %s12, 2
      // Predicated region
      $region53: #{hier_rnn_forward.2} parent=51 // pred_check
        %p1643 = pneg %p172
      $region54: #{hier_rnn_forward.2} parent=51 // pred_check_branch
        %1645 = sbr.rel (%p1643) target = $region56
      $region55: #{hier_rnn_forward.2} parent=51 // pred_region
        %p1646 = scmp.lt.s32.totalorder %s18, 1
        %s1647 = scalar_select %p1646, %s18, 1
        %s1648 = smul.addr %s1647, 8
        %s1649 = scalar_lea.vmem %s6, %s1648
      $region56: #{hier_rnn_forward.2} parent=51 // pred_fallthru
        _
    $region52: #{hier_rnn_forward.2} parent=5 // pred_fallthru
      _
  $region6: #{hier_rnn_forward.2} parent=0 // loop_footer
    %s16 = sadd.s32 1, %s12
  $region7: #{hier_rnn_forward.2} parent=0 // loop_footer_branch
    %11 = sbr.rel target = $region3
  $region8: #{hier_rnn_forward.2} parent=0 // loop_exit
    _

</llo_original>
